<compile_context>
chip_gen: v7x
topology: tpu7x:2x2x1
jax: 0.10.0
libtpu: 0.0.40
codegen_flags: <defaults>
</compile_context>

<pallas_src>
import jax
import jax.numpy as jnp
from jax import lax
from jax.experimental import pallas as pl
from jax.experimental.pallas import tpu as pltpu

INPUT_SIZE = 1
HIDDEN = 64
NUM_CLASSES = 2
OUT_PAD = 128          # lane-dense padded FC output width
NEG_GATE = -1e4        # drives sigmoid -> 0 exactly (inert phantom layer-1 cell, wave 0)

# TODO(synk): optional bf16 cast of dot operands + pltpu.matmul_push_rhs-resident
# weights would further cut per-wave MXU latency on v6e/v7x; kept f32 for numerics.


def lstm_kernel(x_ref, wi0_ref, wcomb_ref, bfirst_ref, bmain_ref, wfc_ref, bfc_ref,
                out_ref):
    B, T = x_ref.shape
    H = HIDDEN
    H2, H4, H6, H8 = 2 * H, 4 * H, 6 * H, 8 * H

    # Loop-invariant values / broadcasts, hoisted once.
    x_all = x_ref[...]                                        # (B, T)
    wcomb = wcomb_ref[...]                                    # (2H, 8H) fused recurrent RHS
    wi0_b = jnp.broadcast_to(wi0_ref[...], (B, H8))           # layer-0 x weights, 8H layout
    bmain_b = jnp.broadcast_to(bmain_ref[...], (B, H8))       # b0 | b1 in 8H layout
    bfirst_b = jnp.broadcast_to(bfirst_ref[...], (B, H8))     # b0 | inert layer-1 gates

    def sigmoid(v):
        # One EUP tanh + a VPU FMA; avoids exp + f32 divide on the 17-stage EUP chain.
        return 0.5 * jnp.tanh(0.5 * v) + 0.5

    def wave(gates, c):
        """Fused dual-layer LSTM cell update on interleaved gates.

        gates: (B, 8H) = [i0,i1,f0,f1,o0,o1,g0,g1]; c: (B, 2H) = [c0|c1].
        Returns packed h_new = [h0'|h1'], c_new = [c0'|c1'] -- full-vreg ops only.
        """
        sig = sigmoid(gates[:, :H6])                          # 3 full (8,128) vregs
        g = jnp.tanh(gates[:, H6:])                           # 1 full vreg
        i = sig[:, :H2]
        f = sig[:, H2:H4]
        o = sig[:, H4:H6]
        c_new = f * c + i * g
        h_new = o * jnp.tanh(c_new)
        return h_new, c_new

    # ---- wave 0 (peeled): layer-0 step 0 only.  Recurrent state is zero so no dot;
    #      bfirst drives the phantom layer-1 input gate to exactly 0 => h1,c1 stay 0.
    c = jnp.zeros((B, H2), jnp.float32)
    h, c = wave(x_all[:, 0:1] * wi0_b + bfirst_b, c)

    # ---- waves 1..T-1: layer-0 step w and layer-1 step w-1 in ONE fused dot.
    #      LHS h = [h0(w-1) | h1(w-2)] is exactly what the previous wave produced.
    for w in range(1, T):
        pre = x_all[:, w:w + 1] * wi0_b + bmain_b             # off the recurrence chain
        gates = jnp.dot(h, wcomb, preferred_element_type=jnp.float32) + pre
        h, c = wave(gates, c)

    # ---- wave T (peeled): layer-1 step T-1.  The phantom layer-0 half (x := 0) is
    #      computed but discarded: its h0 lanes hit zero rows of wfc below.
    gates = jnp.dot(h, wcomb, preferred_element_type=jnp.float32) + bmain_b
    h, c = wave(gates, c)

    # ---- final FC on h1(T-1) (lanes H:2H of packed h); output lane-padded to 128.
    out_ref[...] = (jnp.dot(h, wfc_ref[...], preferred_element_type=jnp.float32)
                    + bfc_ref[...])


def lstm_classifier(x, packed):
    """x: (B, T, INPUT_SIZE), batch_first like nn.LSTM(batch_first=True)."""
    B, T, _ = x.shape
    H = HIDDEN
    x2d = x.reshape(B, T)                                     # lane-dense sequence layout

    const = lambda i: (0, 0)
    out = pl.pallas_call(
        lstm_kernel,
        out_shape=jax.ShapeDtypeStruct((B, OUT_PAD), jnp.float32),
        grid=(1,),
        in_specs=[
            pl.BlockSpec((B, T), const),                      # x, whole sequence
            pl.BlockSpec((1, 8 * H), const),                  # W_ih_l0^T, interleaved cols
            pl.BlockSpec((2 * H, 8 * H), const),              # fused recurrent RHS
            pl.BlockSpec((1, 8 * H), const),                  # first-wave bias
            pl.BlockSpec((1, 8 * H), const),                  # steady-state bias
            pl.BlockSpec((2 * H, OUT_PAD), const),            # [0 ; W_fc^T] lane-padded
            pl.BlockSpec((1, OUT_PAD), const),                # b_fc lane-padded
        ],
        out_specs=pl.BlockSpec((B, OUT_PAD), const),
        compiler_params=pltpu.CompilerParams(
            dimension_semantics=("arbitrary",)),
    )(x2d, packed["wi0"], packed["wcomb"], packed["bfirst"], packed["bmain"],
      packed["wfc"], packed["bfc"])
    return out[:, :NUM_CLASSES]


def init_params(key):
    """PyTorch-canonical shapes & init: U[-1/sqrt(H), 1/sqrt(H)], gate order [i, f, g, o]."""
    H = HIDDEN
    bound = 1.0 / (H ** 0.5)
    ks = jax.random.split(key, 10)
    u = lambda k, s: jax.random.uniform(k, s, jnp.float32, -bound, bound)
    return {
        "w_ih_l0": u(ks[0], (4 * H, INPUT_SIZE)),
        "w_hh_l0": u(ks[1], (4 * H, H)),
        "b_ih_l0": u(ks[2], (4 * H,)),
        "b_hh_l0": u(ks[3], (4 * H,)),
        "w_ih_l1": u(ks[4], (4 * H, H)),
        "w_hh_l1": u(ks[5], (4 * H, H)),
        "b_ih_l1": u(ks[6], (4 * H,)),
        "b_hh_l1": u(ks[7], (4 * H,)),
        "w_fc": u(ks[8], (NUM_CLASSES, H)),
        "b_fc": u(ks[9], (NUM_CLASSES,)),
    }


def _interleave(l0_4h, l1_4h):
    """Map two PyTorch [i,f,g,o]-ordered 4H slabs into the interleaved 8H gate layout
    [i0,i1,f0,f1,o0,o1,g0,g1] used by the kernel."""
    i0, f0, g0, o0 = jnp.split(l0_4h, 4, axis=-1)
    i1, f1, g1, o1 = jnp.split(l1_4h, 4, axis=-1)
    return jnp.concatenate([i0, i1, f0, f1, o0, o1, g0, g1], axis=-1)


def pack_params(p):
    """Repack canonical PyTorch-layout params into the fused / interleaved kernel layout."""
    H = HIDDEN
    z1 = jnp.zeros((1, 4 * H), jnp.float32)
    zH = jnp.zeros((H, 4 * H), jnp.float32)

    # Layer-0 input weight (input_size == 1); layer-1 columns are zero.
    wi0 = _interleave(p["w_ih_l0"].T, z1)                                   # (1, 8H)

    # Fused recurrent RHS:
    #   rows 0:H  (h0 lanes): layer-0 recurrent W_hh_l0^T | layer-1 input   W_ih_l1^T
    #   rows H:2H (h1 lanes): zeros                       | layer-1 recurrent W_hh_l1^T
    top = _interleave(p["w_hh_l0"].T, p["w_ih_l1"].T)
    bot = _interleave(zH, p["w_hh_l1"].T)
    wcomb = jnp.concatenate([top, bot], axis=0)                             # (2H, 8H)

    b0 = (p["b_ih_l0"] + p["b_hh_l0"])[None, :]
    b1 = (p["b_ih_l1"] + p["b_hh_l1"])[None, :]
    bmain = _interleave(b0, b1)                                             # (1, 8H)
    # First-wave bias: layer-1 input gate driven to sigmoid(x)=0 so the phantom
    # layer-1 cell at t=-1 leaves h1 = c1 = 0 exactly.
    l1_inert = jnp.concatenate(
        [jnp.full((1, H), NEG_GATE, jnp.float32),
         jnp.zeros((1, 3 * H), jnp.float32)], axis=-1)
    bfirst = _interleave(b0, l1_inert)                                      # (1, 8H)

    wfc = jnp.zeros((2 * H, OUT_PAD), jnp.float32).at[H:, :NUM_CLASSES].set(p["w_fc"].T)
    bfc = jnp.zeros((1, OUT_PAD), jnp.float32).at[0, :NUM_CLASSES].set(p["b_fc"])
    return dict(wi0=wi0, wcomb=wcomb, bfirst=bfirst, bmain=bmain, wfc=wfc, bfc=bfc)


def lstm_classifier_ref(x, p):
    """Pure-JAX reference with PyTorch nn.LSTM semantics / canonical weight layout."""
    B = x.shape[0]
    H = HIDDEN

    def cell(h, c, x_in, w_ih, w_hh, b_ih, b_hh):
        gates = x_in @ w_ih.T + h @ w_hh.T + b_ih + b_hh
        i = jax.nn.sigmoid(gates[:, 0 * H:1 * H])
        f = jax.nn.sigmoid(gates[:, 1 * H:2 * H])
        g = jnp.tanh(gates[:, 2 * H:3 * H])
        o = jax.nn.sigmoid(gates[:, 3 * H:4 * H])
        c = f * c + i * g
        return o * jnp.tanh(c), c

    def step(carry, xt):
        h0, c0, h1, c1 = carry
        h0, c0 = cell(h0, c0, xt, p["w_ih_l0"], p["w_hh_l0"], p["b_ih_l0"], p["b_hh_l0"])
        h1, c1 = cell(h1, c1, h0, p["w_ih_l1"], p["w_hh_l1"], p["b_ih_l1"], p["b_hh_l1"])
        return (h0, c0, h1, c1), None

    z = jnp.zeros((B, H), jnp.float32)
    (h0, c0, h1, c1), _ = lax.scan(step, (z, z, z, z), jnp.transpose(x, (1, 0, 2)))
    return h1 @ p["w_fc"].T + p["b_fc"]


if __name__ == "__main__":
    key = jax.random.PRNGKey(0)
    pkey, xkey = jax.random.split(key)
    params = init_params(pkey)
    packed = pack_params(params)

    B, T = 8, 16
    x = jax.random.normal(xkey, (B, T, INPUT_SIZE), jnp.float32)

    out = lstm_classifier(x, packed)
    jax.block_until_ready(out)
    assert out.shape == (B, NUM_CLASSES)

    ref = lstm_classifier_ref(x, params)
    assert jnp.allclose(out, ref, rtol=1e-3, atol=1e-3), (out, ref)

    print("KERNEL_OK")
</pallas_src>

<mosaic_0001>
module attributes {stable_mosaic.version = 11 : i64} {
  func.func @lstm_kernel(%arg0: i32, %arg1: memref<8x16xf32, #tpu.memory_space<vmem>>, %arg2: memref<1x512xf32, #tpu.memory_space<vmem>>, %arg3: memref<128x512xf32, #tpu.memory_space<vmem>>, %arg4: memref<1x512xf32, #tpu.memory_space<vmem>>, %arg5: memref<1x512xf32, #tpu.memory_space<vmem>>, %arg6: memref<128x128xf32, #tpu.memory_space<vmem>>, %arg7: memref<1x128xf32, #tpu.memory_space<vmem>>, %arg8: memref<8x128xf32, #tpu.memory_space<vmem>>) attributes {dimension_semantics = [#tpu.dimension_semantics<arbitrary>], iteration_bounds = array<i64: 1>, scalar_prefetch = 0 : i64, scratch_operands = 0 : i64, tpu.core_type = #tpu.core_type<tc>, window_params = [{pipeline_mode = #tpu.pipeline_mode<synchronous>, transform_indices = @transform_0, window_bounds = array<i64: 8, 16>}, {pipeline_mode = #tpu.pipeline_mode<synchronous>, transform_indices = @transform_1, window_bounds = array<i64: 1, 512>}, {pipeline_mode = #tpu.pipeline_mode<synchronous>, transform_indices = @transform_2, window_bounds = array<i64: 128, 512>}, {pipeline_mode = #tpu.pipeline_mode<synchronous>, transform_indices = @transform_3, window_bounds = array<i64: 1, 512>}, {pipeline_mode = #tpu.pipeline_mode<synchronous>, transform_indices = @transform_4, window_bounds = array<i64: 1, 512>}, {pipeline_mode = #tpu.pipeline_mode<synchronous>, transform_indices = @transform_5, window_bounds = array<i64: 128, 128>}, {pipeline_mode = #tpu.pipeline_mode<synchronous>, transform_indices = @transform_6, window_bounds = array<i64: 1, 128>}, {pipeline_mode = #tpu.pipeline_mode<synchronous>, transform_indices = @transform_7, window_bounds = array<i64: 8, 128>}]} {
    %c0 = arith.constant 0 : index
    %c0_0 = arith.constant 0 : index
    %0 = vector.load %arg1[%c0, %c0_0] : memref<8x16xf32, #tpu.memory_space<vmem>>, vector<8x16xf32>
    %c0_1 = arith.constant 0 : index
    %c0_2 = arith.constant 0 : index
    %1 = vector.load %arg3[%c0_1, %c0_2] : memref<128x512xf32, #tpu.memory_space<vmem>>, vector<128x512xf32>
    %c0_3 = arith.constant 0 : index
    %c0_4 = arith.constant 0 : index
    %2 = vector.load %arg2[%c0_3, %c0_4] : memref<1x512xf32, #tpu.memory_space<vmem>>, vector<1x512xf32>
    %3 = vector.shape_cast %2 : vector<1x512xf32> to vector<1x512xf32>
    %4 = vector.broadcast %3 : vector<1x512xf32> to vector<8x512xf32>
    %c0_5 = arith.constant 0 : index
    %c0_6 = arith.constant 0 : index
    %5 = vector.load %arg5[%c0_5, %c0_6] : memref<1x512xf32, #tpu.memory_space<vmem>>, vector<1x512xf32>
    %6 = vector.shape_cast %5 : vector<1x512xf32> to vector<1x512xf32>
    %7 = vector.broadcast %6 : vector<1x512xf32> to vector<8x512xf32>
    %c0_7 = arith.constant 0 : index
    %c0_8 = arith.constant 0 : index
    %8 = vector.load %arg4[%c0_7, %c0_8] : memref<1x512xf32, #tpu.memory_space<vmem>>, vector<1x512xf32>
    %9 = vector.shape_cast %8 : vector<1x512xf32> to vector<1x512xf32>
    %10 = vector.broadcast %9 : vector<1x512xf32> to vector<8x512xf32>
    %cst = arith.constant 0.000000e+00 : f32
    %11 = vector.broadcast %cst : f32 to vector<8x128xf32>
    %12 = vector.extract_strided_slice %0 {offsets = [0, 0], sizes = [8, 1], strides = [1, 1]} : vector<8x16xf32> to vector<8x1xf32>
    %13 = vector.broadcast %12 : vector<8x1xf32> to vector<8x512xf32>
    %14 = arith.mulf %13, %4 : vector<8x512xf32>
    %15 = arith.addf %14, %10 : vector<8x512xf32>
    %16 = vector.extract_strided_slice %15 {offsets = [0, 0], sizes = [8, 384], strides = [1, 1]} : vector<8x512xf32> to vector<8x384xf32>
    %cst_9 = arith.constant 5.000000e-01 : f32
    %17 = vector.broadcast %cst_9 : f32 to vector<8x384xf32>
    %18 = arith.mulf %17, %16 : vector<8x384xf32>
    %19 = math.tanh %18 : vector<8x384xf32>
    %cst_10 = arith.constant 5.000000e-01 : f32
    %20 = vector.broadcast %cst_10 : f32 to vector<8x384xf32>
    %21 = arith.mulf %20, %19 : vector<8x384xf32>
    %cst_11 = arith.constant 5.000000e-01 : f32
    %22 = vector.broadcast %cst_11 : f32 to vector<8x384xf32>
    %23 = arith.addf %21, %22 : vector<8x384xf32>
    %24 = vector.extract_strided_slice %15 {offsets = [0, 384], sizes = [8, 128], strides = [1, 1]} : vector<8x512xf32> to vector<8x128xf32>
    %25 = math.tanh %24 : vector<8x128xf32>
    %26 = vector.extract_strided_slice %23 {offsets = [0, 0], sizes = [8, 128], strides = [1, 1]} : vector<8x384xf32> to vector<8x128xf32>
    %27 = vector.extract_strided_slice %23 {offsets = [0, 128], sizes = [8, 128], strides = [1, 1]} : vector<8x384xf32> to vector<8x128xf32>
    %28 = vector.extract_strided_slice %23 {offsets = [0, 256], sizes = [8, 128], strides = [1, 1]} : vector<8x384xf32> to vector<8x128xf32>
    %29 = arith.mulf %27, %11 : vector<8x128xf32>
    %30 = arith.mulf %26, %25 : vector<8x128xf32>
    %31 = arith.addf %29, %30 : vector<8x128xf32>
    %32 = math.tanh %31 : vector<8x128xf32>
    %33 = arith.mulf %28, %32 : vector<8x128xf32>
    %34 = vector.extract_strided_slice %0 {offsets = [0, 1], sizes = [8, 1], strides = [1, 1]} : vector<8x16xf32> to vector<8x1xf32>
    %35 = vector.broadcast %34 : vector<8x1xf32> to vector<8x512xf32>
    %36 = arith.mulf %35, %4 : vector<8x512xf32>
    %37 = arith.addf %36, %7 : vector<8x512xf32>
    %cst_12 = arith.constant dense<0.000000e+00> : vector<8x512xf32>
    %38 = tpu.matmul %33, %1, %cst_12 {dimension_numbers = #tpu.dot_dimension_numbers<[1], [0], [0], [1], [0, 0, 1, 1], [], []>} : vector<8x128xf32>, vector<128x512xf32>, vector<8x512xf32> -> vector<8x512xf32>
    %39 = arith.addf %38, %37 : vector<8x512xf32>
    %40 = vector.extract_strided_slice %39 {offsets = [0, 0], sizes = [8, 384], strides = [1, 1]} : vector<8x512xf32> to vector<8x384xf32>
    %cst_13 = arith.constant 5.000000e-01 : f32
    %41 = vector.broadcast %cst_13 : f32 to vector<8x384xf32>
    %42 = arith.mulf %41, %40 : vector<8x384xf32>
    %43 = math.tanh %42 : vector<8x384xf32>
    %cst_14 = arith.constant 5.000000e-01 : f32
    %44 = vector.broadcast %cst_14 : f32 to vector<8x384xf32>
    %45 = arith.mulf %44, %43 : vector<8x384xf32>
    %cst_15 = arith.constant 5.000000e-01 : f32
    %46 = vector.broadcast %cst_15 : f32 to vector<8x384xf32>
    %47 = arith.addf %45, %46 : vector<8x384xf32>
    %48 = vector.extract_strided_slice %39 {offsets = [0, 384], sizes = [8, 128], strides = [1, 1]} : vector<8x512xf32> to vector<8x128xf32>
    %49 = math.tanh %48 : vector<8x128xf32>
    %50 = vector.extract_strided_slice %47 {offsets = [0, 0], sizes = [8, 128], strides = [1, 1]} : vector<8x384xf32> to vector<8x128xf32>
    %51 = vector.extract_strided_slice %47 {offsets = [0, 128], sizes = [8, 128], strides = [1, 1]} : vector<8x384xf32> to vector<8x128xf32>
    %52 = vector.extract_strided_slice %47 {offsets = [0, 256], sizes = [8, 128], strides = [1, 1]} : vector<8x384xf32> to vector<8x128xf32>
    %53 = arith.mulf %51, %31 : vector<8x128xf32>
    %54 = arith.mulf %50, %49 : vector<8x128xf32>
    %55 = arith.addf %53, %54 : vector<8x128xf32>
    %56 = math.tanh %55 : vector<8x128xf32>
    %57 = arith.mulf %52, %56 : vector<8x128xf32>
    %58 = vector.extract_strided_slice %0 {offsets = [0, 2], sizes = [8, 1], strides = [1, 1]} : vector<8x16xf32> to vector<8x1xf32>
    %59 = vector.broadcast %58 : vector<8x1xf32> to vector<8x512xf32>
    %60 = arith.mulf %59, %4 : vector<8x512xf32>
    %61 = arith.addf %60, %7 : vector<8x512xf32>
    %cst_16 = arith.constant dense<0.000000e+00> : vector<8x512xf32>
    %62 = tpu.matmul %57, %1, %cst_16 {dimension_numbers = #tpu.dot_dimension_numbers<[1], [0], [0], [1], [0, 0, 1, 1], [], []>} : vector<8x128xf32>, vector<128x512xf32>, vector<8x512xf32> -> vector<8x512xf32>
    %63 = arith.addf %62, %61 : vector<8x512xf32>
    %64 = vector.extract_strided_slice %63 {offsets = [0, 0], sizes = [8, 384], strides = [1, 1]} : vector<8x512xf32> to vector<8x384xf32>
    %cst_17 = arith.constant 5.000000e-01 : f32
    %65 = vector.broadcast %cst_17 : f32 to vector<8x384xf32>
    %66 = arith.mulf %65, %64 : vector<8x384xf32>
    %67 = math.tanh %66 : vector<8x384xf32>
    %cst_18 = arith.constant 5.000000e-01 : f32
    %68 = vector.broadcast %cst_18 : f32 to vector<8x384xf32>
    %69 = arith.mulf %68, %67 : vector<8x384xf32>
    %cst_19 = arith.constant 5.000000e-01 : f32
    %70 = vector.broadcast %cst_19 : f32 to vector<8x384xf32>
    %71 = arith.addf %69, %70 : vector<8x384xf32>
    %72 = vector.extract_strided_slice %63 {offsets = [0, 384], sizes = [8, 128], strides = [1, 1]} : vector<8x512xf32> to vector<8x128xf32>
    %73 = math.tanh %72 : vector<8x128xf32>
    %74 = vector.extract_strided_slice %71 {offsets = [0, 0], sizes = [8, 128], strides = [1, 1]} : vector<8x384xf32> to vector<8x128xf32>
    %75 = vector.extract_strided_slice %71 {offsets = [0, 128], sizes = [8, 128], strides = [1, 1]} : vector<8x384xf32> to vector<8x128xf32>
    %76 = vector.extract_strided_slice %71 {offsets = [0, 256], sizes = [8, 128], strides = [1, 1]} : vector<8x384xf32> to vector<8x128xf32>
    %77 = arith.mulf %75, %55 : vector<8x128xf32>
    %78 = arith.mulf %74, %73 : vector<8x128xf32>
    %79 = arith.addf %77, %78 : vector<8x128xf32>
    %80 = math.tanh %79 : vector<8x128xf32>
    %81 = arith.mulf %76, %80 : vector<8x128xf32>
    %82 = vector.extract_strided_slice %0 {offsets = [0, 3], sizes = [8, 1], strides = [1, 1]} : vector<8x16xf32> to vector<8x1xf32>
    %83 = vector.broadcast %82 : vector<8x1xf32> to vector<8x512xf32>
    %84 = arith.mulf %83, %4 : vector<8x512xf32>
    %85 = arith.addf %84, %7 : vector<8x512xf32>
    %cst_20 = arith.constant dense<0.000000e+00> : vector<8x512xf32>
    %86 = tpu.matmul %81, %1, %cst_20 {dimension_numbers = #tpu.dot_dimension_numbers<[1], [0], [0], [1], [0, 0, 1, 1], [], []>} : vector<8x128xf32>, vector<128x512xf32>, vector<8x512xf32> -> vector<8x512xf32>
    %87 = arith.addf %86, %85 : vector<8x512xf32>
    %88 = vector.extract_strided_slice %87 {offsets = [0, 0], sizes = [8, 384], strides = [1, 1]} : vector<8x512xf32> to vector<8x384xf32>
    %cst_21 = arith.constant 5.000000e-01 : f32
    %89 = vector.broadcast %cst_21 : f32 to vector<8x384xf32>
    %90 = arith.mulf %89, %88 : vector<8x384xf32>
    %91 = math.tanh %90 : vector<8x384xf32>
    %cst_22 = arith.constant 5.000000e-01 : f32
    %92 = vector.broadcast %cst_22 : f32 to vector<8x384xf32>
    %93 = arith.mulf %92, %91 : vector<8x384xf32>
    %cst_23 = arith.constant 5.000000e-01 : f32
    %94 = vector.broadcast %cst_23 : f32 to vector<8x384xf32>
    %95 = arith.addf %93, %94 : vector<8x384xf32>
    %96 = vector.extract_strided_slice %87 {offsets = [0, 384], sizes = [8, 128], strides = [1, 1]} : vector<8x512xf32> to vector<8x128xf32>
    %97 = math.tanh %96 : vector<8x128xf32>
    %98 = vector.extract_strided_slice %95 {offsets = [0, 0], sizes = [8, 128], strides = [1, 1]} : vector<8x384xf32> to vector<8x128xf32>
    %99 = vector.extract_strided_slice %95 {offsets = [0, 128], sizes = [8, 128], strides = [1, 1]} : vector<8x384xf32> to vector<8x128xf32>
    %100 = vector.extract_strided_slice %95 {offsets = [0, 256], sizes = [8, 128], strides = [1, 1]} : vector<8x384xf32> to vector<8x128xf32>
    %101 = arith.mulf %99, %79 : vector<8x128xf32>
    %102 = arith.mulf %98, %97 : vector<8x128xf32>
    %103 = arith.addf %101, %102 : vector<8x128xf32>
    %104 = math.tanh %103 : vector<8x128xf32>
    %105 = arith.mulf %100, %104 : vector<8x128xf32>
    %106 = vector.extract_strided_slice %0 {offsets = [0, 4], sizes = [8, 1], strides = [1, 1]} : vector<8x16xf32> to vector<8x1xf32>
    %107 = vector.broadcast %106 : vector<8x1xf32> to vector<8x512xf32>
    %108 = arith.mulf %107, %4 : vector<8x512xf32>
    %109 = arith.addf %108, %7 : vector<8x512xf32>
    %cst_24 = arith.constant dense<0.000000e+00> : vector<8x512xf32>
    %110 = tpu.matmul %105, %1, %cst_24 {dimension_numbers = #tpu.dot_dimension_numbers<[1], [0], [0], [1], [0, 0, 1, 1], [], []>} : vector<8x128xf32>, vector<128x512xf32>, vector<8x512xf32> -> vector<8x512xf32>
    %111 = arith.addf %110, %109 : vector<8x512xf32>
    %112 = vector.extract_strided_slice %111 {offsets = [0, 0], sizes = [8, 384], strides = [1, 1]} : vector<8x512xf32> to vector<8x384xf32>
    %cst_25 = arith.constant 5.000000e-01 : f32
    %113 = vector.broadcast %cst_25 : f32 to vector<8x384xf32>
    %114 = arith.mulf %113, %112 : vector<8x384xf32>
    %115 = math.tanh %114 : vector<8x384xf32>
    %cst_26 = arith.constant 5.000000e-01 : f32
    %116 = vector.broadcast %cst_26 : f32 to vector<8x384xf32>
    %117 = arith.mulf %116, %115 : vector<8x384xf32>
    %cst_27 = arith.constant 5.000000e-01 : f32
    %118 = vector.broadcast %cst_27 : f32 to vector<8x384xf32>
    %119 = arith.addf %117, %118 : vector<8x384xf32>
    %120 = vector.extract_strided_slice %111 {offsets = [0, 384], sizes = [8, 128], strides = [1, 1]} : vector<8x512xf32> to vector<8x128xf32>
    %121 = math.tanh %120 : vector<8x128xf32>
    %122 = vector.extract_strided_slice %119 {offsets = [0, 0], sizes = [8, 128], strides = [1, 1]} : vector<8x384xf32> to vector<8x128xf32>
    %123 = vector.extract_strided_slice %119 {offsets = [0, 128], sizes = [8, 128], strides = [1, 1]} : vector<8x384xf32> to vector<8x128xf32>
    %124 = vector.extract_strided_slice %119 {offsets = [0, 256], sizes = [8, 128], strides = [1, 1]} : vector<8x384xf32> to vector<8x128xf32>
    %125 = arith.mulf %123, %103 : vector<8x128xf32>
    %126 = arith.mulf %122, %121 : vector<8x128xf32>
    %127 = arith.addf %125, %126 : vector<8x128xf32>
    %128 = math.tanh %127 : vector<8x128xf32>
    %129 = arith.mulf %124, %128 : vector<8x128xf32>
    %130 = vector.extract_strided_slice %0 {offsets = [0, 5], sizes = [8, 1], strides = [1, 1]} : vector<8x16xf32> to vector<8x1xf32>
    %131 = vector.broadcast %130 : vector<8x1xf32> to vector<8x512xf32>
    %132 = arith.mulf %131, %4 : vector<8x512xf32>
    %133 = arith.addf %132, %7 : vector<8x512xf32>
    %cst_28 = arith.constant dense<0.000000e+00> : vector<8x512xf32>
    %134 = tpu.matmul %129, %1, %cst_28 {dimension_numbers = #tpu.dot_dimension_numbers<[1], [0], [0], [1], [0, 0, 1, 1], [], []>} : vector<8x128xf32>, vector<128x512xf32>, vector<8x512xf32> -> vector<8x512xf32>
    %135 = arith.addf %134, %133 : vector<8x512xf32>
    %136 = vector.extract_strided_slice %135 {offsets = [0, 0], sizes = [8, 384], strides = [1, 1]} : vector<8x512xf32> to vector<8x384xf32>
    %cst_29 = arith.constant 5.000000e-01 : f32
    %137 = vector.broadcast %cst_29 : f32 to vector<8x384xf32>
    %138 = arith.mulf %137, %136 : vector<8x384xf32>
    %139 = math.tanh %138 : vector<8x384xf32>
    %cst_30 = arith.constant 5.000000e-01 : f32
    %140 = vector.broadcast %cst_30 : f32 to vector<8x384xf32>
    %141 = arith.mulf %140, %139 : vector<8x384xf32>
    %cst_31 = arith.constant 5.000000e-01 : f32
    %142 = vector.broadcast %cst_31 : f32 to vector<8x384xf32>
    %143 = arith.addf %141, %142 : vector<8x384xf32>
    %144 = vector.extract_strided_slice %135 {offsets = [0, 384], sizes = [8, 128], strides = [1, 1]} : vector<8x512xf32> to vector<8x128xf32>
    %145 = math.tanh %144 : vector<8x128xf32>
    %146 = vector.extract_strided_slice %143 {offsets = [0, 0], sizes = [8, 128], strides = [1, 1]} : vector<8x384xf32> to vector<8x128xf32>
    %147 = vector.extract_strided_slice %143 {offsets = [0, 128], sizes = [8, 128], strides = [1, 1]} : vector<8x384xf32> to vector<8x128xf32>
    %148 = vector.extract_strided_slice %143 {offsets = [0, 256], sizes = [8, 128], strides = [1, 1]} : vector<8x384xf32> to vector<8x128xf32>
    %149 = arith.mulf %147, %127 : vector<8x128xf32>
    %150 = arith.mulf %146, %145 : vector<8x128xf32>
    %151 = arith.addf %149, %150 : vector<8x128xf32>
    %152 = math.tanh %151 : vector<8x128xf32>
    %153 = arith.mulf %148, %152 : vector<8x128xf32>
    %154 = vector.extract_strided_slice %0 {offsets = [0, 6], sizes = [8, 1], strides = [1, 1]} : vector<8x16xf32> to vector<8x1xf32>
    %155 = vector.broadcast %154 : vector<8x1xf32> to vector<8x512xf32>
    %156 = arith.mulf %155, %4 : vector<8x512xf32>
    %157 = arith.addf %156, %7 : vector<8x512xf32>
    %cst_32 = arith.constant dense<0.000000e+00> : vector<8x512xf32>
    %158 = tpu.matmul %153, %1, %cst_32 {dimension_numbers = #tpu.dot_dimension_numbers<[1], [0], [0], [1], [0, 0, 1, 1], [], []>} : vector<8x128xf32>, vector<128x512xf32>, vector<8x512xf32> -> vector<8x512xf32>
    %159 = arith.addf %158, %157 : vector<8x512xf32>
    %160 = vector.extract_strided_slice %159 {offsets = [0, 0], sizes = [8, 384], strides = [1, 1]} : vector<8x512xf32> to vector<8x384xf32>
    %cst_33 = arith.constant 5.000000e-01 : f32
    %161 = vector.broadcast %cst_33 : f32 to vector<8x384xf32>
    %162 = arith.mulf %161, %160 : vector<8x384xf32>
    %163 = math.tanh %162 : vector<8x384xf32>
    %cst_34 = arith.constant 5.000000e-01 : f32
    %164 = vector.broadcast %cst_34 : f32 to vector<8x384xf32>
    %165 = arith.mulf %164, %163 : vector<8x384xf32>
    %cst_35 = arith.constant 5.000000e-01 : f32
    %166 = vector.broadcast %cst_35 : f32 to vector<8x384xf32>
    %167 = arith.addf %165, %166 : vector<8x384xf32>
    %168 = vector.extract_strided_slice %159 {offsets = [0, 384], sizes = [8, 128], strides = [1, 1]} : vector<8x512xf32> to vector<8x128xf32>
    %169 = math.tanh %168 : vector<8x128xf32>
    %170 = vector.extract_strided_slice %167 {offsets = [0, 0], sizes = [8, 128], strides = [1, 1]} : vector<8x384xf32> to vector<8x128xf32>
    %171 = vector.extract_strided_slice %167 {offsets = [0, 128], sizes = [8, 128], strides = [1, 1]} : vector<8x384xf32> to vector<8x128xf32>
    %172 = vector.extract_strided_slice %167 {offsets = [0, 256], sizes = [8, 128], strides = [1, 1]} : vector<8x384xf32> to vector<8x128xf32>
    %173 = arith.mulf %171, %151 : vector<8x128xf32>
    %174 = arith.mulf %170, %169 : vector<8x128xf32>
    %175 = arith.addf %173, %174 : vector<8x128xf32>
    %176 = math.tanh %175 : vector<8x128xf32>
    %177 = arith.mulf %172, %176 : vector<8x128xf32>
    %178 = vector.extract_strided_slice %0 {offsets = [0, 7], sizes = [8, 1], strides = [1, 1]} : vector<8x16xf32> to vector<8x1xf32>
    %179 = vector.broadcast %178 : vector<8x1xf32> to vector<8x512xf32>
    %180 = arith.mulf %179, %4 : vector<8x512xf32>
    %181 = arith.addf %180, %7 : vector<8x512xf32>
    %cst_36 = arith.constant dense<0.000000e+00> : vector<8x512xf32>
    %182 = tpu.matmul %177, %1, %cst_36 {dimension_numbers = #tpu.dot_dimension_numbers<[1], [0], [0], [1], [0, 0, 1, 1], [], []>} : vector<8x128xf32>, vector<128x512xf32>, vector<8x512xf32> -> vector<8x512xf32>
    %183 = arith.addf %182, %181 : vector<8x512xf32>
    %184 = vector.extract_strided_slice %183 {offsets = [0, 0], sizes = [8, 384], strides = [1, 1]} : vector<8x512xf32> to vector<8x384xf32>
    %cst_37 = arith.constant 5.000000e-01 : f32
    %185 = vector.broadcast %cst_37 : f32 to vector<8x384xf32>
    %186 = arith.mulf %185, %184 : vector<8x384xf32>
    %187 = math.tanh %186 : vector<8x384xf32>
    %cst_38 = arith.constant 5.000000e-01 : f32
    %188 = vector.broadcast %cst_38 : f32 to vector<8x384xf32>
    %189 = arith.mulf %188, %187 : vector<8x384xf32>
    %cst_39 = arith.constant 5.000000e-01 : f32
    %190 = vector.broadcast %cst_39 : f32 to vector<8x384xf32>
    %191 = arith.addf %189, %190 : vector<8x384xf32>
    %192 = vector.extract_strided_slice %183 {offsets = [0, 384], sizes = [8, 128], strides = [1, 1]} : vector<8x512xf32> to vector<8x128xf32>
    %193 = math.tanh %192 : vector<8x128xf32>
    %194 = vector.extract_strided_slice %191 {offsets = [0, 0], sizes = [8, 128], strides = [1, 1]} : vector<8x384xf32> to vector<8x128xf32>
    %195 = vector.extract_strided_slice %191 {offsets = [0, 128], sizes = [8, 128], strides = [1, 1]} : vector<8x384xf32> to vector<8x128xf32>
    %196 = vector.extract_strided_slice %191 {offsets = [0, 256], sizes = [8, 128], strides = [1, 1]} : vector<8x384xf32> to vector<8x128xf32>
    %197 = arith.mulf %195, %175 : vector<8x128xf32>
    %198 = arith.mulf %194, %193 : vector<8x128xf32>
    %199 = arith.addf %197, %198 : vector<8x128xf32>
    %200 = math.tanh %199 : vector<8x128xf32>
    %201 = arith.mulf %196, %200 : vector<8x128xf32>
    %202 = vector.extract_strided_slice %0 {offsets = [0, 8], sizes = [8, 1], strides = [1, 1]} : vector<8x16xf32> to vector<8x1xf32>
    %203 = vector.broadcast %202 : vector<8x1xf32> to vector<8x512xf32>
    %204 = arith.mulf %203, %4 : vector<8x512xf32>
    %205 = arith.addf %204, %7 : vector<8x512xf32>
    %cst_40 = arith.constant dense<0.000000e+00> : vector<8x512xf32>
    %206 = tpu.matmul %201, %1, %cst_40 {dimension_numbers = #tpu.dot_dimension_numbers<[1], [0], [0], [1], [0, 0, 1, 1], [], []>} : vector<8x128xf32>, vector<128x512xf32>, vector<8x512xf32> -> vector<8x512xf32>
    %207 = arith.addf %206, %205 : vector<8x512xf32>
    %208 = vector.extract_strided_slice %207 {offsets = [0, 0], sizes = [8, 384], strides = [1, 1]} : vector<8x512xf32> to vector<8x384xf32>
    %cst_41 = arith.constant 5.000000e-01 : f32
    %209 = vector.broadcast %cst_41 : f32 to vector<8x384xf32>
    %210 = arith.mulf %209, %208 : vector<8x384xf32>
    %211 = math.tanh %210 : vector<8x384xf32>
    %cst_42 = arith.constant 5.000000e-01 : f32
    %212 = vector.broadcast %cst_42 : f32 to vector<8x384xf32>
    %213 = arith.mulf %212, %211 : vector<8x384xf32>
    %cst_43 = arith.constant 5.000000e-01 : f32
    %214 = vector.broadcast %cst_43 : f32 to vector<8x384xf32>
    %215 = arith.addf %213, %214 : vector<8x384xf32>
    %216 = vector.extract_strided_slice %207 {offsets = [0, 384], sizes = [8, 128], strides = [1, 1]} : vector<8x512xf32> to vector<8x128xf32>
    %217 = math.tanh %216 : vector<8x128xf32>
    %218 = vector.extract_strided_slice %215 {offsets = [0, 0], sizes = [8, 128], strides = [1, 1]} : vector<8x384xf32> to vector<8x128xf32>
    %219 = vector.extract_strided_slice %215 {offsets = [0, 128], sizes = [8, 128], strides = [1, 1]} : vector<8x384xf32> to vector<8x128xf32>
    %220 = vector.extract_strided_slice %215 {offsets = [0, 256], sizes = [8, 128], strides = [1, 1]} : vector<8x384xf32> to vector<8x128xf32>
    %221 = arith.mulf %219, %199 : vector<8x128xf32>
    %222 = arith.mulf %218, %217 : vector<8x128xf32>
    %223 = arith.addf %221, %222 : vector<8x128xf32>
    %224 = math.tanh %223 : vector<8x128xf32>
    %225 = arith.mulf %220, %224 : vector<8x128xf32>
    %226 = vector.extract_strided_slice %0 {offsets = [0, 9], sizes = [8, 1], strides = [1, 1]} : vector<8x16xf32> to vector<8x1xf32>
    %227 = vector.broadcast %226 : vector<8x1xf32> to vector<8x512xf32>
    %228 = arith.mulf %227, %4 : vector<8x512xf32>
    %229 = arith.addf %228, %7 : vector<8x512xf32>
    %cst_44 = arith.constant dense<0.000000e+00> : vector<8x512xf32>
    %230 = tpu.matmul %225, %1, %cst_44 {dimension_numbers = #tpu.dot_dimension_numbers<[1], [0], [0], [1], [0, 0, 1, 1], [], []>} : vector<8x128xf32>, vector<128x512xf32>, vector<8x512xf32> -> vector<8x512xf32>
    %231 = arith.addf %230, %229 : vector<8x512xf32>
    %232 = vector.extract_strided_slice %231 {offsets = [0, 0], sizes = [8, 384], strides = [1, 1]} : vector<8x512xf32> to vector<8x384xf32>
    %cst_45 = arith.constant 5.000000e-01 : f32
    %233 = vector.broadcast %cst_45 : f32 to vector<8x384xf32>
    %234 = arith.mulf %233, %232 : vector<8x384xf32>
    %235 = math.tanh %234 : vector<8x384xf32>
    %cst_46 = arith.constant 5.000000e-01 : f32
    %236 = vector.broadcast %cst_46 : f32 to vector<8x384xf32>
    %237 = arith.mulf %236, %235 : vector<8x384xf32>
    %cst_47 = arith.constant 5.000000e-01 : f32
    %238 = vector.broadcast %cst_47 : f32 to vector<8x384xf32>
    %239 = arith.addf %237, %238 : vector<8x384xf32>
    %240 = vector.extract_strided_slice %231 {offsets = [0, 384], sizes = [8, 128], strides = [1, 1]} : vector<8x512xf32> to vector<8x128xf32>
    %241 = math.tanh %240 : vector<8x128xf32>
    %242 = vector.extract_strided_slice %239 {offsets = [0, 0], sizes = [8, 128], strides = [1, 1]} : vector<8x384xf32> to vector<8x128xf32>
    %243 = vector.extract_strided_slice %239 {offsets = [0, 128], sizes = [8, 128], strides = [1, 1]} : vector<8x384xf32> to vector<8x128xf32>
    %244 = vector.extract_strided_slice %239 {offsets = [0, 256], sizes = [8, 128], strides = [1, 1]} : vector<8x384xf32> to vector<8x128xf32>
    %245 = arith.mulf %243, %223 : vector<8x128xf32>
    %246 = arith.mulf %242, %241 : vector<8x128xf32>
    %247 = arith.addf %245, %246 : vector<8x128xf32>
    %248 = math.tanh %247 : vector<8x128xf32>
    %249 = arith.mulf %244, %248 : vector<8x128xf32>
    %250 = vector.extract_strided_slice %0 {offsets = [0, 10], sizes = [8, 1], strides = [1, 1]} : vector<8x16xf32> to vector<8x1xf32>
    %251 = vector.broadcast %250 : vector<8x1xf32> to vector<8x512xf32>
    %252 = arith.mulf %251, %4 : vector<8x512xf32>
    %253 = arith.addf %252, %7 : vector<8x512xf32>
    %cst_48 = arith.constant dense<0.000000e+00> : vector<8x512xf32>
    %254 = tpu.matmul %249, %1, %cst_48 {dimension_numbers = #tpu.dot_dimension_numbers<[1], [0], [0], [1], [0, 0, 1, 1], [], []>} : vector<8x128xf32>, vector<128x512xf32>, vector<8x512xf32> -> vector<8x512xf32>
    %255 = arith.addf %254, %253 : vector<8x512xf32>
    %256 = vector.extract_strided_slice %255 {offsets = [0, 0], sizes = [8, 384], strides = [1, 1]} : vector<8x512xf32> to vector<8x384xf32>
    %cst_49 = arith.constant 5.000000e-01 : f32
    %257 = vector.broadcast %cst_49 : f32 to vector<8x384xf32>
    %258 = arith.mulf %257, %256 : vector<8x384xf32>
    %259 = math.tanh %258 : vector<8x384xf32>
    %cst_50 = arith.constant 5.000000e-01 : f32
    %260 = vector.broadcast %cst_50 : f32 to vector<8x384xf32>
    %261 = arith.mulf %260, %259 : vector<8x384xf32>
    %cst_51 = arith.constant 5.000000e-01 : f32
    %262 = vector.broadcast %cst_51 : f32 to vector<8x384xf32>
    %263 = arith.addf %261, %262 : vector<8x384xf32>
    %264 = vector.extract_strided_slice %255 {offsets = [0, 384], sizes = [8, 128], strides = [1, 1]} : vector<8x512xf32> to vector<8x128xf32>
    %265 = math.tanh %264 : vector<8x128xf32>
    %266 = vector.extract_strided_slice %263 {offsets = [0, 0], sizes = [8, 128], strides = [1, 1]} : vector<8x384xf32> to vector<8x128xf32>
    %267 = vector.extract_strided_slice %263 {offsets = [0, 128], sizes = [8, 128], strides = [1, 1]} : vector<8x384xf32> to vector<8x128xf32>
    %268 = vector.extract_strided_slice %263 {offsets = [0, 256], sizes = [8, 128], strides = [1, 1]} : vector<8x384xf32> to vector<8x128xf32>
    %269 = arith.mulf %267, %247 : vector<8x128xf32>
    %270 = arith.mulf %266, %265 : vector<8x128xf32>
    %271 = arith.addf %269, %270 : vector<8x128xf32>
    %272 = math.tanh %271 : vector<8x128xf32>
    %273 = arith.mulf %268, %272 : vector<8x128xf32>
    %274 = vector.extract_strided_slice %0 {offsets = [0, 11], sizes = [8, 1], strides = [1, 1]} : vector<8x16xf32> to vector<8x1xf32>
    %275 = vector.broadcast %274 : vector<8x1xf32> to vector<8x512xf32>
    %276 = arith.mulf %275, %4 : vector<8x512xf32>
    %277 = arith.addf %276, %7 : vector<8x512xf32>
    %cst_52 = arith.constant dense<0.000000e+00> : vector<8x512xf32>
    %278 = tpu.matmul %273, %1, %cst_52 {dimension_numbers = #tpu.dot_dimension_numbers<[1], [0], [0], [1], [0, 0, 1, 1], [], []>} : vector<8x128xf32>, vector<128x512xf32>, vector<8x512xf32> -> vector<8x512xf32>
    %279 = arith.addf %278, %277 : vector<8x512xf32>
    %280 = vector.extract_strided_slice %279 {offsets = [0, 0], sizes = [8, 384], strides = [1, 1]} : vector<8x512xf32> to vector<8x384xf32>
    %cst_53 = arith.constant 5.000000e-01 : f32
    %281 = vector.broadcast %cst_53 : f32 to vector<8x384xf32>
    %282 = arith.mulf %281, %280 : vector<8x384xf32>
    %283 = math.tanh %282 : vector<8x384xf32>
    %cst_54 = arith.constant 5.000000e-01 : f32
    %284 = vector.broadcast %cst_54 : f32 to vector<8x384xf32>
    %285 = arith.mulf %284, %283 : vector<8x384xf32>
    %cst_55 = arith.constant 5.000000e-01 : f32
    %286 = vector.broadcast %cst_55 : f32 to vector<8x384xf32>
    %287 = arith.addf %285, %286 : vector<8x384xf32>
    %288 = vector.extract_strided_slice %279 {offsets = [0, 384], sizes = [8, 128], strides = [1, 1]} : vector<8x512xf32> to vector<8x128xf32>
    %289 = math.tanh %288 : vector<8x128xf32>
    %290 = vector.extract_strided_slice %287 {offsets = [0, 0], sizes = [8, 128], strides = [1, 1]} : vector<8x384xf32> to vector<8x128xf32>
    %291 = vector.extract_strided_slice %287 {offsets = [0, 128], sizes = [8, 128], strides = [1, 1]} : vector<8x384xf32> to vector<8x128xf32>
    %292 = vector.extract_strided_slice %287 {offsets = [0, 256], sizes = [8, 128], strides = [1, 1]} : vector<8x384xf32> to vector<8x128xf32>
    %293 = arith.mulf %291, %271 : vector<8x128xf32>
    %294 = arith.mulf %290, %289 : vector<8x128xf32>
    %295 = arith.addf %293, %294 : vector<8x128xf32>
    %296 = math.tanh %295 : vector<8x128xf32>
    %297 = arith.mulf %292, %296 : vector<8x128xf32>
    %298 = vector.extract_strided_slice %0 {offsets = [0, 12], sizes = [8, 1], strides = [1, 1]} : vector<8x16xf32> to vector<8x1xf32>
    %299 = vector.broadcast %298 : vector<8x1xf32> to vector<8x512xf32>
    %300 = arith.mulf %299, %4 : vector<8x512xf32>
    %301 = arith.addf %300, %7 : vector<8x512xf32>
    %cst_56 = arith.constant dense<0.000000e+00> : vector<8x512xf32>
    %302 = tpu.matmul %297, %1, %cst_56 {dimension_numbers = #tpu.dot_dimension_numbers<[1], [0], [0], [1], [0, 0, 1, 1], [], []>} : vector<8x128xf32>, vector<128x512xf32>, vector<8x512xf32> -> vector<8x512xf32>
    %303 = arith.addf %302, %301 : vector<8x512xf32>
    %304 = vector.extract_strided_slice %303 {offsets = [0, 0], sizes = [8, 384], strides = [1, 1]} : vector<8x512xf32> to vector<8x384xf32>
    %cst_57 = arith.constant 5.000000e-01 : f32
    %305 = vector.broadcast %cst_57 : f32 to vector<8x384xf32>
    %306 = arith.mulf %305, %304 : vector<8x384xf32>
    %307 = math.tanh %306 : vector<8x384xf32>
    %cst_58 = arith.constant 5.000000e-01 : f32
    %308 = vector.broadcast %cst_58 : f32 to vector<8x384xf32>
    %309 = arith.mulf %308, %307 : vector<8x384xf32>
    %cst_59 = arith.constant 5.000000e-01 : f32
    %310 = vector.broadcast %cst_59 : f32 to vector<8x384xf32>
    %311 = arith.addf %309, %310 : vector<8x384xf32>
    %312 = vector.extract_strided_slice %303 {offsets = [0, 384], sizes = [8, 128], strides = [1, 1]} : vector<8x512xf32> to vector<8x128xf32>
    %313 = math.tanh %312 : vector<8x128xf32>
    %314 = vector.extract_strided_slice %311 {offsets = [0, 0], sizes = [8, 128], strides = [1, 1]} : vector<8x384xf32> to vector<8x128xf32>
    %315 = vector.extract_strided_slice %311 {offsets = [0, 128], sizes = [8, 128], strides = [1, 1]} : vector<8x384xf32> to vector<8x128xf32>
    %316 = vector.extract_strided_slice %311 {offsets = [0, 256], sizes = [8, 128], strides = [1, 1]} : vector<8x384xf32> to vector<8x128xf32>
    %317 = arith.mulf %315, %295 : vector<8x128xf32>
    %318 = arith.mulf %314, %313 : vector<8x128xf32>
    %319 = arith.addf %317, %318 : vector<8x128xf32>
    %320 = math.tanh %319 : vector<8x128xf32>
    %321 = arith.mulf %316, %320 : vector<8x128xf32>
    %322 = vector.extract_strided_slice %0 {offsets = [0, 13], sizes = [8, 1], strides = [1, 1]} : vector<8x16xf32> to vector<8x1xf32>
    %323 = vector.broadcast %322 : vector<8x1xf32> to vector<8x512xf32>
    %324 = arith.mulf %323, %4 : vector<8x512xf32>
    %325 = arith.addf %324, %7 : vector<8x512xf32>
    %cst_60 = arith.constant dense<0.000000e+00> : vector<8x512xf32>
    %326 = tpu.matmul %321, %1, %cst_60 {dimension_numbers = #tpu.dot_dimension_numbers<[1], [0], [0], [1], [0, 0, 1, 1], [], []>} : vector<8x128xf32>, vector<128x512xf32>, vector<8x512xf32> -> vector<8x512xf32>
    %327 = arith.addf %326, %325 : vector<8x512xf32>
    %328 = vector.extract_strided_slice %327 {offsets = [0, 0], sizes = [8, 384], strides = [1, 1]} : vector<8x512xf32> to vector<8x384xf32>
    %cst_61 = arith.constant 5.000000e-01 : f32
    %329 = vector.broadcast %cst_61 : f32 to vector<8x384xf32>
    %330 = arith.mulf %329, %328 : vector<8x384xf32>
    %331 = math.tanh %330 : vector<8x384xf32>
    %cst_62 = arith.constant 5.000000e-01 : f32
    %332 = vector.broadcast %cst_62 : f32 to vector<8x384xf32>
    %333 = arith.mulf %332, %331 : vector<8x384xf32>
    %cst_63 = arith.constant 5.000000e-01 : f32
    %334 = vector.broadcast %cst_63 : f32 to vector<8x384xf32>
    %335 = arith.addf %333, %334 : vector<8x384xf32>
    %336 = vector.extract_strided_slice %327 {offsets = [0, 384], sizes = [8, 128], strides = [1, 1]} : vector<8x512xf32> to vector<8x128xf32>
    %337 = math.tanh %336 : vector<8x128xf32>
    %338 = vector.extract_strided_slice %335 {offsets = [0, 0], sizes = [8, 128], strides = [1, 1]} : vector<8x384xf32> to vector<8x128xf32>
    %339 = vector.extract_strided_slice %335 {offsets = [0, 128], sizes = [8, 128], strides = [1, 1]} : vector<8x384xf32> to vector<8x128xf32>
    %340 = vector.extract_strided_slice %335 {offsets = [0, 256], sizes = [8, 128], strides = [1, 1]} : vector<8x384xf32> to vector<8x128xf32>
    %341 = arith.mulf %339, %319 : vector<8x128xf32>
    %342 = arith.mulf %338, %337 : vector<8x128xf32>
    %343 = arith.addf %341, %342 : vector<8x128xf32>
    %344 = math.tanh %343 : vector<8x128xf32>
    %345 = arith.mulf %340, %344 : vector<8x128xf32>
    %346 = vector.extract_strided_slice %0 {offsets = [0, 14], sizes = [8, 1], strides = [1, 1]} : vector<8x16xf32> to vector<8x1xf32>
    %347 = vector.broadcast %346 : vector<8x1xf32> to vector<8x512xf32>
    %348 = arith.mulf %347, %4 : vector<8x512xf32>
    %349 = arith.addf %348, %7 : vector<8x512xf32>
    %cst_64 = arith.constant dense<0.000000e+00> : vector<8x512xf32>
    %350 = tpu.matmul %345, %1, %cst_64 {dimension_numbers = #tpu.dot_dimension_numbers<[1], [0], [0], [1], [0, 0, 1, 1], [], []>} : vector<8x128xf32>, vector<128x512xf32>, vector<8x512xf32> -> vector<8x512xf32>
    %351 = arith.addf %350, %349 : vector<8x512xf32>
    %352 = vector.extract_strided_slice %351 {offsets = [0, 0], sizes = [8, 384], strides = [1, 1]} : vector<8x512xf32> to vector<8x384xf32>
    %cst_65 = arith.constant 5.000000e-01 : f32
    %353 = vector.broadcast %cst_65 : f32 to vector<8x384xf32>
    %354 = arith.mulf %353, %352 : vector<8x384xf32>
    %355 = math.tanh %354 : vector<8x384xf32>
    %cst_66 = arith.constant 5.000000e-01 : f32
    %356 = vector.broadcast %cst_66 : f32 to vector<8x384xf32>
    %357 = arith.mulf %356, %355 : vector<8x384xf32>
    %cst_67 = arith.constant 5.000000e-01 : f32
    %358 = vector.broadcast %cst_67 : f32 to vector<8x384xf32>
    %359 = arith.addf %357, %358 : vector<8x384xf32>
    %360 = vector.extract_strided_slice %351 {offsets = [0, 384], sizes = [8, 128], strides = [1, 1]} : vector<8x512xf32> to vector<8x128xf32>
    %361 = math.tanh %360 : vector<8x128xf32>
    %362 = vector.extract_strided_slice %359 {offsets = [0, 0], sizes = [8, 128], strides = [1, 1]} : vector<8x384xf32> to vector<8x128xf32>
    %363 = vector.extract_strided_slice %359 {offsets = [0, 128], sizes = [8, 128], strides = [1, 1]} : vector<8x384xf32> to vector<8x128xf32>
    %364 = vector.extract_strided_slice %359 {offsets = [0, 256], sizes = [8, 128], strides = [1, 1]} : vector<8x384xf32> to vector<8x128xf32>
    %365 = arith.mulf %363, %343 : vector<8x128xf32>
    %366 = arith.mulf %362, %361 : vector<8x128xf32>
    %367 = arith.addf %365, %366 : vector<8x128xf32>
    %368 = math.tanh %367 : vector<8x128xf32>
    %369 = arith.mulf %364, %368 : vector<8x128xf32>
    %370 = vector.extract_strided_slice %0 {offsets = [0, 15], sizes = [8, 1], strides = [1, 1]} : vector<8x16xf32> to vector<8x1xf32>
    %371 = vector.broadcast %370 : vector<8x1xf32> to vector<8x512xf32>
    %372 = arith.mulf %371, %4 : vector<8x512xf32>
    %373 = arith.addf %372, %7 : vector<8x512xf32>
    %cst_68 = arith.constant dense<0.000000e+00> : vector<8x512xf32>
    %374 = tpu.matmul %369, %1, %cst_68 {dimension_numbers = #tpu.dot_dimension_numbers<[1], [0], [0], [1], [0, 0, 1, 1], [], []>} : vector<8x128xf32>, vector<128x512xf32>, vector<8x512xf32> -> vector<8x512xf32>
    %375 = arith.addf %374, %373 : vector<8x512xf32>
    %376 = vector.extract_strided_slice %375 {offsets = [0, 0], sizes = [8, 384], strides = [1, 1]} : vector<8x512xf32> to vector<8x384xf32>
    %cst_69 = arith.constant 5.000000e-01 : f32
    %377 = vector.broadcast %cst_69 : f32 to vector<8x384xf32>
    %378 = arith.mulf %377, %376 : vector<8x384xf32>
    %379 = math.tanh %378 : vector<8x384xf32>
    %cst_70 = arith.constant 5.000000e-01 : f32
    %380 = vector.broadcast %cst_70 : f32 to vector<8x384xf32>
    %381 = arith.mulf %380, %379 : vector<8x384xf32>
    %cst_71 = arith.constant 5.000000e-01 : f32
    %382 = vector.broadcast %cst_71 : f32 to vector<8x384xf32>
    %383 = arith.addf %381, %382 : vector<8x384xf32>
    %384 = vector.extract_strided_slice %375 {offsets = [0, 384], sizes = [8, 128], strides = [1, 1]} : vector<8x512xf32> to vector<8x128xf32>
    %385 = math.tanh %384 : vector<8x128xf32>
    %386 = vector.extract_strided_slice %383 {offsets = [0, 0], sizes = [8, 128], strides = [1, 1]} : vector<8x384xf32> to vector<8x128xf32>
    %387 = vector.extract_strided_slice %383 {offsets = [0, 128], sizes = [8, 128], strides = [1, 1]} : vector<8x384xf32> to vector<8x128xf32>
    %388 = vector.extract_strided_slice %383 {offsets = [0, 256], sizes = [8, 128], strides = [1, 1]} : vector<8x384xf32> to vector<8x128xf32>
    %389 = arith.mulf %387, %367 : vector<8x128xf32>
    %390 = arith.mulf %386, %385 : vector<8x128xf32>
    %391 = arith.addf %389, %390 : vector<8x128xf32>
    %392 = math.tanh %391 : vector<8x128xf32>
    %393 = arith.mulf %388, %392 : vector<8x128xf32>
    %cst_72 = arith.constant dense<0.000000e+00> : vector<8x512xf32>
    %394 = tpu.matmul %393, %1, %cst_72 {dimension_numbers = #tpu.dot_dimension_numbers<[1], [0], [0], [1], [0, 0, 1, 1], [], []>} : vector<8x128xf32>, vector<128x512xf32>, vector<8x512xf32> -> vector<8x512xf32>
    %395 = arith.addf %394, %7 : vector<8x512xf32>
    %396 = vector.extract_strided_slice %395 {offsets = [0, 0], sizes = [8, 384], strides = [1, 1]} : vector<8x512xf32> to vector<8x384xf32>
    %cst_73 = arith.constant 5.000000e-01 : f32
    %397 = vector.broadcast %cst_73 : f32 to vector<8x384xf32>
    %398 = arith.mulf %397, %396 : vector<8x384xf32>
    %399 = math.tanh %398 : vector<8x384xf32>
    %cst_74 = arith.constant 5.000000e-01 : f32
    %400 = vector.broadcast %cst_74 : f32 to vector<8x384xf32>
    %401 = arith.mulf %400, %399 : vector<8x384xf32>
    %cst_75 = arith.constant 5.000000e-01 : f32
    %402 = vector.broadcast %cst_75 : f32 to vector<8x384xf32>
    %403 = arith.addf %401, %402 : vector<8x384xf32>
    %404 = vector.extract_strided_slice %395 {offsets = [0, 384], sizes = [8, 128], strides = [1, 1]} : vector<8x512xf32> to vector<8x128xf32>
    %405 = math.tanh %404 : vector<8x128xf32>
    %406 = vector.extract_strided_slice %403 {offsets = [0, 0], sizes = [8, 128], strides = [1, 1]} : vector<8x384xf32> to vector<8x128xf32>
    %407 = vector.extract_strided_slice %403 {offsets = [0, 128], sizes = [8, 128], strides = [1, 1]} : vector<8x384xf32> to vector<8x128xf32>
    %408 = vector.extract_strided_slice %403 {offsets = [0, 256], sizes = [8, 128], strides = [1, 1]} : vector<8x384xf32> to vector<8x128xf32>
    %409 = arith.mulf %407, %391 : vector<8x128xf32>
    %410 = arith.mulf %406, %405 : vector<8x128xf32>
    %411 = arith.addf %409, %410 : vector<8x128xf32>
    %412 = math.tanh %411 : vector<8x128xf32>
    %413 = arith.mulf %408, %412 : vector<8x128xf32>
    %c0_76 = arith.constant 0 : index
    %c0_77 = arith.constant 0 : index
    %414 = vector.load %arg6[%c0_76, %c0_77] : memref<128x128xf32, #tpu.memory_space<vmem>>, vector<128x128xf32>
    %cst_78 = arith.constant dense<0.000000e+00> : vector<8x128xf32>
    %415 = tpu.matmul %413, %414, %cst_78 {dimension_numbers = #tpu.dot_dimension_numbers<[1], [0], [0], [1], [0, 0, 1, 1], [], []>} : vector<8x128xf32>, vector<128x128xf32>, vector<8x128xf32> -> vector<8x128xf32>
    %c0_79 = arith.constant 0 : index
    %c0_80 = arith.constant 0 : index
    %416 = vector.load %arg7[%c0_79, %c0_80] : memref<1x128xf32, #tpu.memory_space<vmem>>, vector<1x128xf32>
    %417 = vector.broadcast %416 : vector<1x128xf32> to vector<8x128xf32>
    %418 = arith.addf %415, %417 : vector<8x128xf32>
    %c0_81 = arith.constant 0 : index
    %c0_82 = arith.constant 0 : index
    %419 = vector.load %arg8[%c0_81, %c0_82] : memref<8x128xf32, #tpu.memory_space<vmem>>, vector<8x128xf32>
    tpu.vector_store %arg8[%c0_81, %c0_82], %418 {strides = array<i32>} : memref<8x128xf32, #tpu.memory_space<vmem>>, vector<8x128xf32>,
    return
  }
  func.func @transform_0(%arg0: i32) -> (i32, i32) {
    %c0_i32 = arith.constant 0 : i32
    %c0_i32_0 = arith.constant 0 : i32
    %c0_i32_1 = arith.constant 0 : i32
    return %c0_i32, %c0_i32_0 : i32, i32
  }
  func.func @transform_1(%arg0: i32) -> (i32, i32) {
    %c0_i32 = arith.constant 0 : i32
    %c0_i32_0 = arith.constant 0 : i32
    %c0_i32_1 = arith.constant 0 : i32
    return %c0_i32, %c0_i32_0 : i32, i32
  }
  func.func @transform_2(%arg0: i32) -> (i32, i32) {
    %c0_i32 = arith.constant 0 : i32
    %c0_i32_0 = arith.constant 0 : i32
    %c0_i32_1 = arith.constant 0 : i32
    return %c0_i32, %c0_i32_0 : i32, i32
  }
  func.func @transform_3(%arg0: i32) -> (i32, i32) {
    %c0_i32 = arith.constant 0 : i32
    %c0_i32_0 = arith.constant 0 : i32
    %c0_i32_1 = arith.constant 0 : i32
    return %c0_i32, %c0_i32_0 : i32, i32
  }
  func.func @transform_4(%arg0: i32) -> (i32, i32) {
    %c0_i32 = arith.constant 0 : i32
    %c0_i32_0 = arith.constant 0 : i32
    %c0_i32_1 = arith.constant 0 : i32
    return %c0_i32, %c0_i32_0 : i32, i32
  }
  func.func @transform_5(%arg0: i32) -> (i32, i32) {
    %c0_i32 = arith.constant 0 : i32
    %c0_i32_0 = arith.constant 0 : i32
    %c0_i32_1 = arith.constant 0 : i32
    return %c0_i32, %c0_i32_0 : i32, i32
  }
  func.func @transform_6(%arg0: i32) -> (i32, i32) {
    %c0_i32 = arith.constant 0 : i32
    %c0_i32_0 = arith.constant 0 : i32
    %c0_i32_1 = arith.constant 0 : i32
    return %c0_i32, %c0_i32_0 : i32, i32
  }
  func.func @transform_7(%arg0: i32) -> (i32, i32) {
    %c0_i32 = arith.constant 0 : i32
    %c0_i32_0 = arith.constant 0 : i32
    %c0_i32_1 = arith.constant 0 : i32
    return %c0_i32, %c0_i32_0 : i32, i32
  }
}

</mosaic_0001>

<llo_original>
// kernel: tpu_custom_call.1
$region0: #{tpu_custom_call.1}
  #allocation0 [shape = 'u32[]', space=smem, size = 0x4, offset = 0x4, fixed_abs, tag = 'smem constant byte address 0x4 - core index']
  #allocation1 [shape = 'u32[144,128]{1,0:T(1,128)}', space=vmem, size = 0x12000, scoped, tag = 'internal scratch']
  %s0 = inlined_call_operand.hbm [shape: f32[8,16], index: 0, kind: input, shape index: {}]
  %s1 = inlined_call_operand.hbm [shape: f32[1,512], index: 1, kind: input, shape index: {}]
  %s2 = inlined_call_operand.hbm [shape: f32[128,512], index: 2, kind: input, shape index: {}]
  %s3 = inlined_call_operand.vmem [shape: f32[1,512], index: 3, kind: input, shape index: {}]
  %s4 = inlined_call_operand.vmem [shape: f32[1,512], index: 4, kind: input, shape index: {}]
  %s5 = inlined_call_operand.hbm [shape: f32[128,128], index: 5, kind: input, shape index: {}]
  %s6 = inlined_call_operand.vmem [shape: f32[1,128], index: 6, kind: input, shape index: {}]
  %s7 = inlined_call_operand.hbm [shape: f32[8,128], index: 7, kind: output, shape index: {}]
  %s8 = sld [smem:[#allocation0]]
  $region54: #{tpu_custom_call.1} parent=0
    _
  %s10 = ssub.s32 1, %s8
  %s11 = scalar_select 0, %s10, %s8
  $region1: #{tpu_custom_call.1} parent=0
    #allocation2 [shape = 'u8[4096]{0}', space=vmem, size = 0x1000, scoped, tag = 'input window, operand 0, single buffered']
    #allocation3 [shape = 's32[1]{0}', space=sflag, size = 0x4, scoped, tag = 'scoped memory for tpu_custom_call.1']
    #allocation4 [shape = 's32[1]{0}', space=sflag, size = 0x4, scoped, tag = 'scoped memory for tpu_custom_call.1']
    #allocation5 [shape = 'u8[2048]{0}', space=vmem, size = 0x800, scoped, tag = 'input window, operand 1, single buffered']
    #allocation6 [shape = 's32[1]{0}', space=sflag, size = 0x4, scoped, tag = 'scoped memory for tpu_custom_call.1']
    #allocation7 [shape = 'u8[262144]{0}', space=vmem, size = 0x40000, scoped, tag = 'input window, operand 2, single buffered']
    #allocation8 [shape = 'u8[65536]{0}', space=vmem, size = 0x10000, scoped, tag = 'input window, operand 5, single buffered']
    #allocation9 [shape = 's32[1]{0}', space=sflag, size = 0x4, scoped, tag = 'scoped memory for tpu_custom_call.1']
    #allocation10 [shape = 'u8[4096]{0}', space=vmem, size = 0x1000, scoped, tag = 'output window, operand 0, single buffered']
    %12 = vsyncpa [#allocation3], 0
    %13 = vsyncpa [#allocation6], 0
    %14 = vsyncpa [#allocation9], 0
    %15 = vsyncpa [#allocation4], 0
    // Predicated region
    $region2: #{tpu_custom_call.1} parent=1 // pred_check
      _
    $region3: #{tpu_custom_call.1} parent=1 // pred_check_branch
      %17 = sbr.rel (0) target = $region5
    $region4: #{tpu_custom_call.1} parent=1 // pred_region
      %s19 = ssub.s32 128, 128
      %20 = vsyncadd [#allocation3], %s19
      %s22 = sshll.u32 [#allocation2], 4
      %s23 = int_to_ptr.vmem [resolvable:$true] %s22
      %25 = dma.hbm_to_vmem [thread:$0]  %s0, 128, %s23, [#allocation3]
    $region5: #{tpu_custom_call.1} parent=1 // pred_fallthru
      _
    // Predicated region
    $region6: #{tpu_custom_call.1} parent=1 // pred_check
      _
    $region7: #{tpu_custom_call.1} parent=1 // pred_check_branch
      %27 = sbr.rel (0) target = $region9
    $region8: #{tpu_custom_call.1} parent=1 // pred_region
      %s29 = ssub.s32 64, 64
      %30 = vsyncadd [#allocation6], %s29
      %s32 = sshll.u32 [#allocation5], 4
      %s33 = int_to_ptr.vmem [resolvable:$true] %s32
      %35 = dma.hbm_to_vmem [thread:$0]  %s1, 64, %s33, [#allocation6]
    $region9: #{tpu_custom_call.1} parent=1 // pred_fallthru
      _
    // Predicated region
    $region10: #{tpu_custom_call.1} parent=1 // pred_check
      _
    $region11: #{tpu_custom_call.1} parent=1 // pred_check_branch
      %37 = sbr.rel (0) target = $region13
    $region12: #{tpu_custom_call.1} parent=1 // pred_region
      %s39 = ssub.s32 8192, 8192
      %40 = vsyncadd [#allocation6], %s39
      %s41 = sshll.u32 [#allocation7], 4
      %s42 = int_to_ptr.vmem [resolvable:$true] %s41
      %47 = dma.hbm_to_vmem [thread:$0]  %s2, 8192, %s42, [#allocation6], 512, 512, 32
    $region13: #{tpu_custom_call.1} parent=1 // pred_fallthru
      _
    // Predicated region
    $region14: #{tpu_custom_call.1} parent=1 // pred_check
      _
    $region15: #{tpu_custom_call.1} parent=1 // pred_check_branch
      %49 = sbr.rel (0) target = $region17
    $region16: #{tpu_custom_call.1} parent=1 // pred_region
      _
    $region17: #{tpu_custom_call.1} parent=1 // pred_fallthru
      _
    // Predicated region
    $region18: #{tpu_custom_call.1} parent=1 // pred_check
      _
    $region19: #{tpu_custom_call.1} parent=1 // pred_check_branch
      %51 = sbr.rel (0) target = $region21
    $region20: #{tpu_custom_call.1} parent=1 // pred_region
      _
    $region21: #{tpu_custom_call.1} parent=1 // pred_fallthru
      _
    // Predicated region
    $region22: #{tpu_custom_call.1} parent=1 // pred_check
      _
    $region23: #{tpu_custom_call.1} parent=1 // pred_check_branch
      %53 = sbr.rel (0) target = $region25
    $region24: #{tpu_custom_call.1} parent=1 // pred_region
      %s55 = ssub.s32 2048, 2048
      %56 = vsyncadd [#allocation9], %s55
      %s57 = sshll.u32 [#allocation8], 4
      %s58 = int_to_ptr.vmem [resolvable:$true] %s57
      %63 = dma.hbm_to_vmem [thread:$0]  %s5, 2048, %s58, [#allocation9], 128, 128, 8
    $region25: #{tpu_custom_call.1} parent=1 // pred_fallthru
      _
    // Predicated region
    $region26: #{tpu_custom_call.1} parent=1 // pred_check
      _
    $region27: #{tpu_custom_call.1} parent=1 // pred_check_branch
      %65 = sbr.rel (0) target = $region29
    $region28: #{tpu_custom_call.1} parent=1 // pred_region
      _
    $region29: #{tpu_custom_call.1} parent=1 // pred_fallthru
      _
    // Predicated region
    $region30: #{tpu_custom_call.1} parent=1 // pred_check
      _
    $region31: #{tpu_custom_call.1} parent=1 // pred_check_branch
      %67 = sbr.rel (0) target = $region33
    $region32: #{tpu_custom_call.1} parent=1 // pred_region
      %68 = dma.done [#allocation3], 128
    $region33: #{tpu_custom_call.1} parent=1 // pred_fallthru
      _
    // Predicated region
    $region34: #{tpu_custom_call.1} parent=1 // pred_check
      _
    $region35: #{tpu_custom_call.1} parent=1 // pred_check_branch
      %70 = sbr.rel (0) target = $region37
    $region36: #{tpu_custom_call.1} parent=1 // pred_region
      %71 = dma.done [#allocation6], 64
    $region37: #{tpu_custom_call.1} parent=1 // pred_fallthru
      _
    // Predicated region
    $region38: #{tpu_custom_call.1} parent=1 // pred_check
      _
    $region39: #{tpu_custom_call.1} parent=1 // pred_check_branch
      %73 = sbr.rel (0) target = $region41
    $region40: #{tpu_custom_call.1} parent=1 // pred_region
      %74 = dma.done [#allocation6], 8192
    $region41: #{tpu_custom_call.1} parent=1 // pred_fallthru
      _
    // Predicated region
    $region42: #{tpu_custom_call.1} parent=1 // pred_check
      _
    $region43: #{tpu_custom_call.1} parent=1 // pred_check_branch
      %76 = sbr.rel (0) target = $region45
    $region44: #{tpu_custom_call.1} parent=1 // pred_region
      %77 = dma.done [#allocation9], 2048
    $region45: #{tpu_custom_call.1} parent=1 // pred_fallthru
      _
    %v78 = vld [vmem:[#allocation2] sm:$0xff]
    %v79 = vld [vmem:[#allocation7] sm:$0xff]
    %v80 = vld [vmem:[#allocation7 + $0x8] sm:$0xff]
    %v81 = vld [vmem:[#allocation7 + $0x10] sm:$0xff]
    %v82 = vld [vmem:[#allocation7 + $0x18] sm:$0xff]
    %v83 = vld [vmem:[#allocation7 + $0x20] sm:$0xff]
    %v84 = vld [vmem:[#allocation7 + $0x28] sm:$0xff]
    %v85 = vld [vmem:[#allocation7 + $0x30] sm:$0xff]
    %v86 = vld [vmem:[#allocation7 + $0x38] sm:$0xff]
    %v87 = vld [vmem:[#allocation7 + $0x40] sm:$0xff]
    %v88 = vld [vmem:[#allocation7 + $0x48] sm:$0xff]
    %v89 = vld [vmem:[#allocation7 + $0x50] sm:$0xff]
    %v90 = vld [vmem:[#allocation7 + $0x58] sm:$0xff]
    %v91 = vld [vmem:[#allocation7 + $0x60] sm:$0xff]
    %v92 = vld [vmem:[#allocation7 + $0x68] sm:$0xff]
    %v93 = vld [vmem:[#allocation7 + $0x70] sm:$0xff]
    %v94 = vld [vmem:[#allocation7 + $0x78] sm:$0xff]
    %v95 = vld [vmem:[#allocation7 + $0x80] sm:$0xff]
    %v96 = vld [vmem:[#allocation7 + $0x88] sm:$0xff]
    %v97 = vld [vmem:[#allocation7 + $0x90] sm:$0xff]
    %v98 = vld [vmem:[#allocation7 + $0x98] sm:$0xff]
    %v99 = vld [vmem:[#allocation7 + $0xa0] sm:$0xff]
    %v100 = vld [vmem:[#allocation7 + $0xa8] sm:$0xff]
    %v101 = vld [vmem:[#allocation7 + $0xb0] sm:$0xff]
    %v102 = vld [vmem:[#allocation7 + $0xb8] sm:$0xff]
    %v103 = vld [vmem:[#allocation7 + $0xc0] sm:$0xff]
    %v104 = vld [vmem:[#allocation7 + $0xc8] sm:$0xff]
    %v105 = vld [vmem:[#allocation7 + $0xd0] sm:$0xff]
    %v106 = vld [vmem:[#allocation7 + $0xd8] sm:$0xff]
    %v107 = vld [vmem:[#allocation7 + $0xe0] sm:$0xff]
    %v108 = vld [vmem:[#allocation7 + $0xe8] sm:$0xff]
    %v109 = vld [vmem:[#allocation7 + $0xf0] sm:$0xff]
    %v110 = vld [vmem:[#allocation7 + $0xf8] sm:$0xff]
    %v111 = vld [vmem:[#allocation7 + $0x100] sm:$0xff]
    %v112 = vld [vmem:[#allocation7 + $0x108] sm:$0xff]
    %v113 = vld [vmem:[#allocation7 + $0x110] sm:$0xff]
    %v114 = vld [vmem:[#allocation7 + $0x118] sm:$0xff]
    %v115 = vld [vmem:[#allocation7 + $0x120] sm:$0xff]
    %v116 = vld [vmem:[#allocation7 + $0x128] sm:$0xff]
    %v117 = vld [vmem:[#allocation7 + $0x130] sm:$0xff]
    %v118 = vld [vmem:[#allocation7 + $0x138] sm:$0xff]
    %v119 = vld [vmem:[#allocation7 + $0x140] sm:$0xff]
    %v120 = vld [vmem:[#allocation7 + $0x148] sm:$0xff]
    %v121 = vld [vmem:[#allocation7 + $0x150] sm:$0xff]
    %v122 = vld [vmem:[#allocation7 + $0x158] sm:$0xff]
    %v123 = vld [vmem:[#allocation7 + $0x160] sm:$0xff]
    %v124 = vld [vmem:[#allocation7 + $0x168] sm:$0xff]
    %v125 = vld [vmem:[#allocation7 + $0x170] sm:$0xff]
    %v126 = vld [vmem:[#allocation7 + $0x178] sm:$0xff]
    %v127 = vld [vmem:[#allocation7 + $0x180] sm:$0xff]
    %v128 = vld [vmem:[#allocation7 + $0x188] sm:$0xff]
    %v129 = vld [vmem:[#allocation7 + $0x190] sm:$0xff]
    %v130 = vld [vmem:[#allocation7 + $0x198] sm:$0xff]
    %v131 = vld [vmem:[#allocation7 + $0x1a0] sm:$0xff]
    %v132 = vld [vmem:[#allocation7 + $0x1a8] sm:$0xff]
    %v133 = vld [vmem:[#allocation7 + $0x1b0] sm:$0xff]
    %v134 = vld [vmem:[#allocation7 + $0x1b8] sm:$0xff]
    %v135 = vld [vmem:[#allocation7 + $0x1c0] sm:$0xff]
    %v136 = vld [vmem:[#allocation7 + $0x1c8] sm:$0xff]
    %v137 = vld [vmem:[#allocation7 + $0x1d0] sm:$0xff]
    %v138 = vld [vmem:[#allocation7 + $0x1d8] sm:$0xff]
    %v139 = vld [vmem:[#allocation7 + $0x1e0] sm:$0xff]
    %v140 = vld [vmem:[#allocation7 + $0x1e8] sm:$0xff]
    %v141 = vld [vmem:[#allocation7 + $0x1f0] sm:$0xff]
    %v142 = vld [vmem:[#allocation7 + $0x1f8] sm:$0xff]
    %v143 = vld [vmem:[#allocation5] sm:$0xf]
    %v145 = vlaneseq
    %v146 = vshrl.u32 %v145, 7
    %v147 = vsub.s32 0, %v146
    %v148 = vrot.slane %v143, %v147
    %v149 = vlaneseq
    %v150 = vshrl.u32 %v149, 7
    %v151 = vsub.s32 1, %v150
    %v152 = vrot.slane %v143, %v151
    %v153 = vlaneseq
    %v154 = vshrl.u32 %v153, 7
    %v155 = vsub.s32 2, %v154
    %v156 = vrot.slane %v143, %v155
    %v157 = vlaneseq
    %v158 = vshrl.u32 %v157, 7
    %v159 = vsub.s32 3, %v158
    %v160 = vrot.slane %v143, %v159
    %v165 = vld [vmem:[%s4] sm:$0xf]
    %v167 = vlaneseq
    %v168 = vshrl.u32 %v167, 7
    %v169 = vsub.s32 0, %v168
    %v170 = vrot.slane %v165, %v169
    %v171 = vlaneseq
    %v172 = vshrl.u32 %v171, 7
    %v173 = vsub.s32 1, %v172
    %v174 = vrot.slane %v165, %v173
    %v175 = vlaneseq
    %v176 = vshrl.u32 %v175, 7
    %v177 = vsub.s32 2, %v176
    %v178 = vrot.slane %v165, %v177
    %v179 = vlaneseq
    %v180 = vshrl.u32 %v179, 7
    %v181 = vsub.s32 3, %v180
    %v182 = vrot.slane %v165, %v181
    %v187 = vld [vmem:[%s3] sm:$0xf]
    %v189 = vlaneseq
    %v190 = vshrl.u32 %v189, 7
    %v191 = vsub.s32 0, %v190
    %v192 = vrot.slane %v187, %v191
    %v193 = vlaneseq
    %v194 = vshrl.u32 %v193, 7
    %v195 = vsub.s32 1, %v194
    %v196 = vrot.slane %v187, %v195
    %v197 = vlaneseq
    %v198 = vshrl.u32 %v197, 7
    %v199 = vsub.s32 2, %v198
    %v200 = vrot.slane %v187, %v199
    %v201 = vlaneseq
    %v202 = vshrl.u32 %v201, 7
    %v203 = vsub.s32 3, %v202
    %v204 = vrot.slane %v187, %v203
    %210 = vset.pattern.permute.xlu0 0
    %211 = vperm.xlu0 %210, %v78
    %v212 = vpop.permute.xlu0 %211
    %v214 = vmul.f32 %v212, %v148
    %v215 = vmul.f32 %v212, %v152
    %v216 = vmul.f32 %v212, %v156
    %v217 = vmul.f32 %v212, %v160
    %v218 = vadd.f32 %v214, %v192
    %v219 = vadd.f32 %v215, %v196
    %v220 = vadd.f32 %v216, %v200
    %v221 = vadd.f32 %v217, %v204
    %v222 = vmul.f32 %v218, 0.5
    %v223 = vmul.f32 %v219, 0.5
    %v224 = vmul.f32 %v220, 0.5
    %v225 = vtanh.pop %v222
    %v226 = vtanh.pop %v223
    %v227 = vtanh.pop %v224
    %v228 = vmul.f32 %v225, 0.5
    %v229 = vmul.f32 %v226, 0.5
    %v230 = vmul.f32 %v227, 0.5
    %v231 = vadd.f32 %v228, 0.5
    %v232 = vadd.f32 %v229, 0.5
    %v233 = vadd.f32 %v230, 0.5
    %v234 = vtanh.pop %v221
    %v235 = vmul.f32 %v232, 0.0
    %v236 = vmul.f32 %v231, %v234
    %v237 = vadd.f32 %v235, %v236
    %v238 = vtanh.pop %v237
    %v239 = vmul.f32 %v233, %v238
    %240 = vset.pattern.permute.xlu0 1
    %241 = vperm.xlu0 %240, %v78
    %v242 = vpop.permute.xlu0 %241
    %v244 = vmul.f32 %v242, %v148
    %v245 = vmul.f32 %v242, %v152
    %v246 = vmul.f32 %v242, %v156
    %v247 = vmul.f32 %v242, %v160
    %v248 = vadd.f32 %v244, %v170
    %v249 = vadd.f32 %v245, %v174
    %v250 = vadd.f32 %v246, %v178
    %v251 = vadd.f32 %v247, %v182
    %252 = vmatprep.subr.mxu0 %v80
    %253 = vmatpush1.msra.mxu0 %v79
    %254 = vmatprep.subr.mxu0 %v84
    %255 = vmatpush1.msra.mxu0 %v83
    %256 = vmatprep.subr.mxu0 %v88
    %257 = vmatpush1.msra.mxu0 %v87
    %258 = vmatprep.subr.mxu0 %v92
    %259 = vmatpush1.msra.mxu0 %v91
    %260 = vmatprep.subr.mxu0 %v96
    %261 = vmatpush1.msra.mxu0 %v95
    %262 = vmatprep.subr.mxu0 %v100
    %263 = vmatpush1.msra.mxu0 %v99
    %264 = vmatprep.subr.mxu0 %v104
    %265 = vmatpush1.msra.mxu0 %v103
    %266 = vmatprep.subr.mxu0 %v108
    %267 = vmatpush1.msra.mxu0 %v107
    %268 = vmatprep.subr.mxu0 %v112
    %269 = vmatpush1.msra.mxu0 %v111
    %270 = vmatprep.subr.mxu0 %v116
    %271 = vmatpush1.msra.mxu0 %v115
    %272 = vmatprep.subr.mxu0 %v120
    %273 = vmatpush1.msra.mxu0 %v119
    %274 = vmatprep.subr.mxu0 %v124
    %275 = vmatpush1.msra.mxu0 %v123
    %276 = vmatprep.subr.mxu0 %v128
    %277 = vmatpush1.msra.mxu0 %v127
    %278 = vmatprep.subr.mxu0 %v132
    %279 = vmatpush1.msra.mxu0 %v131
    %280 = vmatprep.subr.mxu0 %v136
    %281 = vmatpush1.msra.mxu0 %v135
    %282 = vmatprep.subr.mxu0 %v140
    %283 = vmatpush1.msra.mxu0 %v139
    %284 = vmatprep.subr.mxu0 0.0
    %285 = vmatpush1.msra.mxu0 0.0
    %286 = vmatprep.subr.mxu0 0.0
    %287 = vmatpush1.msra.mxu0 0.0
    %288 = vmatprep.subr.mxu0 0.0
    %289 = vmatpush1.msra.mxu0 0.0
    %290 = vmatprep.subr.mxu0 0.0
    %291 = vmatpush1.msra.mxu0 0.0
    %292 = vmatprep.subr.mxu0 0.0
    %293 = vmatpush1.msra.mxu0 0.0
    %294 = vmatprep.subr.mxu0 0.0
    %295 = vmatpush1.msra.mxu0 0.0
    %296 = vmatprep.subr.mxu0 0.0
    %297 = vmatpush1.msra.mxu0 0.0
    %298 = vmatprep.subr.mxu0 0.0
    %299 = vmatpush1.msra.mxu0 0.0
    %300 = vmatprep.subr.mxu0 0.0
    %301 = vmatpush1.msra.mxu0 0.0
    %302 = vmatprep.subr.mxu0 0.0
    %303 = vmatpush1.msra.mxu0 0.0
    %304 = vmatprep.subr.mxu0 0.0
    %305 = vmatpush1.msra.mxu0 0.0
    %306 = vmatprep.subr.mxu0 0.0
    %307 = vmatpush1.msra.mxu0 0.0
    %308 = vmatprep.subr.mxu0 0.0
    %309 = vmatpush1.msra.mxu0 0.0
    %310 = vmatprep.subr.mxu0 0.0
    %311 = vmatpush1.msra.mxu0 0.0
    %312 = vmatprep.subr.mxu0 0.0
    %313 = vmatpush1.msra.mxu0 0.0
    %314 = vmatprep.subr.mxu0 0.0
    %315 = vmatpush1.msra.mxu0 0.0
    %316 = vmatprep.mubr.f32.mxu0 0.0
    %317 = vmatmul.mubr.f32.gmra.mrb[0].mxu0 %v239
    %v318 = vpop.f32.mrb[0].mxu0
    %v319 = vadd.f32 %v248, %v318
    %v320 = vpop.f32.mrb[0].mxu0
    %v321 = vadd.f32 %v249, %v320
    %322 = vdwg.mxu0
    %323 = vmatprep.subr.mxu0 %v82
    %324 = vmatpush1.msra.mxu0 %v81
    %325 = vmatprep.subr.mxu0 %v86
    %326 = vmatpush1.msra.mxu0 %v85
    %327 = vmatprep.subr.mxu0 %v90
    %328 = vmatpush1.msra.mxu0 %v89
    %329 = vmatprep.subr.mxu0 %v94
    %330 = vmatpush1.msra.mxu0 %v93
    %331 = vmatprep.subr.mxu0 %v98
    %332 = vmatpush1.msra.mxu0 %v97
    %333 = vmatprep.subr.mxu0 %v102
    %334 = vmatpush1.msra.mxu0 %v101
    %335 = vmatprep.subr.mxu0 %v106
    %336 = vmatpush1.msra.mxu0 %v105
    %337 = vmatprep.subr.mxu0 %v110
    %338 = vmatpush1.msra.mxu0 %v109
    %339 = vmatprep.subr.mxu0 %v114
    %340 = vmatpush1.msra.mxu0 %v113
    %341 = vmatprep.subr.mxu0 %v118
    %342 = vmatpush1.msra.mxu0 %v117
    %343 = vmatprep.subr.mxu0 %v122
    %344 = vmatpush1.msra.mxu0 %v121
    %345 = vmatprep.subr.mxu0 %v126
    %346 = vmatpush1.msra.mxu0 %v125
    %347 = vmatprep.subr.mxu0 %v130
    %348 = vmatpush1.msra.mxu0 %v129
    %349 = vmatprep.subr.mxu0 %v134
    %350 = vmatpush1.msra.mxu0 %v133
    %351 = vmatprep.subr.mxu0 %v138
    %352 = vmatpush1.msra.mxu0 %v137
    %353 = vmatprep.subr.mxu0 %v142
    %354 = vmatpush1.msra.mxu0 %v141
    %355 = vmatprep.subr.mxu0 0.0
    %356 = vmatpush1.msra.mxu0 0.0
    %357 = vmatprep.subr.mxu0 0.0
    %358 = vmatpush1.msra.mxu0 0.0
    %359 = vmatprep.subr.mxu0 0.0
    %360 = vmatpush1.msra.mxu0 0.0
    %361 = vmatprep.subr.mxu0 0.0
    %362 = vmatpush1.msra.mxu0 0.0
    %363 = vmatprep.subr.mxu0 0.0
    %364 = vmatpush1.msra.mxu0 0.0
    %365 = vmatprep.subr.mxu0 0.0
    %366 = vmatpush1.msra.mxu0 0.0
    %367 = vmatprep.subr.mxu0 0.0
    %368 = vmatpush1.msra.mxu0 0.0
    %369 = vmatprep.subr.mxu0 0.0
    %370 = vmatpush1.msra.mxu0 0.0
    %371 = vmatprep.subr.mxu0 0.0
    %372 = vmatpush1.msra.mxu0 0.0
    %373 = vmatprep.subr.mxu0 0.0
    %374 = vmatpush1.msra.mxu0 0.0
    %375 = vmatprep.subr.mxu0 0.0
    %376 = vmatpush1.msra.mxu0 0.0
    %377 = vmatprep.subr.mxu0 0.0
    %378 = vmatpush1.msra.mxu0 0.0
    %379 = vmatprep.subr.mxu0 0.0
    %380 = vmatpush1.msra.mxu0 0.0
    %381 = vmatprep.subr.mxu0 0.0
    %382 = vmatpush1.msra.mxu0 0.0
    %383 = vmatprep.subr.mxu0 0.0
    %384 = vmatpush1.msra.mxu0 0.0
    %385 = vmatprep.subr.mxu0 0.0
    %386 = vmatpush1.msra.mxu0 0.0
    %387 = vmatprep.mubr.f32.mxu0 0.0
    %388 = vmatmul.mubr.f32.gmra.mrb[0].mxu0 %v239
    %v389 = vpop.f32.mrb[0].mxu0
    %v390 = vadd.f32 %v250, %v389
    %v391 = vpop.f32.mrb[0].mxu0
    %v392 = vadd.f32 %v251, %v391
    %393 = vdwg.mxu0
    %v394 = vmul.f32 %v319, 0.5
    %v395 = vmul.f32 %v321, 0.5
    %v396 = vmul.f32 %v390, 0.5
    %v397 = vtanh.pop %v394
    %v398 = vtanh.pop %v395
    %v399 = vtanh.pop %v396
    %v400 = vmul.f32 %v397, 0.5
    %v401 = vmul.f32 %v398, 0.5
    %v402 = vmul.f32 %v399, 0.5
    %v403 = vadd.f32 %v400, 0.5
    %v404 = vadd.f32 %v401, 0.5
    %v405 = vadd.f32 %v402, 0.5
    %v406 = vtanh.pop %v392
    %v407 = vmul.f32 %v404, %v237
    %v408 = vmul.f32 %v403, %v406
    %v409 = vadd.f32 %v407, %v408
    %v410 = vtanh.pop %v409
    %v411 = vmul.f32 %v405, %v410
    %412 = vset.pattern.permute.xlu0 2
    %413 = vperm.xlu0 %412, %v78
    %v414 = vpop.permute.xlu0 %413
    %v416 = vmul.f32 %v414, %v148
    %v417 = vmul.f32 %v414, %v152
    %v418 = vmul.f32 %v414, %v156
    %v419 = vmul.f32 %v414, %v160
    %v420 = vadd.f32 %v416, %v170
    %v421 = vadd.f32 %v417, %v174
    %v422 = vadd.f32 %v418, %v178
    %v423 = vadd.f32 %v419, %v182
    %424 = vmatprep.subr.mxu0 %v80
    %425 = vmatpush1.msra.mxu0 %v79
    %426 = vmatprep.subr.mxu0 %v84
    %427 = vmatpush1.msra.mxu0 %v83
    %428 = vmatprep.subr.mxu0 %v88
    %429 = vmatpush1.msra.mxu0 %v87
    %430 = vmatprep.subr.mxu0 %v92
    %431 = vmatpush1.msra.mxu0 %v91
    %432 = vmatprep.subr.mxu0 %v96
    %433 = vmatpush1.msra.mxu0 %v95
    %434 = vmatprep.subr.mxu0 %v100
    %435 = vmatpush1.msra.mxu0 %v99
    %436 = vmatprep.subr.mxu0 %v104
    %437 = vmatpush1.msra.mxu0 %v103
    %438 = vmatprep.subr.mxu0 %v108
    %439 = vmatpush1.msra.mxu0 %v107
    %440 = vmatprep.subr.mxu0 %v112
    %441 = vmatpush1.msra.mxu0 %v111
    %442 = vmatprep.subr.mxu0 %v116
    %443 = vmatpush1.msra.mxu0 %v115
    %444 = vmatprep.subr.mxu0 %v120
    %445 = vmatpush1.msra.mxu0 %v119
    %446 = vmatprep.subr.mxu0 %v124
    %447 = vmatpush1.msra.mxu0 %v123
    %448 = vmatprep.subr.mxu0 %v128
    %449 = vmatpush1.msra.mxu0 %v127
    %450 = vmatprep.subr.mxu0 %v132
    %451 = vmatpush1.msra.mxu0 %v131
    %452 = vmatprep.subr.mxu0 %v136
    %453 = vmatpush1.msra.mxu0 %v135
    %454 = vmatprep.subr.mxu0 %v140
    %455 = vmatpush1.msra.mxu0 %v139
    %456 = vmatprep.subr.mxu0 0.0
    %457 = vmatpush1.msra.mxu0 0.0
    %458 = vmatprep.subr.mxu0 0.0
    %459 = vmatpush1.msra.mxu0 0.0
    %460 = vmatprep.subr.mxu0 0.0
    %461 = vmatpush1.msra.mxu0 0.0
    %462 = vmatprep.subr.mxu0 0.0
    %463 = vmatpush1.msra.mxu0 0.0
    %464 = vmatprep.subr.mxu0 0.0
    %465 = vmatpush1.msra.mxu0 0.0
    %466 = vmatprep.subr.mxu0 0.0
    %467 = vmatpush1.msra.mxu0 0.0
    %468 = vmatprep.subr.mxu0 0.0
    %469 = vmatpush1.msra.mxu0 0.0
    %470 = vmatprep.subr.mxu0 0.0
    %471 = vmatpush1.msra.mxu0 0.0
    %472 = vmatprep.subr.mxu0 0.0
    %473 = vmatpush1.msra.mxu0 0.0
    %474 = vmatprep.subr.mxu0 0.0
    %475 = vmatpush1.msra.mxu0 0.0
    %476 = vmatprep.subr.mxu0 0.0
    %477 = vmatpush1.msra.mxu0 0.0
    %478 = vmatprep.subr.mxu0 0.0
    %479 = vmatpush1.msra.mxu0 0.0
    %480 = vmatprep.subr.mxu0 0.0
    %481 = vmatpush1.msra.mxu0 0.0
    %482 = vmatprep.subr.mxu0 0.0
    %483 = vmatpush1.msra.mxu0 0.0
    %484 = vmatprep.subr.mxu0 0.0
    %485 = vmatpush1.msra.mxu0 0.0
    %486 = vmatprep.subr.mxu0 0.0
    %487 = vmatpush1.msra.mxu0 0.0
    %488 = vmatprep.mubr.f32.mxu0 0.0
    %489 = vmatmul.mubr.f32.gmra.mrb[0].mxu0 %v411
    %v490 = vpop.f32.mrb[0].mxu0
    %v491 = vadd.f32 %v420, %v490
    %v492 = vpop.f32.mrb[0].mxu0
    %v493 = vadd.f32 %v421, %v492
    %494 = vdwg.mxu0
    %495 = vmatprep.subr.mxu0 %v82
    %496 = vmatpush1.msra.mxu0 %v81
    %497 = vmatprep.subr.mxu0 %v86
    %498 = vmatpush1.msra.mxu0 %v85
    %499 = vmatprep.subr.mxu0 %v90
    %500 = vmatpush1.msra.mxu0 %v89
    %501 = vmatprep.subr.mxu0 %v94
    %502 = vmatpush1.msra.mxu0 %v93
    %503 = vmatprep.subr.mxu0 %v98
    %504 = vmatpush1.msra.mxu0 %v97
    %505 = vmatprep.subr.mxu0 %v102
    %506 = vmatpush1.msra.mxu0 %v101
    %507 = vmatprep.subr.mxu0 %v106
    %508 = vmatpush1.msra.mxu0 %v105
    %509 = vmatprep.subr.mxu0 %v110
    %510 = vmatpush1.msra.mxu0 %v109
    %511 = vmatprep.subr.mxu0 %v114
    %512 = vmatpush1.msra.mxu0 %v113
    %513 = vmatprep.subr.mxu0 %v118
    %514 = vmatpush1.msra.mxu0 %v117
    %515 = vmatprep.subr.mxu0 %v122
    %516 = vmatpush1.msra.mxu0 %v121
    %517 = vmatprep.subr.mxu0 %v126
    %518 = vmatpush1.msra.mxu0 %v125
    %519 = vmatprep.subr.mxu0 %v130
    %520 = vmatpush1.msra.mxu0 %v129
    %521 = vmatprep.subr.mxu0 %v134
    %522 = vmatpush1.msra.mxu0 %v133
    %523 = vmatprep.subr.mxu0 %v138
    %524 = vmatpush1.msra.mxu0 %v137
    %525 = vmatprep.subr.mxu0 %v142
    %526 = vmatpush1.msra.mxu0 %v141
    %527 = vmatprep.subr.mxu0 0.0
    %528 = vmatpush1.msra.mxu0 0.0
    %529 = vmatprep.subr.mxu0 0.0
    %530 = vmatpush1.msra.mxu0 0.0
    %531 = vmatprep.subr.mxu0 0.0
    %532 = vmatpush1.msra.mxu0 0.0
    %533 = vmatprep.subr.mxu0 0.0
    %534 = vmatpush1.msra.mxu0 0.0
    %535 = vmatprep.subr.mxu0 0.0
    %536 = vmatpush1.msra.mxu0 0.0
    %537 = vmatprep.subr.mxu0 0.0
    %538 = vmatpush1.msra.mxu0 0.0
    %539 = vmatprep.subr.mxu0 0.0
    %540 = vmatpush1.msra.mxu0 0.0
    %541 = vmatprep.subr.mxu0 0.0
    %542 = vmatpush1.msra.mxu0 0.0
    %543 = vmatprep.subr.mxu0 0.0
    %544 = vmatpush1.msra.mxu0 0.0
    %545 = vmatprep.subr.mxu0 0.0
    %546 = vmatpush1.msra.mxu0 0.0
    %547 = vmatprep.subr.mxu0 0.0
    %548 = vmatpush1.msra.mxu0 0.0
    %549 = vmatprep.subr.mxu0 0.0
    %550 = vmatpush1.msra.mxu0 0.0
    %551 = vmatprep.subr.mxu0 0.0
    %552 = vmatpush1.msra.mxu0 0.0
    %553 = vmatprep.subr.mxu0 0.0
    %554 = vmatpush1.msra.mxu0 0.0
    %555 = vmatprep.subr.mxu0 0.0
    %556 = vmatpush1.msra.mxu0 0.0
    %557 = vmatprep.subr.mxu0 0.0
    %558 = vmatpush1.msra.mxu0 0.0
    %559 = vmatprep.mubr.f32.mxu0 0.0
    %560 = vmatmul.mubr.f32.gmra.mrb[0].mxu0 %v411
    %v561 = vpop.f32.mrb[0].mxu0
    %v562 = vadd.f32 %v422, %v561
    %v563 = vpop.f32.mrb[0].mxu0
    %v564 = vadd.f32 %v423, %v563
    %565 = vdwg.mxu0
    %v566 = vmul.f32 %v491, 0.5
    %v567 = vmul.f32 %v493, 0.5
    %v568 = vmul.f32 %v562, 0.5
    %v569 = vtanh.pop %v566
    %v570 = vtanh.pop %v567
    %v571 = vtanh.pop %v568
    %v572 = vmul.f32 %v569, 0.5
    %v573 = vmul.f32 %v570, 0.5
    %v574 = vmul.f32 %v571, 0.5
    %v575 = vadd.f32 %v572, 0.5
    %v576 = vadd.f32 %v573, 0.5
    %v577 = vadd.f32 %v574, 0.5
    %v578 = vtanh.pop %v564
    %v579 = vmul.f32 %v576, %v409
    %v580 = vmul.f32 %v575, %v578
    %v581 = vadd.f32 %v579, %v580
    %v582 = vtanh.pop %v581
    %v583 = vmul.f32 %v577, %v582
    %584 = vset.pattern.permute.xlu0 3
    %585 = vperm.xlu0 %584, %v78
    %v586 = vpop.permute.xlu0 %585
    %v588 = vmul.f32 %v586, %v148
    %v589 = vmul.f32 %v586, %v152
    %v590 = vmul.f32 %v586, %v156
    %v591 = vmul.f32 %v586, %v160
    %v592 = vadd.f32 %v588, %v170
    %v593 = vadd.f32 %v589, %v174
    %v594 = vadd.f32 %v590, %v178
    %v595 = vadd.f32 %v591, %v182
    %596 = vmatprep.subr.mxu0 %v80
    %597 = vmatpush1.msra.mxu0 %v79
    %598 = vmatprep.subr.mxu0 %v84
    %599 = vmatpush1.msra.mxu0 %v83
    %600 = vmatprep.subr.mxu0 %v88
    %601 = vmatpush1.msra.mxu0 %v87
    %602 = vmatprep.subr.mxu0 %v92
    %603 = vmatpush1.msra.mxu0 %v91
    %604 = vmatprep.subr.mxu0 %v96
    %605 = vmatpush1.msra.mxu0 %v95
    %606 = vmatprep.subr.mxu0 %v100
    %607 = vmatpush1.msra.mxu0 %v99
    %608 = vmatprep.subr.mxu0 %v104
    %609 = vmatpush1.msra.mxu0 %v103
    %610 = vmatprep.subr.mxu0 %v108
    %611 = vmatpush1.msra.mxu0 %v107
    %612 = vmatprep.subr.mxu0 %v112
    %613 = vmatpush1.msra.mxu0 %v111
    %614 = vmatprep.subr.mxu0 %v116
    %615 = vmatpush1.msra.mxu0 %v115
    %616 = vmatprep.subr.mxu0 %v120
    %617 = vmatpush1.msra.mxu0 %v119
    %618 = vmatprep.subr.mxu0 %v124
    %619 = vmatpush1.msra.mxu0 %v123
    %620 = vmatprep.subr.mxu0 %v128
    %621 = vmatpush1.msra.mxu0 %v127
    %622 = vmatprep.subr.mxu0 %v132
    %623 = vmatpush1.msra.mxu0 %v131
    %624 = vmatprep.subr.mxu0 %v136
    %625 = vmatpush1.msra.mxu0 %v135
    %626 = vmatprep.subr.mxu0 %v140
    %627 = vmatpush1.msra.mxu0 %v139
    %628 = vmatprep.subr.mxu0 0.0
    %629 = vmatpush1.msra.mxu0 0.0
    %630 = vmatprep.subr.mxu0 0.0
    %631 = vmatpush1.msra.mxu0 0.0
    %632 = vmatprep.subr.mxu0 0.0
    %633 = vmatpush1.msra.mxu0 0.0
    %634 = vmatprep.subr.mxu0 0.0
    %635 = vmatpush1.msra.mxu0 0.0
    %636 = vmatprep.subr.mxu0 0.0
    %637 = vmatpush1.msra.mxu0 0.0
    %638 = vmatprep.subr.mxu0 0.0
    %639 = vmatpush1.msra.mxu0 0.0
    %640 = vmatprep.subr.mxu0 0.0
    %641 = vmatpush1.msra.mxu0 0.0
    %642 = vmatprep.subr.mxu0 0.0
    %643 = vmatpush1.msra.mxu0 0.0
    %644 = vmatprep.subr.mxu0 0.0
    %645 = vmatpush1.msra.mxu0 0.0
    %646 = vmatprep.subr.mxu0 0.0
    %647 = vmatpush1.msra.mxu0 0.0
    %648 = vmatprep.subr.mxu0 0.0
    %649 = vmatpush1.msra.mxu0 0.0
    %650 = vmatprep.subr.mxu0 0.0
    %651 = vmatpush1.msra.mxu0 0.0
    %652 = vmatprep.subr.mxu0 0.0
    %653 = vmatpush1.msra.mxu0 0.0
    %654 = vmatprep.subr.mxu0 0.0
    %655 = vmatpush1.msra.mxu0 0.0
    %656 = vmatprep.subr.mxu0 0.0
    %657 = vmatpush1.msra.mxu0 0.0
    %658 = vmatprep.subr.mxu0 0.0
    %659 = vmatpush1.msra.mxu0 0.0
    %660 = vmatprep.mubr.f32.mxu0 0.0
    %661 = vmatmul.mubr.f32.gmra.mrb[0].mxu0 %v583
    %v662 = vpop.f32.mrb[0].mxu0
    %v663 = vadd.f32 %v592, %v662
    %v664 = vpop.f32.mrb[0].mxu0
    %v665 = vadd.f32 %v593, %v664
    %666 = vdwg.mxu0
    %667 = vmatprep.subr.mxu0 %v82
    %668 = vmatpush1.msra.mxu0 %v81
    %669 = vmatprep.subr.mxu0 %v86
    %670 = vmatpush1.msra.mxu0 %v85
    %671 = vmatprep.subr.mxu0 %v90
    %672 = vmatpush1.msra.mxu0 %v89
    %673 = vmatprep.subr.mxu0 %v94
    %674 = vmatpush1.msra.mxu0 %v93
    %675 = vmatprep.subr.mxu0 %v98
    %676 = vmatpush1.msra.mxu0 %v97
    %677 = vmatprep.subr.mxu0 %v102
    %678 = vmatpush1.msra.mxu0 %v101
    %679 = vmatprep.subr.mxu0 %v106
    %680 = vmatpush1.msra.mxu0 %v105
    %681 = vmatprep.subr.mxu0 %v110
    %682 = vmatpush1.msra.mxu0 %v109
    %683 = vmatprep.subr.mxu0 %v114
    %684 = vmatpush1.msra.mxu0 %v113
    %685 = vmatprep.subr.mxu0 %v118
    %686 = vmatpush1.msra.mxu0 %v117
    %687 = vmatprep.subr.mxu0 %v122
    %688 = vmatpush1.msra.mxu0 %v121
    %689 = vmatprep.subr.mxu0 %v126
    %690 = vmatpush1.msra.mxu0 %v125
    %691 = vmatprep.subr.mxu0 %v130
    %692 = vmatpush1.msra.mxu0 %v129
    %693 = vmatprep.subr.mxu0 %v134
    %694 = vmatpush1.msra.mxu0 %v133
    %695 = vmatprep.subr.mxu0 %v138
    %696 = vmatpush1.msra.mxu0 %v137
    %697 = vmatprep.subr.mxu0 %v142
    %698 = vmatpush1.msra.mxu0 %v141
    %699 = vmatprep.subr.mxu0 0.0
    %700 = vmatpush1.msra.mxu0 0.0
    %701 = vmatprep.subr.mxu0 0.0
    %702 = vmatpush1.msra.mxu0 0.0
    %703 = vmatprep.subr.mxu0 0.0
    %704 = vmatpush1.msra.mxu0 0.0
    %705 = vmatprep.subr.mxu0 0.0
    %706 = vmatpush1.msra.mxu0 0.0
    %707 = vmatprep.subr.mxu0 0.0
    %708 = vmatpush1.msra.mxu0 0.0
    %709 = vmatprep.subr.mxu0 0.0
    %710 = vmatpush1.msra.mxu0 0.0
    %711 = vmatprep.subr.mxu0 0.0
    %712 = vmatpush1.msra.mxu0 0.0
    %713 = vmatprep.subr.mxu0 0.0
    %714 = vmatpush1.msra.mxu0 0.0
    %715 = vmatprep.subr.mxu0 0.0
    %716 = vmatpush1.msra.mxu0 0.0
    %717 = vmatprep.subr.mxu0 0.0
    %718 = vmatpush1.msra.mxu0 0.0
    %719 = vmatprep.subr.mxu0 0.0
    %720 = vmatpush1.msra.mxu0 0.0
    %721 = vmatprep.subr.mxu0 0.0
    %722 = vmatpush1.msra.mxu0 0.0
    %723 = vmatprep.subr.mxu0 0.0
    %724 = vmatpush1.msra.mxu0 0.0
    %725 = vmatprep.subr.mxu0 0.0
    %726 = vmatpush1.msra.mxu0 0.0
    %727 = vmatprep.subr.mxu0 0.0
    %728 = vmatpush1.msra.mxu0 0.0
    %729 = vmatprep.subr.mxu0 0.0
    %730 = vmatpush1.msra.mxu0 0.0
    %731 = vmatprep.mubr.f32.mxu0 0.0
    %732 = vmatmul.mubr.f32.gmra.mrb[0].mxu0 %v583
    %v733 = vpop.f32.mrb[0].mxu0
    %v734 = vadd.f32 %v594, %v733
    %v735 = vpop.f32.mrb[0].mxu0
    %v736 = vadd.f32 %v595, %v735
    %737 = vdwg.mxu0
    %v738 = vmul.f32 %v663, 0.5
    %v739 = vmul.f32 %v665, 0.5
    %v740 = vmul.f32 %v734, 0.5
    %v741 = vtanh.pop %v738
    %v742 = vtanh.pop %v739
    %v743 = vtanh.pop %v740
    %v744 = vmul.f32 %v741, 0.5
    %v745 = vmul.f32 %v742, 0.5
    %v746 = vmul.f32 %v743, 0.5
    %v747 = vadd.f32 %v744, 0.5
    %v748 = vadd.f32 %v745, 0.5
    %v749 = vadd.f32 %v746, 0.5
    %v750 = vtanh.pop %v736
    %v751 = vmul.f32 %v748, %v581
    %v752 = vmul.f32 %v747, %v750
    %v753 = vadd.f32 %v751, %v752
    %v754 = vtanh.pop %v753
    %v755 = vmul.f32 %v749, %v754
    %756 = vset.pattern.permute.xlu0 4
    %757 = vperm.xlu0 %756, %v78
    %v758 = vpop.permute.xlu0 %757
    %v760 = vmul.f32 %v758, %v148
    %v761 = vmul.f32 %v758, %v152
    %v762 = vmul.f32 %v758, %v156
    %v763 = vmul.f32 %v758, %v160
    %v764 = vadd.f32 %v760, %v170
    %v765 = vadd.f32 %v761, %v174
    %v766 = vadd.f32 %v762, %v178
    %v767 = vadd.f32 %v763, %v182
    %768 = vmatprep.subr.mxu0 %v80
    %769 = vmatpush1.msra.mxu0 %v79
    %770 = vmatprep.subr.mxu0 %v84
    %771 = vmatpush1.msra.mxu0 %v83
    %772 = vmatprep.subr.mxu0 %v88
    %773 = vmatpush1.msra.mxu0 %v87
    %774 = vmatprep.subr.mxu0 %v92
    %775 = vmatpush1.msra.mxu0 %v91
    %776 = vmatprep.subr.mxu0 %v96
    %777 = vmatpush1.msra.mxu0 %v95
    %778 = vmatprep.subr.mxu0 %v100
    %779 = vmatpush1.msra.mxu0 %v99
    %780 = vmatprep.subr.mxu0 %v104
    %781 = vmatpush1.msra.mxu0 %v103
    %782 = vmatprep.subr.mxu0 %v108
    %783 = vmatpush1.msra.mxu0 %v107
    %784 = vmatprep.subr.mxu0 %v112
    %785 = vmatpush1.msra.mxu0 %v111
    %786 = vmatprep.subr.mxu0 %v116
    %787 = vmatpush1.msra.mxu0 %v115
    %788 = vmatprep.subr.mxu0 %v120
    %789 = vmatpush1.msra.mxu0 %v119
    %790 = vmatprep.subr.mxu0 %v124
    %791 = vmatpush1.msra.mxu0 %v123
    %792 = vmatprep.subr.mxu0 %v128
    %793 = vmatpush1.msra.mxu0 %v127
    %794 = vmatprep.subr.mxu0 %v132
    %795 = vmatpush1.msra.mxu0 %v131
    %796 = vmatprep.subr.mxu0 %v136
    %797 = vmatpush1.msra.mxu0 %v135
    %798 = vmatprep.subr.mxu0 %v140
    %799 = vmatpush1.msra.mxu0 %v139
    %800 = vmatprep.subr.mxu0 0.0
    %801 = vmatpush1.msra.mxu0 0.0
    %802 = vmatprep.subr.mxu0 0.0
    %803 = vmatpush1.msra.mxu0 0.0
    %804 = vmatprep.subr.mxu0 0.0
    %805 = vmatpush1.msra.mxu0 0.0
    %806 = vmatprep.subr.mxu0 0.0
    %807 = vmatpush1.msra.mxu0 0.0
    %808 = vmatprep.subr.mxu0 0.0
    %809 = vmatpush1.msra.mxu0 0.0
    %810 = vmatprep.subr.mxu0 0.0
    %811 = vmatpush1.msra.mxu0 0.0
    %812 = vmatprep.subr.mxu0 0.0
    %813 = vmatpush1.msra.mxu0 0.0
    %814 = vmatprep.subr.mxu0 0.0
    %815 = vmatpush1.msra.mxu0 0.0
    %816 = vmatprep.subr.mxu0 0.0
    %817 = vmatpush1.msra.mxu0 0.0
    %818 = vmatprep.subr.mxu0 0.0
    %819 = vmatpush1.msra.mxu0 0.0
    %820 = vmatprep.subr.mxu0 0.0
    %821 = vmatpush1.msra.mxu0 0.0
    %822 = vmatprep.subr.mxu0 0.0
    %823 = vmatpush1.msra.mxu0 0.0
    %824 = vmatprep.subr.mxu0 0.0
    %825 = vmatpush1.msra.mxu0 0.0
    %826 = vmatprep.subr.mxu0 0.0
    %827 = vmatpush1.msra.mxu0 0.0
    %828 = vmatprep.subr.mxu0 0.0
    %829 = vmatpush1.msra.mxu0 0.0
    %830 = vmatprep.subr.mxu0 0.0
    %831 = vmatpush1.msra.mxu0 0.0
    %832 = vmatprep.mubr.f32.mxu0 0.0
    %833 = vmatmul.mubr.f32.gmra.mrb[0].mxu0 %v755
    %v834 = vpop.f32.mrb[0].mxu0
    %v835 = vadd.f32 %v764, %v834
    %v836 = vpop.f32.mrb[0].mxu0
    %v837 = vadd.f32 %v765, %v836
    %838 = vdwg.mxu0
    %839 = vmatprep.subr.mxu0 %v82
    %840 = vmatpush1.msra.mxu0 %v81
    %841 = vmatprep.subr.mxu0 %v86
    %842 = vmatpush1.msra.mxu0 %v85
    %843 = vmatprep.subr.mxu0 %v90
    %844 = vmatpush1.msra.mxu0 %v89
    %845 = vmatprep.subr.mxu0 %v94
    %846 = vmatpush1.msra.mxu0 %v93
    %847 = vmatprep.subr.mxu0 %v98
    %848 = vmatpush1.msra.mxu0 %v97
    %849 = vmatprep.subr.mxu0 %v102
    %850 = vmatpush1.msra.mxu0 %v101
    %851 = vmatprep.subr.mxu0 %v106
    %852 = vmatpush1.msra.mxu0 %v105
    %853 = vmatprep.subr.mxu0 %v110
    %854 = vmatpush1.msra.mxu0 %v109
    %855 = vmatprep.subr.mxu0 %v114
    %856 = vmatpush1.msra.mxu0 %v113
    %857 = vmatprep.subr.mxu0 %v118
    %858 = vmatpush1.msra.mxu0 %v117
    %859 = vmatprep.subr.mxu0 %v122
    %860 = vmatpush1.msra.mxu0 %v121
    %861 = vmatprep.subr.mxu0 %v126
    %862 = vmatpush1.msra.mxu0 %v125
    %863 = vmatprep.subr.mxu0 %v130
    %864 = vmatpush1.msra.mxu0 %v129
    %865 = vmatprep.subr.mxu0 %v134
    %866 = vmatpush1.msra.mxu0 %v133
    %867 = vmatprep.subr.mxu0 %v138
    %868 = vmatpush1.msra.mxu0 %v137
    %869 = vmatprep.subr.mxu0 %v142
    %870 = vmatpush1.msra.mxu0 %v141
    %871 = vmatprep.subr.mxu0 0.0
    %872 = vmatpush1.msra.mxu0 0.0
    %873 = vmatprep.subr.mxu0 0.0
    %874 = vmatpush1.msra.mxu0 0.0
    %875 = vmatprep.subr.mxu0 0.0
    %876 = vmatpush1.msra.mxu0 0.0
    %877 = vmatprep.subr.mxu0 0.0
    %878 = vmatpush1.msra.mxu0 0.0
    %879 = vmatprep.subr.mxu0 0.0
    %880 = vmatpush1.msra.mxu0 0.0
    %881 = vmatprep.subr.mxu0 0.0
    %882 = vmatpush1.msra.mxu0 0.0
    %883 = vmatprep.subr.mxu0 0.0
    %884 = vmatpush1.msra.mxu0 0.0
    %885 = vmatprep.subr.mxu0 0.0
    %886 = vmatpush1.msra.mxu0 0.0
    %887 = vmatprep.subr.mxu0 0.0
    %888 = vmatpush1.msra.mxu0 0.0
    %889 = vmatprep.subr.mxu0 0.0
    %890 = vmatpush1.msra.mxu0 0.0
    %891 = vmatprep.subr.mxu0 0.0
    %892 = vmatpush1.msra.mxu0 0.0
    %893 = vmatprep.subr.mxu0 0.0
    %894 = vmatpush1.msra.mxu0 0.0
    %895 = vmatprep.subr.mxu0 0.0
    %896 = vmatpush1.msra.mxu0 0.0
    %897 = vmatprep.subr.mxu0 0.0
    %898 = vmatpush1.msra.mxu0 0.0
    %899 = vmatprep.subr.mxu0 0.0
    %900 = vmatpush1.msra.mxu0 0.0
    %901 = vmatprep.subr.mxu0 0.0
    %902 = vmatpush1.msra.mxu0 0.0
    %903 = vmatprep.mubr.f32.mxu0 0.0
    %904 = vmatmul.mubr.f32.gmra.mrb[0].mxu0 %v755
    %v905 = vpop.f32.mrb[0].mxu0
    %v906 = vadd.f32 %v766, %v905
    %v907 = vpop.f32.mrb[0].mxu0
    %v908 = vadd.f32 %v767, %v907
    %909 = vdwg.mxu0
    %v910 = vmul.f32 %v835, 0.5
    %v911 = vmul.f32 %v837, 0.5
    %v912 = vmul.f32 %v906, 0.5
    %v913 = vtanh.pop %v910
    %v914 = vtanh.pop %v911
    %v915 = vtanh.pop %v912
    %v916 = vmul.f32 %v913, 0.5
    %v917 = vmul.f32 %v914, 0.5
    %v918 = vmul.f32 %v915, 0.5
    %v919 = vadd.f32 %v916, 0.5
    %v920 = vadd.f32 %v917, 0.5
    %v921 = vadd.f32 %v918, 0.5
    %v922 = vtanh.pop %v908
    %v923 = vmul.f32 %v920, %v753
    %v924 = vmul.f32 %v919, %v922
    %v925 = vadd.f32 %v923, %v924
    %v926 = vtanh.pop %v925
    %v927 = vmul.f32 %v921, %v926
    %928 = vset.pattern.permute.xlu0 5
    %929 = vperm.xlu0 %928, %v78
    %v930 = vpop.permute.xlu0 %929
    %v932 = vmul.f32 %v930, %v148
    %v933 = vmul.f32 %v930, %v152
    %v934 = vmul.f32 %v930, %v156
    %v935 = vmul.f32 %v930, %v160
    %v936 = vadd.f32 %v932, %v170
    %v937 = vadd.f32 %v933, %v174
    %v938 = vadd.f32 %v934, %v178
    %v939 = vadd.f32 %v935, %v182
    %940 = vmatprep.subr.mxu0 %v80
    %941 = vmatpush1.msra.mxu0 %v79
    %942 = vmatprep.subr.mxu0 %v84
    %943 = vmatpush1.msra.mxu0 %v83
    %944 = vmatprep.subr.mxu0 %v88
    %945 = vmatpush1.msra.mxu0 %v87
    %946 = vmatprep.subr.mxu0 %v92
    %947 = vmatpush1.msra.mxu0 %v91
    %948 = vmatprep.subr.mxu0 %v96
    %949 = vmatpush1.msra.mxu0 %v95
    %950 = vmatprep.subr.mxu0 %v100
    %951 = vmatpush1.msra.mxu0 %v99
    %952 = vmatprep.subr.mxu0 %v104
    %953 = vmatpush1.msra.mxu0 %v103
    %954 = vmatprep.subr.mxu0 %v108
    %955 = vmatpush1.msra.mxu0 %v107
    %956 = vmatprep.subr.mxu0 %v112
    %957 = vmatpush1.msra.mxu0 %v111
    %958 = vmatprep.subr.mxu0 %v116
    %959 = vmatpush1.msra.mxu0 %v115
    %960 = vmatprep.subr.mxu0 %v120
    %961 = vmatpush1.msra.mxu0 %v119
    %962 = vmatprep.subr.mxu0 %v124
    %963 = vmatpush1.msra.mxu0 %v123
    %964 = vmatprep.subr.mxu0 %v128
    %965 = vmatpush1.msra.mxu0 %v127
    %966 = vmatprep.subr.mxu0 %v132
    %967 = vmatpush1.msra.mxu0 %v131
    %968 = vmatprep.subr.mxu0 %v136
    %969 = vmatpush1.msra.mxu0 %v135
    %970 = vmatprep.subr.mxu0 %v140
    %971 = vmatpush1.msra.mxu0 %v139
    %972 = vmatprep.subr.mxu0 0.0
    %973 = vmatpush1.msra.mxu0 0.0
    %974 = vmatprep.subr.mxu0 0.0
    %975 = vmatpush1.msra.mxu0 0.0
    %976 = vmatprep.subr.mxu0 0.0
    %977 = vmatpush1.msra.mxu0 0.0
    %978 = vmatprep.subr.mxu0 0.0
    %979 = vmatpush1.msra.mxu0 0.0
    %980 = vmatprep.subr.mxu0 0.0
    %981 = vmatpush1.msra.mxu0 0.0
    %982 = vmatprep.subr.mxu0 0.0
    %983 = vmatpush1.msra.mxu0 0.0
    %984 = vmatprep.subr.mxu0 0.0
    %985 = vmatpush1.msra.mxu0 0.0
    %986 = vmatprep.subr.mxu0 0.0
    %987 = vmatpush1.msra.mxu0 0.0
    %988 = vmatprep.subr.mxu0 0.0
    %989 = vmatpush1.msra.mxu0 0.0
    %990 = vmatprep.subr.mxu0 0.0
    %991 = vmatpush1.msra.mxu0 0.0
    %992 = vmatprep.subr.mxu0 0.0
    %993 = vmatpush1.msra.mxu0 0.0
    %994 = vmatprep.subr.mxu0 0.0
    %995 = vmatpush1.msra.mxu0 0.0
    %996 = vmatprep.subr.mxu0 0.0
    %997 = vmatpush1.msra.mxu0 0.0
    %998 = vmatprep.subr.mxu0 0.0
    %999 = vmatpush1.msra.mxu0 0.0
    %1000 = vmatprep.subr.mxu0 0.0
    %1001 = vmatpush1.msra.mxu0 0.0
    %1002 = vmatprep.subr.mxu0 0.0
    %1003 = vmatpush1.msra.mxu0 0.0
    %1004 = vmatprep.mubr.f32.mxu0 0.0
    %1005 = vmatmul.mubr.f32.gmra.mrb[0].mxu0 %v927
    %v1006 = vpop.f32.mrb[0].mxu0
    %v1007 = vadd.f32 %v936, %v1006
    %v1008 = vpop.f32.mrb[0].mxu0
    %v1009 = vadd.f32 %v937, %v1008
    %1010 = vdwg.mxu0
    %1011 = vmatprep.subr.mxu0 %v82
    %1012 = vmatpush1.msra.mxu0 %v81
    %1013 = vmatprep.subr.mxu0 %v86
    %1014 = vmatpush1.msra.mxu0 %v85
    %1015 = vmatprep.subr.mxu0 %v90
    %1016 = vmatpush1.msra.mxu0 %v89
    %1017 = vmatprep.subr.mxu0 %v94
    %1018 = vmatpush1.msra.mxu0 %v93
    %1019 = vmatprep.subr.mxu0 %v98
    %1020 = vmatpush1.msra.mxu0 %v97
    %1021 = vmatprep.subr.mxu0 %v102
    %1022 = vmatpush1.msra.mxu0 %v101
    %1023 = vmatprep.subr.mxu0 %v106
    %1024 = vmatpush1.msra.mxu0 %v105
    %1025 = vmatprep.subr.mxu0 %v110
    %1026 = vmatpush1.msra.mxu0 %v109
    %1027 = vmatprep.subr.mxu0 %v114
    %1028 = vmatpush1.msra.mxu0 %v113
    %1029 = vmatprep.subr.mxu0 %v118
    %1030 = vmatpush1.msra.mxu0 %v117
    %1031 = vmatprep.subr.mxu0 %v122
    %1032 = vmatpush1.msra.mxu0 %v121
    %1033 = vmatprep.subr.mxu0 %v126
    %1034 = vmatpush1.msra.mxu0 %v125
    %1035 = vmatprep.subr.mxu0 %v130
    %1036 = vmatpush1.msra.mxu0 %v129
    %1037 = vmatprep.subr.mxu0 %v134
    %1038 = vmatpush1.msra.mxu0 %v133
    %1039 = vmatprep.subr.mxu0 %v138
    %1040 = vmatpush1.msra.mxu0 %v137
    %1041 = vmatprep.subr.mxu0 %v142
    %1042 = vmatpush1.msra.mxu0 %v141
    %1043 = vmatprep.subr.mxu0 0.0
    %1044 = vmatpush1.msra.mxu0 0.0
    %1045 = vmatprep.subr.mxu0 0.0
    %1046 = vmatpush1.msra.mxu0 0.0
    %1047 = vmatprep.subr.mxu0 0.0
    %1048 = vmatpush1.msra.mxu0 0.0
    %1049 = vmatprep.subr.mxu0 0.0
    %1050 = vmatpush1.msra.mxu0 0.0
    %1051 = vmatprep.subr.mxu0 0.0
    %1052 = vmatpush1.msra.mxu0 0.0
    %1053 = vmatprep.subr.mxu0 0.0
    %1054 = vmatpush1.msra.mxu0 0.0
    %1055 = vmatprep.subr.mxu0 0.0
    %1056 = vmatpush1.msra.mxu0 0.0
    %1057 = vmatprep.subr.mxu0 0.0
    %1058 = vmatpush1.msra.mxu0 0.0
    %1059 = vmatprep.subr.mxu0 0.0
    %1060 = vmatpush1.msra.mxu0 0.0
    %1061 = vmatprep.subr.mxu0 0.0
    %1062 = vmatpush1.msra.mxu0 0.0
    %1063 = vmatprep.subr.mxu0 0.0
    %1064 = vmatpush1.msra.mxu0 0.0
    %1065 = vmatprep.subr.mxu0 0.0
    %1066 = vmatpush1.msra.mxu0 0.0
    %1067 = vmatprep.subr.mxu0 0.0
    %1068 = vmatpush1.msra.mxu0 0.0
    %1069 = vmatprep.subr.mxu0 0.0
    %1070 = vmatpush1.msra.mxu0 0.0
    %1071 = vmatprep.subr.mxu0 0.0
    %1072 = vmatpush1.msra.mxu0 0.0
    %1073 = vmatprep.subr.mxu0 0.0
    %1074 = vmatpush1.msra.mxu0 0.0
    %1075 = vmatprep.mubr.f32.mxu0 0.0
    %1076 = vmatmul.mubr.f32.gmra.mrb[0].mxu0 %v927
    %v1077 = vpop.f32.mrb[0].mxu0
    %v1078 = vadd.f32 %v938, %v1077
    %v1079 = vpop.f32.mrb[0].mxu0
    %v1080 = vadd.f32 %v939, %v1079
    %1081 = vdwg.mxu0
    %v1082 = vmul.f32 %v1007, 0.5
    %v1083 = vmul.f32 %v1009, 0.5
    %v1084 = vmul.f32 %v1078, 0.5
    %v1085 = vtanh.pop %v1082
    %v1086 = vtanh.pop %v1083
    %v1087 = vtanh.pop %v1084
    %v1088 = vmul.f32 %v1085, 0.5
    %v1089 = vmul.f32 %v1086, 0.5
    %v1090 = vmul.f32 %v1087, 0.5
    %v1091 = vadd.f32 %v1088, 0.5
    %v1092 = vadd.f32 %v1089, 0.5
    %v1093 = vadd.f32 %v1090, 0.5
    %v1094 = vtanh.pop %v1080
    %v1095 = vmul.f32 %v1092, %v925
    %v1096 = vmul.f32 %v1091, %v1094
    %v1097 = vadd.f32 %v1095, %v1096
    %v1098 = vtanh.pop %v1097
    %v1099 = vmul.f32 %v1093, %v1098
    %1100 = vset.pattern.permute.xlu0 6
    %1101 = vperm.xlu0 %1100, %v78
    %v1102 = vpop.permute.xlu0 %1101
    %v1104 = vmul.f32 %v1102, %v148
    %v1105 = vmul.f32 %v1102, %v152
    %v1106 = vmul.f32 %v1102, %v156
    %v1107 = vmul.f32 %v1102, %v160
    %v1108 = vadd.f32 %v1104, %v170
    %v1109 = vadd.f32 %v1105, %v174
    %v1110 = vadd.f32 %v1106, %v178
    %v1111 = vadd.f32 %v1107, %v182
    %1112 = vmatprep.subr.mxu0 %v80
    %1113 = vmatpush1.msra.mxu0 %v79
    %1114 = vmatprep.subr.mxu0 %v84
    %1115 = vmatpush1.msra.mxu0 %v83
    %1116 = vmatprep.subr.mxu0 %v88
    %1117 = vmatpush1.msra.mxu0 %v87
    %1118 = vmatprep.subr.mxu0 %v92
    %1119 = vmatpush1.msra.mxu0 %v91
    %1120 = vmatprep.subr.mxu0 %v96
    %1121 = vmatpush1.msra.mxu0 %v95
    %1122 = vmatprep.subr.mxu0 %v100
    %1123 = vmatpush1.msra.mxu0 %v99
    %1124 = vmatprep.subr.mxu0 %v104
    %1125 = vmatpush1.msra.mxu0 %v103
    %1126 = vmatprep.subr.mxu0 %v108
    %1127 = vmatpush1.msra.mxu0 %v107
    %1128 = vmatprep.subr.mxu0 %v112
    %1129 = vmatpush1.msra.mxu0 %v111
    %1130 = vmatprep.subr.mxu0 %v116
    %1131 = vmatpush1.msra.mxu0 %v115
    %1132 = vmatprep.subr.mxu0 %v120
    %1133 = vmatpush1.msra.mxu0 %v119
    %1134 = vmatprep.subr.mxu0 %v124
    %1135 = vmatpush1.msra.mxu0 %v123
    %1136 = vmatprep.subr.mxu0 %v128
    %1137 = vmatpush1.msra.mxu0 %v127
    %1138 = vmatprep.subr.mxu0 %v132
    %1139 = vmatpush1.msra.mxu0 %v131
    %1140 = vmatprep.subr.mxu0 %v136
    %1141 = vmatpush1.msra.mxu0 %v135
    %1142 = vmatprep.subr.mxu0 %v140
    %1143 = vmatpush1.msra.mxu0 %v139
    %1144 = vmatprep.subr.mxu0 0.0
    %1145 = vmatpush1.msra.mxu0 0.0
    %1146 = vmatprep.subr.mxu0 0.0
    %1147 = vmatpush1.msra.mxu0 0.0
    %1148 = vmatprep.subr.mxu0 0.0
    %1149 = vmatpush1.msra.mxu0 0.0
    %1150 = vmatprep.subr.mxu0 0.0
    %1151 = vmatpush1.msra.mxu0 0.0
    %1152 = vmatprep.subr.mxu0 0.0
    %1153 = vmatpush1.msra.mxu0 0.0
    %1154 = vmatprep.subr.mxu0 0.0
    %1155 = vmatpush1.msra.mxu0 0.0
    %1156 = vmatprep.subr.mxu0 0.0
    %1157 = vmatpush1.msra.mxu0 0.0
    %1158 = vmatprep.subr.mxu0 0.0
    %1159 = vmatpush1.msra.mxu0 0.0
    %1160 = vmatprep.subr.mxu0 0.0
    %1161 = vmatpush1.msra.mxu0 0.0
    %1162 = vmatprep.subr.mxu0 0.0
    %1163 = vmatpush1.msra.mxu0 0.0
    %1164 = vmatprep.subr.mxu0 0.0
    %1165 = vmatpush1.msra.mxu0 0.0
    %1166 = vmatprep.subr.mxu0 0.0
    %1167 = vmatpush1.msra.mxu0 0.0
    %1168 = vmatprep.subr.mxu0 0.0
    %1169 = vmatpush1.msra.mxu0 0.0
    %1170 = vmatprep.subr.mxu0 0.0
    %1171 = vmatpush1.msra.mxu0 0.0
    %1172 = vmatprep.subr.mxu0 0.0
    %1173 = vmatpush1.msra.mxu0 0.0
    %1174 = vmatprep.subr.mxu0 0.0
    %1175 = vmatpush1.msra.mxu0 0.0
    %1176 = vmatprep.mubr.f32.mxu0 0.0
    %1177 = vmatmul.mubr.f32.gmra.mrb[0].mxu0 %v1099
    %v1178 = vpop.f32.mrb[0].mxu0
    %v1179 = vadd.f32 %v1108, %v1178
    %v1180 = vpop.f32.mrb[0].mxu0
    %v1181 = vadd.f32 %v1109, %v1180
    %1182 = vdwg.mxu0
    %1183 = vmatprep.subr.mxu0 %v82
    %1184 = vmatpush1.msra.mxu0 %v81
    %1185 = vmatprep.subr.mxu0 %v86
    %1186 = vmatpush1.msra.mxu0 %v85
    %1187 = vmatprep.subr.mxu0 %v90
    %1188 = vmatpush1.msra.mxu0 %v89
    %1189 = vmatprep.subr.mxu0 %v94
    %1190 = vmatpush1.msra.mxu0 %v93
    %1191 = vmatprep.subr.mxu0 %v98
    %1192 = vmatpush1.msra.mxu0 %v97
    %1193 = vmatprep.subr.mxu0 %v102
    %1194 = vmatpush1.msra.mxu0 %v101
    %1195 = vmatprep.subr.mxu0 %v106
    %1196 = vmatpush1.msra.mxu0 %v105
    %1197 = vmatprep.subr.mxu0 %v110
    %1198 = vmatpush1.msra.mxu0 %v109
    %1199 = vmatprep.subr.mxu0 %v114
    %1200 = vmatpush1.msra.mxu0 %v113
    %1201 = vmatprep.subr.mxu0 %v118
    %1202 = vmatpush1.msra.mxu0 %v117
    %1203 = vmatprep.subr.mxu0 %v122
    %1204 = vmatpush1.msra.mxu0 %v121
    %1205 = vmatprep.subr.mxu0 %v126
    %1206 = vmatpush1.msra.mxu0 %v125
    %1207 = vmatprep.subr.mxu0 %v130
    %1208 = vmatpush1.msra.mxu0 %v129
    %1209 = vmatprep.subr.mxu0 %v134
    %1210 = vmatpush1.msra.mxu0 %v133
    %1211 = vmatprep.subr.mxu0 %v138
    %1212 = vmatpush1.msra.mxu0 %v137
    %1213 = vmatprep.subr.mxu0 %v142
    %1214 = vmatpush1.msra.mxu0 %v141
    %1215 = vmatprep.subr.mxu0 0.0
    %1216 = vmatpush1.msra.mxu0 0.0
    %1217 = vmatprep.subr.mxu0 0.0
    %1218 = vmatpush1.msra.mxu0 0.0
    %1219 = vmatprep.subr.mxu0 0.0
    %1220 = vmatpush1.msra.mxu0 0.0
    %1221 = vmatprep.subr.mxu0 0.0
    %1222 = vmatpush1.msra.mxu0 0.0
    %1223 = vmatprep.subr.mxu0 0.0
    %1224 = vmatpush1.msra.mxu0 0.0
    %1225 = vmatprep.subr.mxu0 0.0
    %1226 = vmatpush1.msra.mxu0 0.0
    %1227 = vmatprep.subr.mxu0 0.0
    %1228 = vmatpush1.msra.mxu0 0.0
    %1229 = vmatprep.subr.mxu0 0.0
    %1230 = vmatpush1.msra.mxu0 0.0
    %1231 = vmatprep.subr.mxu0 0.0
    %1232 = vmatpush1.msra.mxu0 0.0
    %1233 = vmatprep.subr.mxu0 0.0
    %1234 = vmatpush1.msra.mxu0 0.0
    %1235 = vmatprep.subr.mxu0 0.0
    %1236 = vmatpush1.msra.mxu0 0.0
    %1237 = vmatprep.subr.mxu0 0.0
    %1238 = vmatpush1.msra.mxu0 0.0
    %1239 = vmatprep.subr.mxu0 0.0
    %1240 = vmatpush1.msra.mxu0 0.0
    %1241 = vmatprep.subr.mxu0 0.0
    %1242 = vmatpush1.msra.mxu0 0.0
    %1243 = vmatprep.subr.mxu0 0.0
    %1244 = vmatpush1.msra.mxu0 0.0
    %1245 = vmatprep.subr.mxu0 0.0
    %1246 = vmatpush1.msra.mxu0 0.0
    %1247 = vmatprep.mubr.f32.mxu0 0.0
    %1248 = vmatmul.mubr.f32.gmra.mrb[0].mxu0 %v1099
    %v1249 = vpop.f32.mrb[0].mxu0
    %v1250 = vadd.f32 %v1110, %v1249
    %v1251 = vpop.f32.mrb[0].mxu0
    %v1252 = vadd.f32 %v1111, %v1251
    %1253 = vdwg.mxu0
    %v1254 = vmul.f32 %v1179, 0.5
    %v1255 = vmul.f32 %v1181, 0.5
    %v1256 = vmul.f32 %v1250, 0.5
    %v1257 = vtanh.pop %v1254
    %v1258 = vtanh.pop %v1255
    %v1259 = vtanh.pop %v1256
    %v1260 = vmul.f32 %v1257, 0.5
    %v1261 = vmul.f32 %v1258, 0.5
    %v1262 = vmul.f32 %v1259, 0.5
    %v1263 = vadd.f32 %v1260, 0.5
    %v1264 = vadd.f32 %v1261, 0.5
    %v1265 = vadd.f32 %v1262, 0.5
    %v1266 = vtanh.pop %v1252
    %v1267 = vmul.f32 %v1264, %v1097
    %v1268 = vmul.f32 %v1263, %v1266
    %v1269 = vadd.f32 %v1267, %v1268
    %v1270 = vtanh.pop %v1269
    %v1271 = vmul.f32 %v1265, %v1270
    %1272 = vset.pattern.permute.xlu0 7
    %1273 = vperm.xlu0 %1272, %v78
    %v1274 = vpop.permute.xlu0 %1273
    %v1276 = vmul.f32 %v1274, %v148
    %v1277 = vmul.f32 %v1274, %v152
    %v1278 = vmul.f32 %v1274, %v156
    %v1279 = vmul.f32 %v1274, %v160
    %v1280 = vadd.f32 %v1276, %v170
    %v1281 = vadd.f32 %v1277, %v174
    %v1282 = vadd.f32 %v1278, %v178
    %v1283 = vadd.f32 %v1279, %v182
    %1284 = vmatprep.subr.mxu0 %v80
    %1285 = vmatpush1.msra.mxu0 %v79
    %1286 = vmatprep.subr.mxu0 %v84
    %1287 = vmatpush1.msra.mxu0 %v83
    %1288 = vmatprep.subr.mxu0 %v88
    %1289 = vmatpush1.msra.mxu0 %v87
    %1290 = vmatprep.subr.mxu0 %v92
    %1291 = vmatpush1.msra.mxu0 %v91
    %1292 = vmatprep.subr.mxu0 %v96
    %1293 = vmatpush1.msra.mxu0 %v95
    %1294 = vmatprep.subr.mxu0 %v100
    %1295 = vmatpush1.msra.mxu0 %v99
    %1296 = vmatprep.subr.mxu0 %v104
    %1297 = vmatpush1.msra.mxu0 %v103
    %1298 = vmatprep.subr.mxu0 %v108
    %1299 = vmatpush1.msra.mxu0 %v107
    %1300 = vmatprep.subr.mxu0 %v112
    %1301 = vmatpush1.msra.mxu0 %v111
    %1302 = vmatprep.subr.mxu0 %v116
    %1303 = vmatpush1.msra.mxu0 %v115
    %1304 = vmatprep.subr.mxu0 %v120
    %1305 = vmatpush1.msra.mxu0 %v119
    %1306 = vmatprep.subr.mxu0 %v124
    %1307 = vmatpush1.msra.mxu0 %v123
    %1308 = vmatprep.subr.mxu0 %v128
    %1309 = vmatpush1.msra.mxu0 %v127
    %1310 = vmatprep.subr.mxu0 %v132
    %1311 = vmatpush1.msra.mxu0 %v131
    %1312 = vmatprep.subr.mxu0 %v136
    %1313 = vmatpush1.msra.mxu0 %v135
    %1314 = vmatprep.subr.mxu0 %v140
    %1315 = vmatpush1.msra.mxu0 %v139
    %1316 = vmatprep.subr.mxu0 0.0
    %1317 = vmatpush1.msra.mxu0 0.0
    %1318 = vmatprep.subr.mxu0 0.0
    %1319 = vmatpush1.msra.mxu0 0.0
    %1320 = vmatprep.subr.mxu0 0.0
    %1321 = vmatpush1.msra.mxu0 0.0
    %1322 = vmatprep.subr.mxu0 0.0
    %1323 = vmatpush1.msra.mxu0 0.0
    %1324 = vmatprep.subr.mxu0 0.0
    %1325 = vmatpush1.msra.mxu0 0.0
    %1326 = vmatprep.subr.mxu0 0.0
    %1327 = vmatpush1.msra.mxu0 0.0
    %1328 = vmatprep.subr.mxu0 0.0
    %1329 = vmatpush1.msra.mxu0 0.0
    %1330 = vmatprep.subr.mxu0 0.0
    %1331 = vmatpush1.msra.mxu0 0.0
    %1332 = vmatprep.subr.mxu0 0.0
    %1333 = vmatpush1.msra.mxu0 0.0
    %1334 = vmatprep.subr.mxu0 0.0
    %1335 = vmatpush1.msra.mxu0 0.0
    %1336 = vmatprep.subr.mxu0 0.0
    %1337 = vmatpush1.msra.mxu0 0.0
    %1338 = vmatprep.subr.mxu0 0.0
    %1339 = vmatpush1.msra.mxu0 0.0
    %1340 = vmatprep.subr.mxu0 0.0
    %1341 = vmatpush1.msra.mxu0 0.0
    %1342 = vmatprep.subr.mxu0 0.0
    %1343 = vmatpush1.msra.mxu0 0.0
    %1344 = vmatprep.subr.mxu0 0.0
    %1345 = vmatpush1.msra.mxu0 0.0
    %1346 = vmatprep.subr.mxu0 0.0
    %1347 = vmatpush1.msra.mxu0 0.0
    %1348 = vmatprep.mubr.f32.mxu0 0.0
    %1349 = vmatmul.mubr.f32.gmra.mrb[0].mxu0 %v1271
    %v1350 = vpop.f32.mrb[0].mxu0
    %v1351 = vadd.f32 %v1280, %v1350
    %v1352 = vpop.f32.mrb[0].mxu0
    %v1353 = vadd.f32 %v1281, %v1352
    %1354 = vdwg.mxu0
    %1355 = vmatprep.subr.mxu0 %v82
    %1356 = vmatpush1.msra.mxu0 %v81
    %1357 = vmatprep.subr.mxu0 %v86
    %1358 = vmatpush1.msra.mxu0 %v85
    %1359 = vmatprep.subr.mxu0 %v90
    %1360 = vmatpush1.msra.mxu0 %v89
    %1361 = vmatprep.subr.mxu0 %v94
    %1362 = vmatpush1.msra.mxu0 %v93
    %1363 = vmatprep.subr.mxu0 %v98
    %1364 = vmatpush1.msra.mxu0 %v97
    %1365 = vmatprep.subr.mxu0 %v102
    %1366 = vmatpush1.msra.mxu0 %v101
    %1367 = vmatprep.subr.mxu0 %v106
    %1368 = vmatpush1.msra.mxu0 %v105
    %1369 = vmatprep.subr.mxu0 %v110
    %1370 = vmatpush1.msra.mxu0 %v109
    %1371 = vmatprep.subr.mxu0 %v114
    %1372 = vmatpush1.msra.mxu0 %v113
    %1373 = vmatprep.subr.mxu0 %v118
    %1374 = vmatpush1.msra.mxu0 %v117
    %1375 = vmatprep.subr.mxu0 %v122
    %1376 = vmatpush1.msra.mxu0 %v121
    %1377 = vmatprep.subr.mxu0 %v126
    %1378 = vmatpush1.msra.mxu0 %v125
    %1379 = vmatprep.subr.mxu0 %v130
    %1380 = vmatpush1.msra.mxu0 %v129
    %1381 = vmatprep.subr.mxu0 %v134
    %1382 = vmatpush1.msra.mxu0 %v133
    %1383 = vmatprep.subr.mxu0 %v138
    %1384 = vmatpush1.msra.mxu0 %v137
    %1385 = vmatprep.subr.mxu0 %v142
    %1386 = vmatpush1.msra.mxu0 %v141
    %1387 = vmatprep.subr.mxu0 0.0
    %1388 = vmatpush1.msra.mxu0 0.0
    %1389 = vmatprep.subr.mxu0 0.0
    %1390 = vmatpush1.msra.mxu0 0.0
    %1391 = vmatprep.subr.mxu0 0.0
    %1392 = vmatpush1.msra.mxu0 0.0
    %1393 = vmatprep.subr.mxu0 0.0
    %1394 = vmatpush1.msra.mxu0 0.0
    %1395 = vmatprep.subr.mxu0 0.0
    %1396 = vmatpush1.msra.mxu0 0.0
    %1397 = vmatprep.subr.mxu0 0.0
    %1398 = vmatpush1.msra.mxu0 0.0
    %1399 = vmatprep.subr.mxu0 0.0
    %1400 = vmatpush1.msra.mxu0 0.0
    %1401 = vmatprep.subr.mxu0 0.0
    %1402 = vmatpush1.msra.mxu0 0.0
    %1403 = vmatprep.subr.mxu0 0.0
    %1404 = vmatpush1.msra.mxu0 0.0
    %1405 = vmatprep.subr.mxu0 0.0
    %1406 = vmatpush1.msra.mxu0 0.0
    %1407 = vmatprep.subr.mxu0 0.0
    %1408 = vmatpush1.msra.mxu0 0.0
    %1409 = vmatprep.subr.mxu0 0.0
    %1410 = vmatpush1.msra.mxu0 0.0
    %1411 = vmatprep.subr.mxu0 0.0
    %1412 = vmatpush1.msra.mxu0 0.0
    %1413 = vmatprep.subr.mxu0 0.0
    %1414 = vmatpush1.msra.mxu0 0.0
    %1415 = vmatprep.subr.mxu0 0.0
    %1416 = vmatpush1.msra.mxu0 0.0
    %1417 = vmatprep.subr.mxu0 0.0
    %1418 = vmatpush1.msra.mxu0 0.0
    %1419 = vmatprep.mubr.f32.mxu0 0.0
    %1420 = vmatmul.mubr.f32.gmra.mrb[0].mxu0 %v1271
    %v1421 = vpop.f32.mrb[0].mxu0
    %v1422 = vadd.f32 %v1282, %v1421
    %v1423 = vpop.f32.mrb[0].mxu0
    %v1424 = vadd.f32 %v1283, %v1423
    %1425 = vdwg.mxu0
    %v1426 = vmul.f32 %v1351, 0.5
    %v1427 = vmul.f32 %v1353, 0.5
    %v1428 = vmul.f32 %v1422, 0.5
    %v1429 = vtanh.pop %v1426
    %v1430 = vtanh.pop %v1427
    %v1431 = vtanh.pop %v1428
    %v1432 = vmul.f32 %v1429, 0.5
    %v1433 = vmul.f32 %v1430, 0.5
    %v1434 = vmul.f32 %v1431, 0.5
    %v1435 = vadd.f32 %v1432, 0.5
    %v1436 = vadd.f32 %v1433, 0.5
    %v1437 = vadd.f32 %v1434, 0.5
    %v1438 = vtanh.pop %v1424
    %v1439 = vmul.f32 %v1436, %v1269
    %v1440 = vmul.f32 %v1435, %v1438
    %v1441 = vadd.f32 %v1439, %v1440
    %v1442 = vtanh.pop %v1441
    %v1443 = vmul.f32 %v1437, %v1442
    %1444 = vset.pattern.permute.xlu0 8
    %1445 = vperm.xlu0 %1444, %v78
    %v1446 = vpop.permute.xlu0 %1445
    %v1448 = vmul.f32 %v1446, %v148
    %v1449 = vmul.f32 %v1446, %v152
    %v1450 = vmul.f32 %v1446, %v156
    %v1451 = vmul.f32 %v1446, %v160
    %v1452 = vadd.f32 %v1448, %v170
    %v1453 = vadd.f32 %v1449, %v174
    %v1454 = vadd.f32 %v1450, %v178
    %v1455 = vadd.f32 %v1451, %v182
    %1456 = vmatprep.subr.mxu0 %v80
    %1457 = vmatpush1.msra.mxu0 %v79
    %1458 = vmatprep.subr.mxu0 %v84
    %1459 = vmatpush1.msra.mxu0 %v83
    %1460 = vmatprep.subr.mxu0 %v88
    %1461 = vmatpush1.msra.mxu0 %v87
    %1462 = vmatprep.subr.mxu0 %v92
    %1463 = vmatpush1.msra.mxu0 %v91
    %1464 = vmatprep.subr.mxu0 %v96
    %1465 = vmatpush1.msra.mxu0 %v95
    %1466 = vmatprep.subr.mxu0 %v100
    %1467 = vmatpush1.msra.mxu0 %v99
    %1468 = vmatprep.subr.mxu0 %v104
    %1469 = vmatpush1.msra.mxu0 %v103
    %1470 = vmatprep.subr.mxu0 %v108
    %1471 = vmatpush1.msra.mxu0 %v107
    %1472 = vmatprep.subr.mxu0 %v112
    %1473 = vmatpush1.msra.mxu0 %v111
    %1474 = vmatprep.subr.mxu0 %v116
    %1475 = vmatpush1.msra.mxu0 %v115
    %1476 = vmatprep.subr.mxu0 %v120
    %1477 = vmatpush1.msra.mxu0 %v119
    %1478 = vmatprep.subr.mxu0 %v124
    %1479 = vmatpush1.msra.mxu0 %v123
    %1480 = vmatprep.subr.mxu0 %v128
    %1481 = vmatpush1.msra.mxu0 %v127
    %1482 = vmatprep.subr.mxu0 %v132
    %1483 = vmatpush1.msra.mxu0 %v131
    %1484 = vmatprep.subr.mxu0 %v136
    %1485 = vmatpush1.msra.mxu0 %v135
    %1486 = vmatprep.subr.mxu0 %v140
    %1487 = vmatpush1.msra.mxu0 %v139
    %1488 = vmatprep.subr.mxu0 0.0
    %1489 = vmatpush1.msra.mxu0 0.0
    %1490 = vmatprep.subr.mxu0 0.0
    %1491 = vmatpush1.msra.mxu0 0.0
    %1492 = vmatprep.subr.mxu0 0.0
    %1493 = vmatpush1.msra.mxu0 0.0
    %1494 = vmatprep.subr.mxu0 0.0
    %1495 = vmatpush1.msra.mxu0 0.0
    %1496 = vmatprep.subr.mxu0 0.0
    %1497 = vmatpush1.msra.mxu0 0.0
    %1498 = vmatprep.subr.mxu0 0.0
    %1499 = vmatpush1.msra.mxu0 0.0
    %1500 = vmatprep.subr.mxu0 0.0
    %1501 = vmatpush1.msra.mxu0 0.0
    %1502 = vmatprep.subr.mxu0 0.0
    %1503 = vmatpush1.msra.mxu0 0.0
    %1504 = vmatprep.subr.mxu0 0.0
    %1505 = vmatpush1.msra.mxu0 0.0
    %1506 = vmatprep.subr.mxu0 0.0
    %1507 = vmatpush1.msra.mxu0 0.0
    %1508 = vmatprep.subr.mxu0 0.0
    %1509 = vmatpush1.msra.mxu0 0.0
    %1510 = vmatprep.subr.mxu0 0.0
    %1511 = vmatpush1.msra.mxu0 0.0
    %1512 = vmatprep.subr.mxu0 0.0
    %1513 = vmatpush1.msra.mxu0 0.0
    %1514 = vmatprep.subr.mxu0 0.0
    %1515 = vmatpush1.msra.mxu0 0.0
    %1516 = vmatprep.subr.mxu0 0.0
    %1517 = vmatpush1.msra.mxu0 0.0
    %1518 = vmatprep.subr.mxu0 0.0
    %1519 = vmatpush1.msra.mxu0 0.0
    %1520 = vmatprep.mubr.f32.mxu0 0.0
    %1521 = vmatmul.mubr.f32.gmra.mrb[0].mxu0 %v1443
    %v1522 = vpop.f32.mrb[0].mxu0
    %v1523 = vadd.f32 %v1452, %v1522
    %v1524 = vpop.f32.mrb[0].mxu0
    %v1525 = vadd.f32 %v1453, %v1524
    %1526 = vdwg.mxu0
    %1527 = vmatprep.subr.mxu0 %v82
    %1528 = vmatpush1.msra.mxu0 %v81
    %1529 = vmatprep.subr.mxu0 %v86
    %1530 = vmatpush1.msra.mxu0 %v85
    %1531 = vmatprep.subr.mxu0 %v90
    %1532 = vmatpush1.msra.mxu0 %v89
    %1533 = vmatprep.subr.mxu0 %v94
    %1534 = vmatpush1.msra.mxu0 %v93
    %1535 = vmatprep.subr.mxu0 %v98
    %1536 = vmatpush1.msra.mxu0 %v97
    %1537 = vmatprep.subr.mxu0 %v102
    %1538 = vmatpush1.msra.mxu0 %v101
    %1539 = vmatprep.subr.mxu0 %v106
    %1540 = vmatpush1.msra.mxu0 %v105
    %1541 = vmatprep.subr.mxu0 %v110
    %1542 = vmatpush1.msra.mxu0 %v109
    %1543 = vmatprep.subr.mxu0 %v114
    %1544 = vmatpush1.msra.mxu0 %v113
    %1545 = vmatprep.subr.mxu0 %v118
    %1546 = vmatpush1.msra.mxu0 %v117
    %1547 = vmatprep.subr.mxu0 %v122
    %1548 = vmatpush1.msra.mxu0 %v121
    %1549 = vmatprep.subr.mxu0 %v126
    %1550 = vmatpush1.msra.mxu0 %v125
    %1551 = vmatprep.subr.mxu0 %v130
    %1552 = vmatpush1.msra.mxu0 %v129
    %1553 = vmatprep.subr.mxu0 %v134
    %1554 = vmatpush1.msra.mxu0 %v133
    %1555 = vmatprep.subr.mxu0 %v138
    %1556 = vmatpush1.msra.mxu0 %v137
    %1557 = vmatprep.subr.mxu0 %v142
    %1558 = vmatpush1.msra.mxu0 %v141
    %1559 = vmatprep.subr.mxu0 0.0
    %1560 = vmatpush1.msra.mxu0 0.0
    %1561 = vmatprep.subr.mxu0 0.0
    %1562 = vmatpush1.msra.mxu0 0.0
    %1563 = vmatprep.subr.mxu0 0.0
    %1564 = vmatpush1.msra.mxu0 0.0
    %1565 = vmatprep.subr.mxu0 0.0
    %1566 = vmatpush1.msra.mxu0 0.0
    %1567 = vmatprep.subr.mxu0 0.0
    %1568 = vmatpush1.msra.mxu0 0.0
    %1569 = vmatprep.subr.mxu0 0.0
    %1570 = vmatpush1.msra.mxu0 0.0
    %1571 = vmatprep.subr.mxu0 0.0
    %1572 = vmatpush1.msra.mxu0 0.0
    %1573 = vmatprep.subr.mxu0 0.0
    %1574 = vmatpush1.msra.mxu0 0.0
    %1575 = vmatprep.subr.mxu0 0.0
    %1576 = vmatpush1.msra.mxu0 0.0
    %1577 = vmatprep.subr.mxu0 0.0
    %1578 = vmatpush1.msra.mxu0 0.0
    %1579 = vmatprep.subr.mxu0 0.0
    %1580 = vmatpush1.msra.mxu0 0.0
    %1581 = vmatprep.subr.mxu0 0.0
    %1582 = vmatpush1.msra.mxu0 0.0
    %1583 = vmatprep.subr.mxu0 0.0
    %1584 = vmatpush1.msra.mxu0 0.0
    %1585 = vmatprep.subr.mxu0 0.0
    %1586 = vmatpush1.msra.mxu0 0.0
    %1587 = vmatprep.subr.mxu0 0.0
    %1588 = vmatpush1.msra.mxu0 0.0
    %1589 = vmatprep.subr.mxu0 0.0
    %1590 = vmatpush1.msra.mxu0 0.0
    %1591 = vmatprep.mubr.f32.mxu0 0.0
    %1592 = vmatmul.mubr.f32.gmra.mrb[0].mxu0 %v1443
    %v1593 = vpop.f32.mrb[0].mxu0
    %v1594 = vadd.f32 %v1454, %v1593
    %v1595 = vpop.f32.mrb[0].mxu0
    %v1596 = vadd.f32 %v1455, %v1595
    %1597 = vdwg.mxu0
    %v1598 = vmul.f32 %v1523, 0.5
    %v1599 = vmul.f32 %v1525, 0.5
    %v1600 = vmul.f32 %v1594, 0.5
    %v1601 = vtanh.pop %v1598
    %v1602 = vtanh.pop %v1599
    %v1603 = vtanh.pop %v1600
    %v1604 = vmul.f32 %v1601, 0.5
    %v1605 = vmul.f32 %v1602, 0.5
    %v1606 = vmul.f32 %v1603, 0.5
    %v1607 = vadd.f32 %v1604, 0.5
    %v1608 = vadd.f32 %v1605, 0.5
    %v1609 = vadd.f32 %v1606, 0.5
    %v1610 = vtanh.pop %v1596
    %v1611 = vmul.f32 %v1608, %v1441
    %v1612 = vmul.f32 %v1607, %v1610
    %v1613 = vadd.f32 %v1611, %v1612
    %v1614 = vtanh.pop %v1613
    %v1615 = vmul.f32 %v1609, %v1614
    %1616 = vset.pattern.permute.xlu0 9
    %1617 = vperm.xlu0 %1616, %v78
    %v1618 = vpop.permute.xlu0 %1617
    %v1620 = vmul.f32 %v1618, %v148
    %v1621 = vmul.f32 %v1618, %v152
    %v1622 = vmul.f32 %v1618, %v156
    %v1623 = vmul.f32 %v1618, %v160
    %v1624 = vadd.f32 %v1620, %v170
    %v1625 = vadd.f32 %v1621, %v174
    %v1626 = vadd.f32 %v1622, %v178
    %v1627 = vadd.f32 %v1623, %v182
    %1628 = vmatprep.subr.mxu0 %v80
    %1629 = vmatpush1.msra.mxu0 %v79
    %1630 = vmatprep.subr.mxu0 %v84
    %1631 = vmatpush1.msra.mxu0 %v83
    %1632 = vmatprep.subr.mxu0 %v88
    %1633 = vmatpush1.msra.mxu0 %v87
    %1634 = vmatprep.subr.mxu0 %v92
    %1635 = vmatpush1.msra.mxu0 %v91
    %1636 = vmatprep.subr.mxu0 %v96
    %1637 = vmatpush1.msra.mxu0 %v95
    %1638 = vmatprep.subr.mxu0 %v100
    %1639 = vmatpush1.msra.mxu0 %v99
    %1640 = vmatprep.subr.mxu0 %v104
    %1641 = vmatpush1.msra.mxu0 %v103
    %1642 = vmatprep.subr.mxu0 %v108
    %1643 = vmatpush1.msra.mxu0 %v107
    %1644 = vmatprep.subr.mxu0 %v112
    %1645 = vmatpush1.msra.mxu0 %v111
    %1646 = vmatprep.subr.mxu0 %v116
    %1647 = vmatpush1.msra.mxu0 %v115
    %1648 = vmatprep.subr.mxu0 %v120
    %1649 = vmatpush1.msra.mxu0 %v119
    %1650 = vmatprep.subr.mxu0 %v124
    %1651 = vmatpush1.msra.mxu0 %v123
    %1652 = vmatprep.subr.mxu0 %v128
    %1653 = vmatpush1.msra.mxu0 %v127
    %1654 = vmatprep.subr.mxu0 %v132
    %1655 = vmatpush1.msra.mxu0 %v131
    %1656 = vmatprep.subr.mxu0 %v136
    %1657 = vmatpush1.msra.mxu0 %v135
    %1658 = vmatprep.subr.mxu0 %v140
    %1659 = vmatpush1.msra.mxu0 %v139
    %1660 = vmatprep.subr.mxu0 0.0
    %1661 = vmatpush1.msra.mxu0 0.0
    %1662 = vmatprep.subr.mxu0 0.0
    %1663 = vmatpush1.msra.mxu0 0.0
    %1664 = vmatprep.subr.mxu0 0.0
    %1665 = vmatpush1.msra.mxu0 0.0
    %1666 = vmatprep.subr.mxu0 0.0
    %1667 = vmatpush1.msra.mxu0 0.0
    %1668 = vmatprep.subr.mxu0 0.0
    %1669 = vmatpush1.msra.mxu0 0.0
    %1670 = vmatprep.subr.mxu0 0.0
    %1671 = vmatpush1.msra.mxu0 0.0
    %1672 = vmatprep.subr.mxu0 0.0
    %1673 = vmatpush1.msra.mxu0 0.0
    %1674 = vmatprep.subr.mxu0 0.0
    %1675 = vmatpush1.msra.mxu0 0.0
    %1676 = vmatprep.subr.mxu0 0.0
    %1677 = vmatpush1.msra.mxu0 0.0
    %1678 = vmatprep.subr.mxu0 0.0
    %1679 = vmatpush1.msra.mxu0 0.0
    %1680 = vmatprep.subr.mxu0 0.0
    %1681 = vmatpush1.msra.mxu0 0.0
    %1682 = vmatprep.subr.mxu0 0.0
    %1683 = vmatpush1.msra.mxu0 0.0
    %1684 = vmatprep.subr.mxu0 0.0
    %1685 = vmatpush1.msra.mxu0 0.0
    %1686 = vmatprep.subr.mxu0 0.0
    %1687 = vmatpush1.msra.mxu0 0.0
    %1688 = vmatprep.subr.mxu0 0.0
    %1689 = vmatpush1.msra.mxu0 0.0
    %1690 = vmatprep.subr.mxu0 0.0
    %1691 = vmatpush1.msra.mxu0 0.0
    %1692 = vmatprep.mubr.f32.mxu0 0.0
    %1693 = vmatmul.mubr.f32.gmra.mrb[0].mxu0 %v1615
    %v1694 = vpop.f32.mrb[0].mxu0
    %v1695 = vadd.f32 %v1624, %v1694
    %v1696 = vpop.f32.mrb[0].mxu0
    %v1697 = vadd.f32 %v1625, %v1696
    %1698 = vdwg.mxu0
    %1699 = vmatprep.subr.mxu0 %v82
    %1700 = vmatpush1.msra.mxu0 %v81
    %1701 = vmatprep.subr.mxu0 %v86
    %1702 = vmatpush1.msra.mxu0 %v85
    %1703 = vmatprep.subr.mxu0 %v90
    %1704 = vmatpush1.msra.mxu0 %v89
    %1705 = vmatprep.subr.mxu0 %v94
    %1706 = vmatpush1.msra.mxu0 %v93
    %1707 = vmatprep.subr.mxu0 %v98
    %1708 = vmatpush1.msra.mxu0 %v97
    %1709 = vmatprep.subr.mxu0 %v102
    %1710 = vmatpush1.msra.mxu0 %v101
    %1711 = vmatprep.subr.mxu0 %v106
    %1712 = vmatpush1.msra.mxu0 %v105
    %1713 = vmatprep.subr.mxu0 %v110
    %1714 = vmatpush1.msra.mxu0 %v109
    %1715 = vmatprep.subr.mxu0 %v114
    %1716 = vmatpush1.msra.mxu0 %v113
    %1717 = vmatprep.subr.mxu0 %v118
    %1718 = vmatpush1.msra.mxu0 %v117
    %1719 = vmatprep.subr.mxu0 %v122
    %1720 = vmatpush1.msra.mxu0 %v121
    %1721 = vmatprep.subr.mxu0 %v126
    %1722 = vmatpush1.msra.mxu0 %v125
    %1723 = vmatprep.subr.mxu0 %v130
    %1724 = vmatpush1.msra.mxu0 %v129
    %1725 = vmatprep.subr.mxu0 %v134
    %1726 = vmatpush1.msra.mxu0 %v133
    %1727 = vmatprep.subr.mxu0 %v138
    %1728 = vmatpush1.msra.mxu0 %v137
    %1729 = vmatprep.subr.mxu0 %v142
    %1730 = vmatpush1.msra.mxu0 %v141
    %1731 = vmatprep.subr.mxu0 0.0
    %1732 = vmatpush1.msra.mxu0 0.0
    %1733 = vmatprep.subr.mxu0 0.0
    %1734 = vmatpush1.msra.mxu0 0.0
    %1735 = vmatprep.subr.mxu0 0.0
    %1736 = vmatpush1.msra.mxu0 0.0
    %1737 = vmatprep.subr.mxu0 0.0
    %1738 = vmatpush1.msra.mxu0 0.0
    %1739 = vmatprep.subr.mxu0 0.0
    %1740 = vmatpush1.msra.mxu0 0.0
    %1741 = vmatprep.subr.mxu0 0.0
    %1742 = vmatpush1.msra.mxu0 0.0
    %1743 = vmatprep.subr.mxu0 0.0
    %1744 = vmatpush1.msra.mxu0 0.0
    %1745 = vmatprep.subr.mxu0 0.0
    %1746 = vmatpush1.msra.mxu0 0.0
    %1747 = vmatprep.subr.mxu0 0.0
    %1748 = vmatpush1.msra.mxu0 0.0
    %1749 = vmatprep.subr.mxu0 0.0
    %1750 = vmatpush1.msra.mxu0 0.0
    %1751 = vmatprep.subr.mxu0 0.0
    %1752 = vmatpush1.msra.mxu0 0.0
    %1753 = vmatprep.subr.mxu0 0.0
    %1754 = vmatpush1.msra.mxu0 0.0
    %1755 = vmatprep.subr.mxu0 0.0
    %1756 = vmatpush1.msra.mxu0 0.0
    %1757 = vmatprep.subr.mxu0 0.0
    %1758 = vmatpush1.msra.mxu0 0.0
    %1759 = vmatprep.subr.mxu0 0.0
    %1760 = vmatpush1.msra.mxu0 0.0
    %1761 = vmatprep.subr.mxu0 0.0
    %1762 = vmatpush1.msra.mxu0 0.0
    %1763 = vmatprep.mubr.f32.mxu0 0.0
    %1764 = vmatmul.mubr.f32.gmra.mrb[0].mxu0 %v1615
    %v1765 = vpop.f32.mrb[0].mxu0
    %v1766 = vadd.f32 %v1626, %v1765
    %v1767 = vpop.f32.mrb[0].mxu0
    %v1768 = vadd.f32 %v1627, %v1767
    %1769 = vdwg.mxu0
    %v1770 = vmul.f32 %v1695, 0.5
    %v1771 = vmul.f32 %v1697, 0.5
    %v1772 = vmul.f32 %v1766, 0.5
    %v1773 = vtanh.pop %v1770
    %v1774 = vtanh.pop %v1771
    %v1775 = vtanh.pop %v1772
    %v1776 = vmul.f32 %v1773, 0.5
    %v1777 = vmul.f32 %v1774, 0.5
    %v1778 = vmul.f32 %v1775, 0.5
    %v1779 = vadd.f32 %v1776, 0.5
    %v1780 = vadd.f32 %v1777, 0.5
    %v1781 = vadd.f32 %v1778, 0.5
    %v1782 = vtanh.pop %v1768
    %v1783 = vmul.f32 %v1780, %v1613
    %v1784 = vmul.f32 %v1779, %v1782
    %v1785 = vadd.f32 %v1783, %v1784
    %v1786 = vtanh.pop %v1785
    %v1787 = vmul.f32 %v1781, %v1786
    %1788 = vset.pattern.permute.xlu0 10
    %1789 = vperm.xlu0 %1788, %v78
    %v1790 = vpop.permute.xlu0 %1789
    %v1792 = vmul.f32 %v1790, %v148
    %v1793 = vmul.f32 %v1790, %v152
    %v1794 = vmul.f32 %v1790, %v156
    %v1795 = vmul.f32 %v1790, %v160
    %v1796 = vadd.f32 %v1792, %v170
    %v1797 = vadd.f32 %v1793, %v174
    %v1798 = vadd.f32 %v1794, %v178
    %v1799 = vadd.f32 %v1795, %v182
    %1800 = vmatprep.subr.mxu0 %v80
    %1801 = vmatpush1.msra.mxu0 %v79
    %1802 = vmatprep.subr.mxu0 %v84
    %1803 = vmatpush1.msra.mxu0 %v83
    %1804 = vmatprep.subr.mxu0 %v88
    %1805 = vmatpush1.msra.mxu0 %v87
    %1806 = vmatprep.subr.mxu0 %v92
    %1807 = vmatpush1.msra.mxu0 %v91
    %1808 = vmatprep.subr.mxu0 %v96
    %1809 = vmatpush1.msra.mxu0 %v95
    %1810 = vmatprep.subr.mxu0 %v100
    %1811 = vmatpush1.msra.mxu0 %v99
    %1812 = vmatprep.subr.mxu0 %v104
    %1813 = vmatpush1.msra.mxu0 %v103
    %1814 = vmatprep.subr.mxu0 %v108
    %1815 = vmatpush1.msra.mxu0 %v107
    %1816 = vmatprep.subr.mxu0 %v112
    %1817 = vmatpush1.msra.mxu0 %v111
    %1818 = vmatprep.subr.mxu0 %v116
    %1819 = vmatpush1.msra.mxu0 %v115
    %1820 = vmatprep.subr.mxu0 %v120
    %1821 = vmatpush1.msra.mxu0 %v119
    %1822 = vmatprep.subr.mxu0 %v124
    %1823 = vmatpush1.msra.mxu0 %v123
    %1824 = vmatprep.subr.mxu0 %v128
    %1825 = vmatpush1.msra.mxu0 %v127
    %1826 = vmatprep.subr.mxu0 %v132
    %1827 = vmatpush1.msra.mxu0 %v131
    %1828 = vmatprep.subr.mxu0 %v136
    %1829 = vmatpush1.msra.mxu0 %v135
    %1830 = vmatprep.subr.mxu0 %v140
    %1831 = vmatpush1.msra.mxu0 %v139
    %1832 = vmatprep.subr.mxu0 0.0
    %1833 = vmatpush1.msra.mxu0 0.0
    %1834 = vmatprep.subr.mxu0 0.0
    %1835 = vmatpush1.msra.mxu0 0.0
    %1836 = vmatprep.subr.mxu0 0.0
    %1837 = vmatpush1.msra.mxu0 0.0
    %1838 = vmatprep.subr.mxu0 0.0
    %1839 = vmatpush1.msra.mxu0 0.0
    %1840 = vmatprep.subr.mxu0 0.0
    %1841 = vmatpush1.msra.mxu0 0.0
    %1842 = vmatprep.subr.mxu0 0.0
    %1843 = vmatpush1.msra.mxu0 0.0
    %1844 = vmatprep.subr.mxu0 0.0
    %1845 = vmatpush1.msra.mxu0 0.0
    %1846 = vmatprep.subr.mxu0 0.0
    %1847 = vmatpush1.msra.mxu0 0.0
    %1848 = vmatprep.subr.mxu0 0.0
    %1849 = vmatpush1.msra.mxu0 0.0
    %1850 = vmatprep.subr.mxu0 0.0
    %1851 = vmatpush1.msra.mxu0 0.0
    %1852 = vmatprep.subr.mxu0 0.0
    %1853 = vmatpush1.msra.mxu0 0.0
    %1854 = vmatprep.subr.mxu0 0.0
    %1855 = vmatpush1.msra.mxu0 0.0
    %1856 = vmatprep.subr.mxu0 0.0
    %1857 = vmatpush1.msra.mxu0 0.0
    %1858 = vmatprep.subr.mxu0 0.0
    %1859 = vmatpush1.msra.mxu0 0.0
    %1860 = vmatprep.subr.mxu0 0.0
    %1861 = vmatpush1.msra.mxu0 0.0
    %1862 = vmatprep.subr.mxu0 0.0
    %1863 = vmatpush1.msra.mxu0 0.0
    %1864 = vmatprep.mubr.f32.mxu0 0.0
    %1865 = vmatmul.mubr.f32.gmra.mrb[0].mxu0 %v1787
    %v1866 = vpop.f32.mrb[0].mxu0
    %v1867 = vadd.f32 %v1796, %v1866
    %v1868 = vpop.f32.mrb[0].mxu0
    %v1869 = vadd.f32 %v1797, %v1868
    %1870 = vdwg.mxu0
    %1871 = vmatprep.subr.mxu0 %v82
    %1872 = vmatpush1.msra.mxu0 %v81
    %1873 = vmatprep.subr.mxu0 %v86
    %1874 = vmatpush1.msra.mxu0 %v85
    %1875 = vmatprep.subr.mxu0 %v90
    %1876 = vmatpush1.msra.mxu0 %v89
    %1877 = vmatprep.subr.mxu0 %v94
    %1878 = vmatpush1.msra.mxu0 %v93
    %1879 = vmatprep.subr.mxu0 %v98
    %1880 = vmatpush1.msra.mxu0 %v97
    %1881 = vmatprep.subr.mxu0 %v102
    %1882 = vmatpush1.msra.mxu0 %v101
    %1883 = vmatprep.subr.mxu0 %v106
    %1884 = vmatpush1.msra.mxu0 %v105
    %1885 = vmatprep.subr.mxu0 %v110
    %1886 = vmatpush1.msra.mxu0 %v109
    %1887 = vmatprep.subr.mxu0 %v114
    %1888 = vmatpush1.msra.mxu0 %v113
    %1889 = vmatprep.subr.mxu0 %v118
    %1890 = vmatpush1.msra.mxu0 %v117
    %1891 = vmatprep.subr.mxu0 %v122
    %1892 = vmatpush1.msra.mxu0 %v121
    %1893 = vmatprep.subr.mxu0 %v126
    %1894 = vmatpush1.msra.mxu0 %v125
    %1895 = vmatprep.subr.mxu0 %v130
    %1896 = vmatpush1.msra.mxu0 %v129
    %1897 = vmatprep.subr.mxu0 %v134
    %1898 = vmatpush1.msra.mxu0 %v133
    %1899 = vmatprep.subr.mxu0 %v138
    %1900 = vmatpush1.msra.mxu0 %v137
    %1901 = vmatprep.subr.mxu0 %v142
    %1902 = vmatpush1.msra.mxu0 %v141
    %1903 = vmatprep.subr.mxu0 0.0
    %1904 = vmatpush1.msra.mxu0 0.0
    %1905 = vmatprep.subr.mxu0 0.0
    %1906 = vmatpush1.msra.mxu0 0.0
    %1907 = vmatprep.subr.mxu0 0.0
    %1908 = vmatpush1.msra.mxu0 0.0
    %1909 = vmatprep.subr.mxu0 0.0
    %1910 = vmatpush1.msra.mxu0 0.0
    %1911 = vmatprep.subr.mxu0 0.0
    %1912 = vmatpush1.msra.mxu0 0.0
    %1913 = vmatprep.subr.mxu0 0.0
    %1914 = vmatpush1.msra.mxu0 0.0
    %1915 = vmatprep.subr.mxu0 0.0
    %1916 = vmatpush1.msra.mxu0 0.0
    %1917 = vmatprep.subr.mxu0 0.0
    %1918 = vmatpush1.msra.mxu0 0.0
    %1919 = vmatprep.subr.mxu0 0.0
    %1920 = vmatpush1.msra.mxu0 0.0
    %1921 = vmatprep.subr.mxu0 0.0
    %1922 = vmatpush1.msra.mxu0 0.0
    %1923 = vmatprep.subr.mxu0 0.0
    %1924 = vmatpush1.msra.mxu0 0.0
    %1925 = vmatprep.subr.mxu0 0.0
    %1926 = vmatpush1.msra.mxu0 0.0
    %1927 = vmatprep.subr.mxu0 0.0
    %1928 = vmatpush1.msra.mxu0 0.0
    %1929 = vmatprep.subr.mxu0 0.0
    %1930 = vmatpush1.msra.mxu0 0.0
    %1931 = vmatprep.subr.mxu0 0.0
    %1932 = vmatpush1.msra.mxu0 0.0
    %1933 = vmatprep.subr.mxu0 0.0
    %1934 = vmatpush1.msra.mxu0 0.0
    %1935 = vmatprep.mubr.f32.mxu0 0.0
    %1936 = vmatmul.mubr.f32.gmra.mrb[0].mxu0 %v1787
    %v1937 = vpop.f32.mrb[0].mxu0
    %v1938 = vadd.f32 %v1798, %v1937
    %v1939 = vpop.f32.mrb[0].mxu0
    %v1940 = vadd.f32 %v1799, %v1939
    %1941 = vdwg.mxu0
    %v1942 = vmul.f32 %v1867, 0.5
    %v1943 = vmul.f32 %v1869, 0.5
    %v1944 = vmul.f32 %v1938, 0.5
    %v1945 = vtanh.pop %v1942
    %v1946 = vtanh.pop %v1943
    %v1947 = vtanh.pop %v1944
    %v1948 = vmul.f32 %v1945, 0.5
    %v1949 = vmul.f32 %v1946, 0.5
    %v1950 = vmul.f32 %v1947, 0.5
    %v1951 = vadd.f32 %v1948, 0.5
    %v1952 = vadd.f32 %v1949, 0.5
    %v1953 = vadd.f32 %v1950, 0.5
    %v1954 = vtanh.pop %v1940
    %v1955 = vmul.f32 %v1952, %v1785
    %v1956 = vmul.f32 %v1951, %v1954
    %v1957 = vadd.f32 %v1955, %v1956
    %v1958 = vtanh.pop %v1957
    %v1959 = vmul.f32 %v1953, %v1958
    %1960 = vset.pattern.permute.xlu0 11
    %1961 = vperm.xlu0 %1960, %v78
    %v1962 = vpop.permute.xlu0 %1961
    %v1964 = vmul.f32 %v1962, %v148
    %v1965 = vmul.f32 %v1962, %v152
    %v1966 = vmul.f32 %v1962, %v156
    %v1967 = vmul.f32 %v1962, %v160
    %v1968 = vadd.f32 %v1964, %v170
    %v1969 = vadd.f32 %v1965, %v174
    %v1970 = vadd.f32 %v1966, %v178
    %v1971 = vadd.f32 %v1967, %v182
    %1972 = vmatprep.subr.mxu0 %v80
    %1973 = vmatpush1.msra.mxu0 %v79
    %1974 = vmatprep.subr.mxu0 %v84
    %1975 = vmatpush1.msra.mxu0 %v83
    %1976 = vmatprep.subr.mxu0 %v88
    %1977 = vmatpush1.msra.mxu0 %v87
    %1978 = vmatprep.subr.mxu0 %v92
    %1979 = vmatpush1.msra.mxu0 %v91
    %1980 = vmatprep.subr.mxu0 %v96
    %1981 = vmatpush1.msra.mxu0 %v95
    %1982 = vmatprep.subr.mxu0 %v100
    %1983 = vmatpush1.msra.mxu0 %v99
    %1984 = vmatprep.subr.mxu0 %v104
    %1985 = vmatpush1.msra.mxu0 %v103
    %1986 = vmatprep.subr.mxu0 %v108
    %1987 = vmatpush1.msra.mxu0 %v107
    %1988 = vmatprep.subr.mxu0 %v112
    %1989 = vmatpush1.msra.mxu0 %v111
    %1990 = vmatprep.subr.mxu0 %v116
    %1991 = vmatpush1.msra.mxu0 %v115
    %1992 = vmatprep.subr.mxu0 %v120
    %1993 = vmatpush1.msra.mxu0 %v119
    %1994 = vmatprep.subr.mxu0 %v124
    %1995 = vmatpush1.msra.mxu0 %v123
    %1996 = vmatprep.subr.mxu0 %v128
    %1997 = vmatpush1.msra.mxu0 %v127
    %1998 = vmatprep.subr.mxu0 %v132
    %1999 = vmatpush1.msra.mxu0 %v131
    %2000 = vmatprep.subr.mxu0 %v136
    %2001 = vmatpush1.msra.mxu0 %v135
    %2002 = vmatprep.subr.mxu0 %v140
    %2003 = vmatpush1.msra.mxu0 %v139
    %2004 = vmatprep.subr.mxu0 0.0
    %2005 = vmatpush1.msra.mxu0 0.0
    %2006 = vmatprep.subr.mxu0 0.0
    %2007 = vmatpush1.msra.mxu0 0.0
    %2008 = vmatprep.subr.mxu0 0.0
    %2009 = vmatpush1.msra.mxu0 0.0
    %2010 = vmatprep.subr.mxu0 0.0
    %2011 = vmatpush1.msra.mxu0 0.0
    %2012 = vmatprep.subr.mxu0 0.0
    %2013 = vmatpush1.msra.mxu0 0.0
    %2014 = vmatprep.subr.mxu0 0.0
    %2015 = vmatpush1.msra.mxu0 0.0
    %2016 = vmatprep.subr.mxu0 0.0
    %2017 = vmatpush1.msra.mxu0 0.0
    %2018 = vmatprep.subr.mxu0 0.0
    %2019 = vmatpush1.msra.mxu0 0.0
    %2020 = vmatprep.subr.mxu0 0.0
    %2021 = vmatpush1.msra.mxu0 0.0
    %2022 = vmatprep.subr.mxu0 0.0
    %2023 = vmatpush1.msra.mxu0 0.0
    %2024 = vmatprep.subr.mxu0 0.0
    %2025 = vmatpush1.msra.mxu0 0.0
    %2026 = vmatprep.subr.mxu0 0.0
    %2027 = vmatpush1.msra.mxu0 0.0
    %2028 = vmatprep.subr.mxu0 0.0
    %2029 = vmatpush1.msra.mxu0 0.0
    %2030 = vmatprep.subr.mxu0 0.0
    %2031 = vmatpush1.msra.mxu0 0.0
    %2032 = vmatprep.subr.mxu0 0.0
    %2033 = vmatpush1.msra.mxu0 0.0
    %2034 = vmatprep.subr.mxu0 0.0
    %2035 = vmatpush1.msra.mxu0 0.0
    %2036 = vmatprep.mubr.f32.mxu0 0.0
    %2037 = vmatmul.mubr.f32.gmra.mrb[0].mxu0 %v1959
    %v2038 = vpop.f32.mrb[0].mxu0
    %v2039 = vadd.f32 %v1968, %v2038
    %v2040 = vpop.f32.mrb[0].mxu0
    %v2041 = vadd.f32 %v1969, %v2040
    %2042 = vdwg.mxu0
    %2043 = vmatprep.subr.mxu0 %v82
    %2044 = vmatpush1.msra.mxu0 %v81
    %2045 = vmatprep.subr.mxu0 %v86
    %2046 = vmatpush1.msra.mxu0 %v85
    %2047 = vmatprep.subr.mxu0 %v90
    %2048 = vmatpush1.msra.mxu0 %v89
    %2049 = vmatprep.subr.mxu0 %v94
    %2050 = vmatpush1.msra.mxu0 %v93
    %2051 = vmatprep.subr.mxu0 %v98
    %2052 = vmatpush1.msra.mxu0 %v97
    %2053 = vmatprep.subr.mxu0 %v102
    %2054 = vmatpush1.msra.mxu0 %v101
    %2055 = vmatprep.subr.mxu0 %v106
    %2056 = vmatpush1.msra.mxu0 %v105
    %2057 = vmatprep.subr.mxu0 %v110
    %2058 = vmatpush1.msra.mxu0 %v109
    %2059 = vmatprep.subr.mxu0 %v114
    %2060 = vmatpush1.msra.mxu0 %v113
    %2061 = vmatprep.subr.mxu0 %v118
    %2062 = vmatpush1.msra.mxu0 %v117
    %2063 = vmatprep.subr.mxu0 %v122
    %2064 = vmatpush1.msra.mxu0 %v121
    %2065 = vmatprep.subr.mxu0 %v126
    %2066 = vmatpush1.msra.mxu0 %v125
    %2067 = vmatprep.subr.mxu0 %v130
    %2068 = vmatpush1.msra.mxu0 %v129
    %2069 = vmatprep.subr.mxu0 %v134
    %2070 = vmatpush1.msra.mxu0 %v133
    %2071 = vmatprep.subr.mxu0 %v138
    %2072 = vmatpush1.msra.mxu0 %v137
    %2073 = vmatprep.subr.mxu0 %v142
    %2074 = vmatpush1.msra.mxu0 %v141
    %2075 = vmatprep.subr.mxu0 0.0
    %2076 = vmatpush1.msra.mxu0 0.0
    %2077 = vmatprep.subr.mxu0 0.0
    %2078 = vmatpush1.msra.mxu0 0.0
    %2079 = vmatprep.subr.mxu0 0.0
    %2080 = vmatpush1.msra.mxu0 0.0
    %2081 = vmatprep.subr.mxu0 0.0
    %2082 = vmatpush1.msra.mxu0 0.0
    %2083 = vmatprep.subr.mxu0 0.0
    %2084 = vmatpush1.msra.mxu0 0.0
    %2085 = vmatprep.subr.mxu0 0.0
    %2086 = vmatpush1.msra.mxu0 0.0
    %2087 = vmatprep.subr.mxu0 0.0
    %2088 = vmatpush1.msra.mxu0 0.0
    %2089 = vmatprep.subr.mxu0 0.0
    %2090 = vmatpush1.msra.mxu0 0.0
    %2091 = vmatprep.subr.mxu0 0.0
    %2092 = vmatpush1.msra.mxu0 0.0
    %2093 = vmatprep.subr.mxu0 0.0
    %2094 = vmatpush1.msra.mxu0 0.0
    %2095 = vmatprep.subr.mxu0 0.0
    %2096 = vmatpush1.msra.mxu0 0.0
    %2097 = vmatprep.subr.mxu0 0.0
    %2098 = vmatpush1.msra.mxu0 0.0
    %2099 = vmatprep.subr.mxu0 0.0
    %2100 = vmatpush1.msra.mxu0 0.0
    %2101 = vmatprep.subr.mxu0 0.0
    %2102 = vmatpush1.msra.mxu0 0.0
    %2103 = vmatprep.subr.mxu0 0.0
    %2104 = vmatpush1.msra.mxu0 0.0
    %2105 = vmatprep.subr.mxu0 0.0
    %2106 = vmatpush1.msra.mxu0 0.0
    %2107 = vmatprep.mubr.f32.mxu0 0.0
    %2108 = vmatmul.mubr.f32.gmra.mrb[0].mxu0 %v1959
    %v2109 = vpop.f32.mrb[0].mxu0
    %v2110 = vadd.f32 %v1970, %v2109
    %v2111 = vpop.f32.mrb[0].mxu0
    %v2112 = vadd.f32 %v1971, %v2111
    %2113 = vdwg.mxu0
    %v2114 = vmul.f32 %v2039, 0.5
    %v2115 = vmul.f32 %v2041, 0.5
    %v2116 = vmul.f32 %v2110, 0.5
    %v2117 = vtanh.pop %v2114
    %v2118 = vtanh.pop %v2115
    %v2119 = vtanh.pop %v2116
    %v2120 = vmul.f32 %v2117, 0.5
    %v2121 = vmul.f32 %v2118, 0.5
    %v2122 = vmul.f32 %v2119, 0.5
    %v2123 = vadd.f32 %v2120, 0.5
    %v2124 = vadd.f32 %v2121, 0.5
    %v2125 = vadd.f32 %v2122, 0.5
    %v2126 = vtanh.pop %v2112
    %v2127 = vmul.f32 %v2124, %v1957
    %v2128 = vmul.f32 %v2123, %v2126
    %v2129 = vadd.f32 %v2127, %v2128
    %v2130 = vtanh.pop %v2129
    %v2131 = vmul.f32 %v2125, %v2130
    %2132 = vset.pattern.permute.xlu0 12
    %2133 = vperm.xlu0 %2132, %v78
    %v2134 = vpop.permute.xlu0 %2133
    %v2136 = vmul.f32 %v2134, %v148
    %v2137 = vmul.f32 %v2134, %v152
    %v2138 = vmul.f32 %v2134, %v156
    %v2139 = vmul.f32 %v2134, %v160
    %v2140 = vadd.f32 %v2136, %v170
    %v2141 = vadd.f32 %v2137, %v174
    %v2142 = vadd.f32 %v2138, %v178
    %v2143 = vadd.f32 %v2139, %v182
    %2144 = vmatprep.subr.mxu0 %v80
    %2145 = vmatpush1.msra.mxu0 %v79
    %2146 = vmatprep.subr.mxu0 %v84
    %2147 = vmatpush1.msra.mxu0 %v83
    %2148 = vmatprep.subr.mxu0 %v88
    %2149 = vmatpush1.msra.mxu0 %v87
    %2150 = vmatprep.subr.mxu0 %v92
    %2151 = vmatpush1.msra.mxu0 %v91
    %2152 = vmatprep.subr.mxu0 %v96
    %2153 = vmatpush1.msra.mxu0 %v95
    %2154 = vmatprep.subr.mxu0 %v100
    %2155 = vmatpush1.msra.mxu0 %v99
    %2156 = vmatprep.subr.mxu0 %v104
    %2157 = vmatpush1.msra.mxu0 %v103
    %2158 = vmatprep.subr.mxu0 %v108
    %2159 = vmatpush1.msra.mxu0 %v107
    %2160 = vmatprep.subr.mxu0 %v112
    %2161 = vmatpush1.msra.mxu0 %v111
    %2162 = vmatprep.subr.mxu0 %v116
    %2163 = vmatpush1.msra.mxu0 %v115
    %2164 = vmatprep.subr.mxu0 %v120
    %2165 = vmatpush1.msra.mxu0 %v119
    %2166 = vmatprep.subr.mxu0 %v124
    %2167 = vmatpush1.msra.mxu0 %v123
    %2168 = vmatprep.subr.mxu0 %v128
    %2169 = vmatpush1.msra.mxu0 %v127
    %2170 = vmatprep.subr.mxu0 %v132
    %2171 = vmatpush1.msra.mxu0 %v131
    %2172 = vmatprep.subr.mxu0 %v136
    %2173 = vmatpush1.msra.mxu0 %v135
    %2174 = vmatprep.subr.mxu0 %v140
    %2175 = vmatpush1.msra.mxu0 %v139
    %2176 = vmatprep.subr.mxu0 0.0
    %2177 = vmatpush1.msra.mxu0 0.0
    %2178 = vmatprep.subr.mxu0 0.0
    %2179 = vmatpush1.msra.mxu0 0.0
    %2180 = vmatprep.subr.mxu0 0.0
    %2181 = vmatpush1.msra.mxu0 0.0
    %2182 = vmatprep.subr.mxu0 0.0
    %2183 = vmatpush1.msra.mxu0 0.0
    %2184 = vmatprep.subr.mxu0 0.0
    %2185 = vmatpush1.msra.mxu0 0.0
    %2186 = vmatprep.subr.mxu0 0.0
    %2187 = vmatpush1.msra.mxu0 0.0
    %2188 = vmatprep.subr.mxu0 0.0
    %2189 = vmatpush1.msra.mxu0 0.0
    %2190 = vmatprep.subr.mxu0 0.0
    %2191 = vmatpush1.msra.mxu0 0.0
    %2192 = vmatprep.subr.mxu0 0.0
    %2193 = vmatpush1.msra.mxu0 0.0
    %2194 = vmatprep.subr.mxu0 0.0
    %2195 = vmatpush1.msra.mxu0 0.0
    %2196 = vmatprep.subr.mxu0 0.0
    %2197 = vmatpush1.msra.mxu0 0.0
    %2198 = vmatprep.subr.mxu0 0.0
    %2199 = vmatpush1.msra.mxu0 0.0
    %2200 = vmatprep.subr.mxu0 0.0
    %2201 = vmatpush1.msra.mxu0 0.0
    %2202 = vmatprep.subr.mxu0 0.0
    %2203 = vmatpush1.msra.mxu0 0.0
    %2204 = vmatprep.subr.mxu0 0.0
    %2205 = vmatpush1.msra.mxu0 0.0
    %2206 = vmatprep.subr.mxu0 0.0
    %2207 = vmatpush1.msra.mxu0 0.0
    %2208 = vmatprep.mubr.f32.mxu0 0.0
    %2209 = vmatmul.mubr.f32.gmra.mrb[0].mxu0 %v2131
    %v2210 = vpop.f32.mrb[0].mxu0
    %v2211 = vadd.f32 %v2140, %v2210
    %v2212 = vpop.f32.mrb[0].mxu0
    %v2213 = vadd.f32 %v2141, %v2212
    %2214 = vdwg.mxu0
    %2215 = vmatprep.subr.mxu0 %v82
    %2216 = vmatpush1.msra.mxu0 %v81
    %2217 = vmatprep.subr.mxu0 %v86
    %2218 = vmatpush1.msra.mxu0 %v85
    %2219 = vmatprep.subr.mxu0 %v90
    %2220 = vmatpush1.msra.mxu0 %v89
    %2221 = vmatprep.subr.mxu0 %v94
    %2222 = vmatpush1.msra.mxu0 %v93
    %2223 = vmatprep.subr.mxu0 %v98
    %2224 = vmatpush1.msra.mxu0 %v97
    %2225 = vmatprep.subr.mxu0 %v102
    %2226 = vmatpush1.msra.mxu0 %v101
    %2227 = vmatprep.subr.mxu0 %v106
    %2228 = vmatpush1.msra.mxu0 %v105
    %2229 = vmatprep.subr.mxu0 %v110
    %2230 = vmatpush1.msra.mxu0 %v109
    %2231 = vmatprep.subr.mxu0 %v114
    %2232 = vmatpush1.msra.mxu0 %v113
    %2233 = vmatprep.subr.mxu0 %v118
    %2234 = vmatpush1.msra.mxu0 %v117
    %2235 = vmatprep.subr.mxu0 %v122
    %2236 = vmatpush1.msra.mxu0 %v121
    %2237 = vmatprep.subr.mxu0 %v126
    %2238 = vmatpush1.msra.mxu0 %v125
    %2239 = vmatprep.subr.mxu0 %v130
    %2240 = vmatpush1.msra.mxu0 %v129
    %2241 = vmatprep.subr.mxu0 %v134
    %2242 = vmatpush1.msra.mxu0 %v133
    %2243 = vmatprep.subr.mxu0 %v138
    %2244 = vmatpush1.msra.mxu0 %v137
    %2245 = vmatprep.subr.mxu0 %v142
    %2246 = vmatpush1.msra.mxu0 %v141
    %2247 = vmatprep.subr.mxu0 0.0
    %2248 = vmatpush1.msra.mxu0 0.0
    %2249 = vmatprep.subr.mxu0 0.0
    %2250 = vmatpush1.msra.mxu0 0.0
    %2251 = vmatprep.subr.mxu0 0.0
    %2252 = vmatpush1.msra.mxu0 0.0
    %2253 = vmatprep.subr.mxu0 0.0
    %2254 = vmatpush1.msra.mxu0 0.0
    %2255 = vmatprep.subr.mxu0 0.0
    %2256 = vmatpush1.msra.mxu0 0.0
    %2257 = vmatprep.subr.mxu0 0.0
    %2258 = vmatpush1.msra.mxu0 0.0
    %2259 = vmatprep.subr.mxu0 0.0
    %2260 = vmatpush1.msra.mxu0 0.0
    %2261 = vmatprep.subr.mxu0 0.0
    %2262 = vmatpush1.msra.mxu0 0.0
    %2263 = vmatprep.subr.mxu0 0.0
    %2264 = vmatpush1.msra.mxu0 0.0
    %2265 = vmatprep.subr.mxu0 0.0
    %2266 = vmatpush1.msra.mxu0 0.0
    %2267 = vmatprep.subr.mxu0 0.0
    %2268 = vmatpush1.msra.mxu0 0.0
    %2269 = vmatprep.subr.mxu0 0.0
    %2270 = vmatpush1.msra.mxu0 0.0
    %2271 = vmatprep.subr.mxu0 0.0
    %2272 = vmatpush1.msra.mxu0 0.0
    %2273 = vmatprep.subr.mxu0 0.0
    %2274 = vmatpush1.msra.mxu0 0.0
    %2275 = vmatprep.subr.mxu0 0.0
    %2276 = vmatpush1.msra.mxu0 0.0
    %2277 = vmatprep.subr.mxu0 0.0
    %2278 = vmatpush1.msra.mxu0 0.0
    %2279 = vmatprep.mubr.f32.mxu0 0.0
    %2280 = vmatmul.mubr.f32.gmra.mrb[0].mxu0 %v2131
    %v2281 = vpop.f32.mrb[0].mxu0
    %v2282 = vadd.f32 %v2142, %v2281
    %v2283 = vpop.f32.mrb[0].mxu0
    %v2284 = vadd.f32 %v2143, %v2283
    %2285 = vdwg.mxu0
    %v2286 = vmul.f32 %v2211, 0.5
    %v2287 = vmul.f32 %v2213, 0.5
    %v2288 = vmul.f32 %v2282, 0.5
    %v2289 = vtanh.pop %v2286
    %v2290 = vtanh.pop %v2287
    %v2291 = vtanh.pop %v2288
    %v2292 = vmul.f32 %v2289, 0.5
    %v2293 = vmul.f32 %v2290, 0.5
    %v2294 = vmul.f32 %v2291, 0.5
    %v2295 = vadd.f32 %v2292, 0.5
    %v2296 = vadd.f32 %v2293, 0.5
    %v2297 = vadd.f32 %v2294, 0.5
    %v2298 = vtanh.pop %v2284
    %v2299 = vmul.f32 %v2296, %v2129
    %v2300 = vmul.f32 %v2295, %v2298
    %v2301 = vadd.f32 %v2299, %v2300
    %v2302 = vtanh.pop %v2301
    %v2303 = vmul.f32 %v2297, %v2302
    %2304 = vset.pattern.permute.xlu0 13
    %2305 = vperm.xlu0 %2304, %v78
    %v2306 = vpop.permute.xlu0 %2305
    %v2308 = vmul.f32 %v2306, %v148
    %v2309 = vmul.f32 %v2306, %v152
    %v2310 = vmul.f32 %v2306, %v156
    %v2311 = vmul.f32 %v2306, %v160
    %v2312 = vadd.f32 %v2308, %v170
    %v2313 = vadd.f32 %v2309, %v174
    %v2314 = vadd.f32 %v2310, %v178
    %v2315 = vadd.f32 %v2311, %v182
    %2316 = vmatprep.subr.mxu0 %v80
    %2317 = vmatpush1.msra.mxu0 %v79
    %2318 = vmatprep.subr.mxu0 %v84
    %2319 = vmatpush1.msra.mxu0 %v83
    %2320 = vmatprep.subr.mxu0 %v88
    %2321 = vmatpush1.msra.mxu0 %v87
    %2322 = vmatprep.subr.mxu0 %v92
    %2323 = vmatpush1.msra.mxu0 %v91
    %2324 = vmatprep.subr.mxu0 %v96
    %2325 = vmatpush1.msra.mxu0 %v95
    %2326 = vmatprep.subr.mxu0 %v100
    %2327 = vmatpush1.msra.mxu0 %v99
    %2328 = vmatprep.subr.mxu0 %v104
    %2329 = vmatpush1.msra.mxu0 %v103
    %2330 = vmatprep.subr.mxu0 %v108
    %2331 = vmatpush1.msra.mxu0 %v107
    %2332 = vmatprep.subr.mxu0 %v112
    %2333 = vmatpush1.msra.mxu0 %v111
    %2334 = vmatprep.subr.mxu0 %v116
    %2335 = vmatpush1.msra.mxu0 %v115
    %2336 = vmatprep.subr.mxu0 %v120
    %2337 = vmatpush1.msra.mxu0 %v119
    %2338 = vmatprep.subr.mxu0 %v124
    %2339 = vmatpush1.msra.mxu0 %v123
    %2340 = vmatprep.subr.mxu0 %v128
    %2341 = vmatpush1.msra.mxu0 %v127
    %2342 = vmatprep.subr.mxu0 %v132
    %2343 = vmatpush1.msra.mxu0 %v131
    %2344 = vmatprep.subr.mxu0 %v136
    %2345 = vmatpush1.msra.mxu0 %v135
    %2346 = vmatprep.subr.mxu0 %v140
    %2347 = vmatpush1.msra.mxu0 %v139
    %2348 = vmatprep.subr.mxu0 0.0
    %2349 = vmatpush1.msra.mxu0 0.0
    %2350 = vmatprep.subr.mxu0 0.0
    %2351 = vmatpush1.msra.mxu0 0.0
    %2352 = vmatprep.subr.mxu0 0.0
    %2353 = vmatpush1.msra.mxu0 0.0
    %2354 = vmatprep.subr.mxu0 0.0
    %2355 = vmatpush1.msra.mxu0 0.0
    %2356 = vmatprep.subr.mxu0 0.0
    %2357 = vmatpush1.msra.mxu0 0.0
    %2358 = vmatprep.subr.mxu0 0.0
    %2359 = vmatpush1.msra.mxu0 0.0
    %2360 = vmatprep.subr.mxu0 0.0
    %2361 = vmatpush1.msra.mxu0 0.0
    %2362 = vmatprep.subr.mxu0 0.0
    %2363 = vmatpush1.msra.mxu0 0.0
    %2364 = vmatprep.subr.mxu0 0.0
    %2365 = vmatpush1.msra.mxu0 0.0
    %2366 = vmatprep.subr.mxu0 0.0
    %2367 = vmatpush1.msra.mxu0 0.0
    %2368 = vmatprep.subr.mxu0 0.0
    %2369 = vmatpush1.msra.mxu0 0.0
    %2370 = vmatprep.subr.mxu0 0.0
    %2371 = vmatpush1.msra.mxu0 0.0
    %2372 = vmatprep.subr.mxu0 0.0
    %2373 = vmatpush1.msra.mxu0 0.0
    %2374 = vmatprep.subr.mxu0 0.0
    %2375 = vmatpush1.msra.mxu0 0.0
    %2376 = vmatprep.subr.mxu0 0.0
    %2377 = vmatpush1.msra.mxu0 0.0
    %2378 = vmatprep.subr.mxu0 0.0
    %2379 = vmatpush1.msra.mxu0 0.0
    %2380 = vmatprep.mubr.f32.mxu0 0.0
    %2381 = vmatmul.mubr.f32.gmra.mrb[0].mxu0 %v2303
    %v2382 = vpop.f32.mrb[0].mxu0
    %v2383 = vadd.f32 %v2312, %v2382
    %v2384 = vpop.f32.mrb[0].mxu0
    %v2385 = vadd.f32 %v2313, %v2384
    %2386 = vdwg.mxu0
    %2387 = vmatprep.subr.mxu0 %v82
    %2388 = vmatpush1.msra.mxu0 %v81
    %2389 = vmatprep.subr.mxu0 %v86
    %2390 = vmatpush1.msra.mxu0 %v85
    %2391 = vmatprep.subr.mxu0 %v90
    %2392 = vmatpush1.msra.mxu0 %v89
    %2393 = vmatprep.subr.mxu0 %v94
    %2394 = vmatpush1.msra.mxu0 %v93
    %2395 = vmatprep.subr.mxu0 %v98
    %2396 = vmatpush1.msra.mxu0 %v97
    %2397 = vmatprep.subr.mxu0 %v102
    %2398 = vmatpush1.msra.mxu0 %v101
    %2399 = vmatprep.subr.mxu0 %v106
    %2400 = vmatpush1.msra.mxu0 %v105
    %2401 = vmatprep.subr.mxu0 %v110
    %2402 = vmatpush1.msra.mxu0 %v109
    %2403 = vmatprep.subr.mxu0 %v114
    %2404 = vmatpush1.msra.mxu0 %v113
    %2405 = vmatprep.subr.mxu0 %v118
    %2406 = vmatpush1.msra.mxu0 %v117
    %2407 = vmatprep.subr.mxu0 %v122
    %2408 = vmatpush1.msra.mxu0 %v121
    %2409 = vmatprep.subr.mxu0 %v126
    %2410 = vmatpush1.msra.mxu0 %v125
    %2411 = vmatprep.subr.mxu0 %v130
    %2412 = vmatpush1.msra.mxu0 %v129
    %2413 = vmatprep.subr.mxu0 %v134
    %2414 = vmatpush1.msra.mxu0 %v133
    %2415 = vmatprep.subr.mxu0 %v138
    %2416 = vmatpush1.msra.mxu0 %v137
    %2417 = vmatprep.subr.mxu0 %v142
    %2418 = vmatpush1.msra.mxu0 %v141
    %2419 = vmatprep.subr.mxu0 0.0
    %2420 = vmatpush1.msra.mxu0 0.0
    %2421 = vmatprep.subr.mxu0 0.0
    %2422 = vmatpush1.msra.mxu0 0.0
    %2423 = vmatprep.subr.mxu0 0.0
    %2424 = vmatpush1.msra.mxu0 0.0
    %2425 = vmatprep.subr.mxu0 0.0
    %2426 = vmatpush1.msra.mxu0 0.0
    %2427 = vmatprep.subr.mxu0 0.0
    %2428 = vmatpush1.msra.mxu0 0.0
    %2429 = vmatprep.subr.mxu0 0.0
    %2430 = vmatpush1.msra.mxu0 0.0
    %2431 = vmatprep.subr.mxu0 0.0
    %2432 = vmatpush1.msra.mxu0 0.0
    %2433 = vmatprep.subr.mxu0 0.0
    %2434 = vmatpush1.msra.mxu0 0.0
    %2435 = vmatprep.subr.mxu0 0.0
    %2436 = vmatpush1.msra.mxu0 0.0
    %2437 = vmatprep.subr.mxu0 0.0
    %2438 = vmatpush1.msra.mxu0 0.0
    %2439 = vmatprep.subr.mxu0 0.0
    %2440 = vmatpush1.msra.mxu0 0.0
    %2441 = vmatprep.subr.mxu0 0.0
    %2442 = vmatpush1.msra.mxu0 0.0
    %2443 = vmatprep.subr.mxu0 0.0
    %2444 = vmatpush1.msra.mxu0 0.0
    %2445 = vmatprep.subr.mxu0 0.0
    %2446 = vmatpush1.msra.mxu0 0.0
    %2447 = vmatprep.subr.mxu0 0.0
    %2448 = vmatpush1.msra.mxu0 0.0
    %2449 = vmatprep.subr.mxu0 0.0
    %2450 = vmatpush1.msra.mxu0 0.0
    %2451 = vmatprep.mubr.f32.mxu0 0.0
    %2452 = vmatmul.mubr.f32.gmra.mrb[0].mxu0 %v2303
    %v2453 = vpop.f32.mrb[0].mxu0
    %v2454 = vadd.f32 %v2314, %v2453
    %v2455 = vpop.f32.mrb[0].mxu0
    %v2456 = vadd.f32 %v2315, %v2455
    %2457 = vdwg.mxu0
    %v2458 = vmul.f32 %v2383, 0.5
    %v2459 = vmul.f32 %v2385, 0.5
    %v2460 = vmul.f32 %v2454, 0.5
    %v2461 = vtanh.pop %v2458
    %v2462 = vtanh.pop %v2459
    %v2463 = vtanh.pop %v2460
    %v2464 = vmul.f32 %v2461, 0.5
    %v2465 = vmul.f32 %v2462, 0.5
    %v2466 = vmul.f32 %v2463, 0.5
    %v2467 = vadd.f32 %v2464, 0.5
    %v2468 = vadd.f32 %v2465, 0.5
    %v2469 = vadd.f32 %v2466, 0.5
    %v2470 = vtanh.pop %v2456
    %v2471 = vmul.f32 %v2468, %v2301
    %v2472 = vmul.f32 %v2467, %v2470
    %v2473 = vadd.f32 %v2471, %v2472
    %v2474 = vtanh.pop %v2473
    %v2475 = vmul.f32 %v2469, %v2474
    %2476 = vset.pattern.permute.xlu0 14
    %2477 = vperm.xlu0 %2476, %v78
    %v2478 = vpop.permute.xlu0 %2477
    %v2480 = vmul.f32 %v2478, %v148
    %v2481 = vmul.f32 %v2478, %v152
    %v2482 = vmul.f32 %v2478, %v156
    %v2483 = vmul.f32 %v2478, %v160
    %v2484 = vadd.f32 %v2480, %v170
    %v2485 = vadd.f32 %v2481, %v174
    %v2486 = vadd.f32 %v2482, %v178
    %v2487 = vadd.f32 %v2483, %v182
    %2488 = vmatprep.subr.mxu0 %v80
    %2489 = vmatpush1.msra.mxu0 %v79
    %2490 = vmatprep.subr.mxu0 %v84
    %2491 = vmatpush1.msra.mxu0 %v83
    %2492 = vmatprep.subr.mxu0 %v88
    %2493 = vmatpush1.msra.mxu0 %v87
    %2494 = vmatprep.subr.mxu0 %v92
    %2495 = vmatpush1.msra.mxu0 %v91
    %2496 = vmatprep.subr.mxu0 %v96
    %2497 = vmatpush1.msra.mxu0 %v95
    %2498 = vmatprep.subr.mxu0 %v100
    %2499 = vmatpush1.msra.mxu0 %v99
    %2500 = vmatprep.subr.mxu0 %v104
    %2501 = vmatpush1.msra.mxu0 %v103
    %2502 = vmatprep.subr.mxu0 %v108
    %2503 = vmatpush1.msra.mxu0 %v107
    %2504 = vmatprep.subr.mxu0 %v112
    %2505 = vmatpush1.msra.mxu0 %v111
    %2506 = vmatprep.subr.mxu0 %v116
    %2507 = vmatpush1.msra.mxu0 %v115
    %2508 = vmatprep.subr.mxu0 %v120
    %2509 = vmatpush1.msra.mxu0 %v119
    %2510 = vmatprep.subr.mxu0 %v124
    %2511 = vmatpush1.msra.mxu0 %v123
    %2512 = vmatprep.subr.mxu0 %v128
    %2513 = vmatpush1.msra.mxu0 %v127
    %2514 = vmatprep.subr.mxu0 %v132
    %2515 = vmatpush1.msra.mxu0 %v131
    %2516 = vmatprep.subr.mxu0 %v136
    %2517 = vmatpush1.msra.mxu0 %v135
    %2518 = vmatprep.subr.mxu0 %v140
    %2519 = vmatpush1.msra.mxu0 %v139
    %2520 = vmatprep.subr.mxu0 0.0
    %2521 = vmatpush1.msra.mxu0 0.0
    %2522 = vmatprep.subr.mxu0 0.0
    %2523 = vmatpush1.msra.mxu0 0.0
    %2524 = vmatprep.subr.mxu0 0.0
    %2525 = vmatpush1.msra.mxu0 0.0
    %2526 = vmatprep.subr.mxu0 0.0
    %2527 = vmatpush1.msra.mxu0 0.0
    %2528 = vmatprep.subr.mxu0 0.0
    %2529 = vmatpush1.msra.mxu0 0.0
    %2530 = vmatprep.subr.mxu0 0.0
    %2531 = vmatpush1.msra.mxu0 0.0
    %2532 = vmatprep.subr.mxu0 0.0
    %2533 = vmatpush1.msra.mxu0 0.0
    %2534 = vmatprep.subr.mxu0 0.0
    %2535 = vmatpush1.msra.mxu0 0.0
    %2536 = vmatprep.subr.mxu0 0.0
    %2537 = vmatpush1.msra.mxu0 0.0
    %2538 = vmatprep.subr.mxu0 0.0
    %2539 = vmatpush1.msra.mxu0 0.0
    %2540 = vmatprep.subr.mxu0 0.0
    %2541 = vmatpush1.msra.mxu0 0.0
    %2542 = vmatprep.subr.mxu0 0.0
    %2543 = vmatpush1.msra.mxu0 0.0
    %2544 = vmatprep.subr.mxu0 0.0
    %2545 = vmatpush1.msra.mxu0 0.0
    %2546 = vmatprep.subr.mxu0 0.0
    %2547 = vmatpush1.msra.mxu0 0.0
    %2548 = vmatprep.subr.mxu0 0.0
    %2549 = vmatpush1.msra.mxu0 0.0
    %2550 = vmatprep.subr.mxu0 0.0
    %2551 = vmatpush1.msra.mxu0 0.0
    %2552 = vmatprep.mubr.f32.mxu0 0.0
    %2553 = vmatmul.mubr.f32.gmra.mrb[0].mxu0 %v2475
    %v2554 = vpop.f32.mrb[0].mxu0
    %v2555 = vadd.f32 %v2484, %v2554
    %v2556 = vpop.f32.mrb[0].mxu0
    %v2557 = vadd.f32 %v2485, %v2556
    %2558 = vdwg.mxu0
    %2559 = vmatprep.subr.mxu0 %v82
    %2560 = vmatpush1.msra.mxu0 %v81
    %2561 = vmatprep.subr.mxu0 %v86
    %2562 = vmatpush1.msra.mxu0 %v85
    %2563 = vmatprep.subr.mxu0 %v90
    %2564 = vmatpush1.msra.mxu0 %v89
    %2565 = vmatprep.subr.mxu0 %v94
    %2566 = vmatpush1.msra.mxu0 %v93
    %2567 = vmatprep.subr.mxu0 %v98
    %2568 = vmatpush1.msra.mxu0 %v97
    %2569 = vmatprep.subr.mxu0 %v102
    %2570 = vmatpush1.msra.mxu0 %v101
    %2571 = vmatprep.subr.mxu0 %v106
    %2572 = vmatpush1.msra.mxu0 %v105
    %2573 = vmatprep.subr.mxu0 %v110
    %2574 = vmatpush1.msra.mxu0 %v109
    %2575 = vmatprep.subr.mxu0 %v114
    %2576 = vmatpush1.msra.mxu0 %v113
    %2577 = vmatprep.subr.mxu0 %v118
    %2578 = vmatpush1.msra.mxu0 %v117
    %2579 = vmatprep.subr.mxu0 %v122
    %2580 = vmatpush1.msra.mxu0 %v121
    %2581 = vmatprep.subr.mxu0 %v126
    %2582 = vmatpush1.msra.mxu0 %v125
    %2583 = vmatprep.subr.mxu0 %v130
    %2584 = vmatpush1.msra.mxu0 %v129
    %2585 = vmatprep.subr.mxu0 %v134
    %2586 = vmatpush1.msra.mxu0 %v133
    %2587 = vmatprep.subr.mxu0 %v138
    %2588 = vmatpush1.msra.mxu0 %v137
    %2589 = vmatprep.subr.mxu0 %v142
    %2590 = vmatpush1.msra.mxu0 %v141
    %2591 = vmatprep.subr.mxu0 0.0
    %2592 = vmatpush1.msra.mxu0 0.0
    %2593 = vmatprep.subr.mxu0 0.0
    %2594 = vmatpush1.msra.mxu0 0.0
    %2595 = vmatprep.subr.mxu0 0.0
    %2596 = vmatpush1.msra.mxu0 0.0
    %2597 = vmatprep.subr.mxu0 0.0
    %2598 = vmatpush1.msra.mxu0 0.0
    %2599 = vmatprep.subr.mxu0 0.0
    %2600 = vmatpush1.msra.mxu0 0.0
    %2601 = vmatprep.subr.mxu0 0.0
    %2602 = vmatpush1.msra.mxu0 0.0
    %2603 = vmatprep.subr.mxu0 0.0
    %2604 = vmatpush1.msra.mxu0 0.0
    %2605 = vmatprep.subr.mxu0 0.0
    %2606 = vmatpush1.msra.mxu0 0.0
    %2607 = vmatprep.subr.mxu0 0.0
    %2608 = vmatpush1.msra.mxu0 0.0
    %2609 = vmatprep.subr.mxu0 0.0
    %2610 = vmatpush1.msra.mxu0 0.0
    %2611 = vmatprep.subr.mxu0 0.0
    %2612 = vmatpush1.msra.mxu0 0.0
    %2613 = vmatprep.subr.mxu0 0.0
    %2614 = vmatpush1.msra.mxu0 0.0
    %2615 = vmatprep.subr.mxu0 0.0
    %2616 = vmatpush1.msra.mxu0 0.0
    %2617 = vmatprep.subr.mxu0 0.0
    %2618 = vmatpush1.msra.mxu0 0.0
    %2619 = vmatprep.subr.mxu0 0.0
    %2620 = vmatpush1.msra.mxu0 0.0
    %2621 = vmatprep.subr.mxu0 0.0
    %2622 = vmatpush1.msra.mxu0 0.0
    %2623 = vmatprep.mubr.f32.mxu0 0.0
    %2624 = vmatmul.mubr.f32.gmra.mrb[0].mxu0 %v2475
    %v2625 = vpop.f32.mrb[0].mxu0
    %v2626 = vadd.f32 %v2486, %v2625
    %v2627 = vpop.f32.mrb[0].mxu0
    %v2628 = vadd.f32 %v2487, %v2627
    %2629 = vdwg.mxu0
    %v2630 = vmul.f32 %v2555, 0.5
    %v2631 = vmul.f32 %v2557, 0.5
    %v2632 = vmul.f32 %v2626, 0.5
    %v2633 = vtanh.pop %v2630
    %v2634 = vtanh.pop %v2631
    %v2635 = vtanh.pop %v2632
    %v2636 = vmul.f32 %v2633, 0.5
    %v2637 = vmul.f32 %v2634, 0.5
    %v2638 = vmul.f32 %v2635, 0.5
    %v2639 = vadd.f32 %v2636, 0.5
    %v2640 = vadd.f32 %v2637, 0.5
    %v2641 = vadd.f32 %v2638, 0.5
    %v2642 = vtanh.pop %v2628
    %v2643 = vmul.f32 %v2640, %v2473
    %v2644 = vmul.f32 %v2639, %v2642
    %v2645 = vadd.f32 %v2643, %v2644
    %v2646 = vtanh.pop %v2645
    %v2647 = vmul.f32 %v2641, %v2646
    %2648 = vset.pattern.permute.xlu0 15
    %2649 = vperm.xlu0 %2648, %v78
    %v2650 = vpop.permute.xlu0 %2649
    %v2652 = vmul.f32 %v2650, %v148
    %v2653 = vmul.f32 %v2650, %v152
    %v2654 = vmul.f32 %v2650, %v156
    %v2655 = vmul.f32 %v2650, %v160
    %v2656 = vadd.f32 %v2652, %v170
    %v2657 = vadd.f32 %v2653, %v174
    %v2658 = vadd.f32 %v2654, %v178
    %v2659 = vadd.f32 %v2655, %v182
    %2660 = vmatprep.subr.mxu0 %v80
    %2661 = vmatpush1.msra.mxu0 %v79
    %2662 = vmatprep.subr.mxu0 %v84
    %2663 = vmatpush1.msra.mxu0 %v83
    %2664 = vmatprep.subr.mxu0 %v88
    %2665 = vmatpush1.msra.mxu0 %v87
    %2666 = vmatprep.subr.mxu0 %v92
    %2667 = vmatpush1.msra.mxu0 %v91
    %2668 = vmatprep.subr.mxu0 %v96
    %2669 = vmatpush1.msra.mxu0 %v95
    %2670 = vmatprep.subr.mxu0 %v100
    %2671 = vmatpush1.msra.mxu0 %v99
    %2672 = vmatprep.subr.mxu0 %v104
    %2673 = vmatpush1.msra.mxu0 %v103
    %2674 = vmatprep.subr.mxu0 %v108
    %2675 = vmatpush1.msra.mxu0 %v107
    %2676 = vmatprep.subr.mxu0 %v112
    %2677 = vmatpush1.msra.mxu0 %v111
    %2678 = vmatprep.subr.mxu0 %v116
    %2679 = vmatpush1.msra.mxu0 %v115
    %2680 = vmatprep.subr.mxu0 %v120
    %2681 = vmatpush1.msra.mxu0 %v119
    %2682 = vmatprep.subr.mxu0 %v124
    %2683 = vmatpush1.msra.mxu0 %v123
    %2684 = vmatprep.subr.mxu0 %v128
    %2685 = vmatpush1.msra.mxu0 %v127
    %2686 = vmatprep.subr.mxu0 %v132
    %2687 = vmatpush1.msra.mxu0 %v131
    %2688 = vmatprep.subr.mxu0 %v136
    %2689 = vmatpush1.msra.mxu0 %v135
    %2690 = vmatprep.subr.mxu0 %v140
    %2691 = vmatpush1.msra.mxu0 %v139
    %2692 = vmatprep.subr.mxu0 0.0
    %2693 = vmatpush1.msra.mxu0 0.0
    %2694 = vmatprep.subr.mxu0 0.0
    %2695 = vmatpush1.msra.mxu0 0.0
    %2696 = vmatprep.subr.mxu0 0.0
    %2697 = vmatpush1.msra.mxu0 0.0
    %2698 = vmatprep.subr.mxu0 0.0
    %2699 = vmatpush1.msra.mxu0 0.0
    %2700 = vmatprep.subr.mxu0 0.0
    %2701 = vmatpush1.msra.mxu0 0.0
    %2702 = vmatprep.subr.mxu0 0.0
    %2703 = vmatpush1.msra.mxu0 0.0
    %2704 = vmatprep.subr.mxu0 0.0
    %2705 = vmatpush1.msra.mxu0 0.0
    %2706 = vmatprep.subr.mxu0 0.0
    %2707 = vmatpush1.msra.mxu0 0.0
    %2708 = vmatprep.subr.mxu0 0.0
    %2709 = vmatpush1.msra.mxu0 0.0
    %2710 = vmatprep.subr.mxu0 0.0
    %2711 = vmatpush1.msra.mxu0 0.0
    %2712 = vmatprep.subr.mxu0 0.0
    %2713 = vmatpush1.msra.mxu0 0.0
    %2714 = vmatprep.subr.mxu0 0.0
    %2715 = vmatpush1.msra.mxu0 0.0
    %2716 = vmatprep.subr.mxu0 0.0
    %2717 = vmatpush1.msra.mxu0 0.0
    %2718 = vmatprep.subr.mxu0 0.0
    %2719 = vmatpush1.msra.mxu0 0.0
    %2720 = vmatprep.subr.mxu0 0.0
    %2721 = vmatpush1.msra.mxu0 0.0
    %2722 = vmatprep.subr.mxu0 0.0
    %2723 = vmatpush1.msra.mxu0 0.0
    %2724 = vmatprep.mubr.f32.mxu0 0.0
    %2725 = vmatmul.mubr.f32.gmra.mrb[0].mxu0 %v2647
    %v2726 = vpop.f32.mrb[0].mxu0
    %v2727 = vadd.f32 %v2656, %v2726
    %v2728 = vpop.f32.mrb[0].mxu0
    %v2729 = vadd.f32 %v2657, %v2728
    %2730 = vdwg.mxu0
    %2731 = vmatprep.subr.mxu0 %v82
    %2732 = vmatpush1.msra.mxu0 %v81
    %2733 = vmatprep.subr.mxu0 %v86
    %2734 = vmatpush1.msra.mxu0 %v85
    %2735 = vmatprep.subr.mxu0 %v90
    %2736 = vmatpush1.msra.mxu0 %v89
    %2737 = vmatprep.subr.mxu0 %v94
    %2738 = vmatpush1.msra.mxu0 %v93
    %2739 = vmatprep.subr.mxu0 %v98
    %2740 = vmatpush1.msra.mxu0 %v97
    %2741 = vmatprep.subr.mxu0 %v102
    %2742 = vmatpush1.msra.mxu0 %v101
    %2743 = vmatprep.subr.mxu0 %v106
    %2744 = vmatpush1.msra.mxu0 %v105
    %2745 = vmatprep.subr.mxu0 %v110
    %2746 = vmatpush1.msra.mxu0 %v109
    %2747 = vmatprep.subr.mxu0 %v114
    %2748 = vmatpush1.msra.mxu0 %v113
    %2749 = vmatprep.subr.mxu0 %v118
    %2750 = vmatpush1.msra.mxu0 %v117
    %2751 = vmatprep.subr.mxu0 %v122
    %2752 = vmatpush1.msra.mxu0 %v121
    %2753 = vmatprep.subr.mxu0 %v126
    %2754 = vmatpush1.msra.mxu0 %v125
    %2755 = vmatprep.subr.mxu0 %v130
    %2756 = vmatpush1.msra.mxu0 %v129
    %2757 = vmatprep.subr.mxu0 %v134
    %2758 = vmatpush1.msra.mxu0 %v133
    %2759 = vmatprep.subr.mxu0 %v138
    %2760 = vmatpush1.msra.mxu0 %v137
    %2761 = vmatprep.subr.mxu0 %v142
    %2762 = vmatpush1.msra.mxu0 %v141
    %2763 = vmatprep.subr.mxu0 0.0
    %2764 = vmatpush1.msra.mxu0 0.0
    %2765 = vmatprep.subr.mxu0 0.0
    %2766 = vmatpush1.msra.mxu0 0.0
    %2767 = vmatprep.subr.mxu0 0.0
    %2768 = vmatpush1.msra.mxu0 0.0
    %2769 = vmatprep.subr.mxu0 0.0
    %2770 = vmatpush1.msra.mxu0 0.0
    %2771 = vmatprep.subr.mxu0 0.0
    %2772 = vmatpush1.msra.mxu0 0.0
    %2773 = vmatprep.subr.mxu0 0.0
    %2774 = vmatpush1.msra.mxu0 0.0
    %2775 = vmatprep.subr.mxu0 0.0
    %2776 = vmatpush1.msra.mxu0 0.0
    %2777 = vmatprep.subr.mxu0 0.0
    %2778 = vmatpush1.msra.mxu0 0.0
    %2779 = vmatprep.subr.mxu0 0.0
    %2780 = vmatpush1.msra.mxu0 0.0
    %2781 = vmatprep.subr.mxu0 0.0
    %2782 = vmatpush1.msra.mxu0 0.0
    %2783 = vmatprep.subr.mxu0 0.0
    %2784 = vmatpush1.msra.mxu0 0.0
    %2785 = vmatprep.subr.mxu0 0.0
    %2786 = vmatpush1.msra.mxu0 0.0
    %2787 = vmatprep.subr.mxu0 0.0
    %2788 = vmatpush1.msra.mxu0 0.0
    %2789 = vmatprep.subr.mxu0 0.0
    %2790 = vmatpush1.msra.mxu0 0.0
    %2791 = vmatprep.subr.mxu0 0.0
    %2792 = vmatpush1.msra.mxu0 0.0
    %2793 = vmatprep.subr.mxu0 0.0
    %2794 = vmatpush1.msra.mxu0 0.0
    %2795 = vmatprep.mubr.f32.mxu0 0.0
    %2796 = vmatmul.mubr.f32.gmra.mrb[0].mxu0 %v2647
    %v2797 = vpop.f32.mrb[0].mxu0
    %v2798 = vadd.f32 %v2658, %v2797
    %v2799 = vpop.f32.mrb[0].mxu0
    %v2800 = vadd.f32 %v2659, %v2799
    %2801 = vdwg.mxu0
    %v2802 = vmul.f32 %v2727, 0.5
    %v2803 = vmul.f32 %v2729, 0.5
    %v2804 = vmul.f32 %v2798, 0.5
    %v2805 = vtanh.pop %v2802
    %v2806 = vtanh.pop %v2803
    %v2807 = vtanh.pop %v2804
    %v2808 = vmul.f32 %v2805, 0.5
    %v2809 = vmul.f32 %v2806, 0.5
    %v2810 = vmul.f32 %v2807, 0.5
    %v2811 = vadd.f32 %v2808, 0.5
    %v2812 = vadd.f32 %v2809, 0.5
    %v2813 = vadd.f32 %v2810, 0.5
    %v2814 = vtanh.pop %v2800
    %v2815 = vmul.f32 %v2812, %v2645
    %v2816 = vmul.f32 %v2811, %v2814
    %v2817 = vadd.f32 %v2815, %v2816
    %v2818 = vtanh.pop %v2817
    %v2819 = vmul.f32 %v2813, %v2818
    %2820 = vmatprep.subr.mxu0 %v80
    %2821 = vmatpush1.msra.mxu0 %v79
    %2822 = vmatprep.subr.mxu0 %v84
    %2823 = vmatpush1.msra.mxu0 %v83
    %2824 = vmatprep.subr.mxu0 %v88
    %2825 = vmatpush1.msra.mxu0 %v87
    %2826 = vmatprep.subr.mxu0 %v92
    %2827 = vmatpush1.msra.mxu0 %v91
    %2828 = vmatprep.subr.mxu0 %v96
    %2829 = vmatpush1.msra.mxu0 %v95
    %2830 = vmatprep.subr.mxu0 %v100
    %2831 = vmatpush1.msra.mxu0 %v99
    %2832 = vmatprep.subr.mxu0 %v104
    %2833 = vmatpush1.msra.mxu0 %v103
    %2834 = vmatprep.subr.mxu0 %v108
    %2835 = vmatpush1.msra.mxu0 %v107
    %2836 = vmatprep.subr.mxu0 %v112
    %2837 = vmatpush1.msra.mxu0 %v111
    %2838 = vmatprep.subr.mxu0 %v116
    %2839 = vmatpush1.msra.mxu0 %v115
    %2840 = vmatprep.subr.mxu0 %v120
    %2841 = vmatpush1.msra.mxu0 %v119
    %2842 = vmatprep.subr.mxu0 %v124
    %2843 = vmatpush1.msra.mxu0 %v123
    %2844 = vmatprep.subr.mxu0 %v128
    %2845 = vmatpush1.msra.mxu0 %v127
    %2846 = vmatprep.subr.mxu0 %v132
    %2847 = vmatpush1.msra.mxu0 %v131
    %2848 = vmatprep.subr.mxu0 %v136
    %2849 = vmatpush1.msra.mxu0 %v135
    %2850 = vmatprep.subr.mxu0 %v140
    %2851 = vmatpush1.msra.mxu0 %v139
    %2852 = vmatprep.subr.mxu0 0.0
    %2853 = vmatpush1.msra.mxu0 0.0
    %2854 = vmatprep.subr.mxu0 0.0
    %2855 = vmatpush1.msra.mxu0 0.0
    %2856 = vmatprep.subr.mxu0 0.0
    %2857 = vmatpush1.msra.mxu0 0.0
    %2858 = vmatprep.subr.mxu0 0.0
    %2859 = vmatpush1.msra.mxu0 0.0
    %2860 = vmatprep.subr.mxu0 0.0
    %2861 = vmatpush1.msra.mxu0 0.0
    %2862 = vmatprep.subr.mxu0 0.0
    %2863 = vmatpush1.msra.mxu0 0.0
    %2864 = vmatprep.subr.mxu0 0.0
    %2865 = vmatpush1.msra.mxu0 0.0
    %2866 = vmatprep.subr.mxu0 0.0
    %2867 = vmatpush1.msra.mxu0 0.0
    %2868 = vmatprep.subr.mxu0 0.0
    %2869 = vmatpush1.msra.mxu0 0.0
    %2870 = vmatprep.subr.mxu0 0.0
    %2871 = vmatpush1.msra.mxu0 0.0
    %2872 = vmatprep.subr.mxu0 0.0
    %2873 = vmatpush1.msra.mxu0 0.0
    %2874 = vmatprep.subr.mxu0 0.0
    %2875 = vmatpush1.msra.mxu0 0.0
    %2876 = vmatprep.subr.mxu0 0.0
    %2877 = vmatpush1.msra.mxu0 0.0
    %2878 = vmatprep.subr.mxu0 0.0
    %2879 = vmatpush1.msra.mxu0 0.0
    %2880 = vmatprep.subr.mxu0 0.0
    %2881 = vmatpush1.msra.mxu0 0.0
    %2882 = vmatprep.subr.mxu0 0.0
    %2883 = vmatpush1.msra.mxu0 0.0
    %2884 = vmatprep.mubr.f32.mxu0 0.0
    %2885 = vmatmul.mubr.f32.gmra.mrb[0].mxu0 %v2819
    %v2886 = vpop.f32.mrb[0].mxu0
    %v2887 = vadd.f32 %v170, %v2886
    %v2888 = vpop.f32.mrb[0].mxu0
    %v2889 = vadd.f32 %v174, %v2888
    %2890 = vdwg.mxu0
    %2891 = vmatprep.subr.mxu0 %v82
    %2892 = vmatpush1.msra.mxu0 %v81
    %2893 = vmatprep.subr.mxu0 %v86
    %2894 = vmatpush1.msra.mxu0 %v85
    %2895 = vmatprep.subr.mxu0 %v90
    %2896 = vmatpush1.msra.mxu0 %v89
    %2897 = vmatprep.subr.mxu0 %v94
    %2898 = vmatpush1.msra.mxu0 %v93
    %2899 = vmatprep.subr.mxu0 %v98
    %2900 = vmatpush1.msra.mxu0 %v97
    %2901 = vmatprep.subr.mxu0 %v102
    %2902 = vmatpush1.msra.mxu0 %v101
    %2903 = vmatprep.subr.mxu0 %v106
    %2904 = vmatpush1.msra.mxu0 %v105
    %2905 = vmatprep.subr.mxu0 %v110
    %2906 = vmatpush1.msra.mxu0 %v109
    %2907 = vmatprep.subr.mxu0 %v114
    %2908 = vmatpush1.msra.mxu0 %v113
    %2909 = vmatprep.subr.mxu0 %v118
    %2910 = vmatpush1.msra.mxu0 %v117
    %2911 = vmatprep.subr.mxu0 %v122
    %2912 = vmatpush1.msra.mxu0 %v121
    %2913 = vmatprep.subr.mxu0 %v126
    %2914 = vmatpush1.msra.mxu0 %v125
    %2915 = vmatprep.subr.mxu0 %v130
    %2916 = vmatpush1.msra.mxu0 %v129
    %2917 = vmatprep.subr.mxu0 %v134
    %2918 = vmatpush1.msra.mxu0 %v133
    %2919 = vmatprep.subr.mxu0 %v138
    %2920 = vmatpush1.msra.mxu0 %v137
    %2921 = vmatprep.subr.mxu0 %v142
    %2922 = vmatpush1.msra.mxu0 %v141
    %2923 = vmatprep.subr.mxu0 0.0
    %2924 = vmatpush1.msra.mxu0 0.0
    %2925 = vmatprep.subr.mxu0 0.0
    %2926 = vmatpush1.msra.mxu0 0.0
    %2927 = vmatprep.subr.mxu0 0.0
    %2928 = vmatpush1.msra.mxu0 0.0
    %2929 = vmatprep.subr.mxu0 0.0
    %2930 = vmatpush1.msra.mxu0 0.0
    %2931 = vmatprep.subr.mxu0 0.0
    %2932 = vmatpush1.msra.mxu0 0.0
    %2933 = vmatprep.subr.mxu0 0.0
    %2934 = vmatpush1.msra.mxu0 0.0
    %2935 = vmatprep.subr.mxu0 0.0
    %2936 = vmatpush1.msra.mxu0 0.0
    %2937 = vmatprep.subr.mxu0 0.0
    %2938 = vmatpush1.msra.mxu0 0.0
    %2939 = vmatprep.subr.mxu0 0.0
    %2940 = vmatpush1.msra.mxu0 0.0
    %2941 = vmatprep.subr.mxu0 0.0
    %2942 = vmatpush1.msra.mxu0 0.0
    %2943 = vmatprep.subr.mxu0 0.0
    %2944 = vmatpush1.msra.mxu0 0.0
    %2945 = vmatprep.subr.mxu0 0.0
    %2946 = vmatpush1.msra.mxu0 0.0
    %2947 = vmatprep.subr.mxu0 0.0
    %2948 = vmatpush1.msra.mxu0 0.0
    %2949 = vmatprep.subr.mxu0 0.0
    %2950 = vmatpush1.msra.mxu0 0.0
    %2951 = vmatprep.subr.mxu0 0.0
    %2952 = vmatpush1.msra.mxu0 0.0
    %2953 = vmatprep.subr.mxu0 0.0
    %2954 = vmatpush1.msra.mxu0 0.0
    %2955 = vmatprep.mubr.f32.mxu0 0.0
    %2956 = vmatmul.mubr.f32.gmra.mrb[0].mxu0 %v2819
    %v2957 = vpop.f32.mrb[0].mxu0
    %v2958 = vadd.f32 %v178, %v2957
    %v2959 = vpop.f32.mrb[0].mxu0
    %v2960 = vadd.f32 %v182, %v2959
    %2961 = vdwg.mxu0
    %v2962 = vmul.f32 %v2887, 0.5
    %v2963 = vmul.f32 %v2889, 0.5
    %v2964 = vmul.f32 %v2958, 0.5
    %v2965 = vtanh.pop %v2962
    %v2966 = vtanh.pop %v2963
    %v2967 = vtanh.pop %v2964
    %v2968 = vmul.f32 %v2965, 0.5
    %v2969 = vmul.f32 %v2966, 0.5
    %v2970 = vmul.f32 %v2967, 0.5
    %v2971 = vadd.f32 %v2968, 0.5
    %v2972 = vadd.f32 %v2969, 0.5
    %v2973 = vadd.f32 %v2970, 0.5
    %v2974 = vtanh.pop %v2960
    %v2975 = vmul.f32 %v2972, %v2817
    %v2976 = vmul.f32 %v2971, %v2974
    %v2977 = vadd.f32 %v2975, %v2976
    %v2978 = vtanh.pop %v2977
    %v2979 = vmul.f32 %v2973, %v2978
    %v2980 = vld [vmem:[#allocation8] sm:$0xff]
    %v2981 = vld [vmem:[#allocation8 + $0x8] sm:$0xff]
    %v2982 = vld [vmem:[#allocation8 + $0x10] sm:$0xff]
    %v2983 = vld [vmem:[#allocation8 + $0x18] sm:$0xff]
    %v2984 = vld [vmem:[#allocation8 + $0x20] sm:$0xff]
    %v2985 = vld [vmem:[#allocation8 + $0x28] sm:$0xff]
    %v2986 = vld [vmem:[#allocation8 + $0x30] sm:$0xff]
    %v2987 = vld [vmem:[#allocation8 + $0x38] sm:$0xff]
    %v2988 = vld [vmem:[#allocation8 + $0x40] sm:$0xff]
    %v2989 = vld [vmem:[#allocation8 + $0x48] sm:$0xff]
    %v2990 = vld [vmem:[#allocation8 + $0x50] sm:$0xff]
    %v2991 = vld [vmem:[#allocation8 + $0x58] sm:$0xff]
    %v2992 = vld [vmem:[#allocation8 + $0x60] sm:$0xff]
    %v2993 = vld [vmem:[#allocation8 + $0x68] sm:$0xff]
    %v2994 = vld [vmem:[#allocation8 + $0x70] sm:$0xff]
    %v2995 = vld [vmem:[#allocation8 + $0x78] sm:$0xff]
    %v2996 = vld [vmem:[%s6] sm:$0x1]
    %v2998 = vlaneseq
    %v2999 = vshrl.u32 %v2998, 7
    %v3000 = vsub.s32 0, %v2999
    %v3001 = vrot.slane %v2996, %v3000
    %3003 = vmatprep.subr.mxu0 0.0
    %3004 = vmatpush1.msra.mxu0 %v2980
    %3005 = vmatprep.subr.mxu0 0.0
    %3006 = vmatpush1.msra.mxu0 %v2981
    %3007 = vmatprep.subr.mxu0 0.0
    %3008 = vmatpush1.msra.mxu0 %v2982
    %3009 = vmatprep.subr.mxu0 0.0
    %3010 = vmatpush1.msra.mxu0 %v2983
    %3011 = vmatprep.subr.mxu0 0.0
    %3012 = vmatpush1.msra.mxu0 %v2984
    %3013 = vmatprep.subr.mxu0 0.0
    %3014 = vmatpush1.msra.mxu0 %v2985
    %3015 = vmatprep.subr.mxu0 0.0
    %3016 = vmatpush1.msra.mxu0 %v2986
    %3017 = vmatprep.subr.mxu0 0.0
    %3018 = vmatpush1.msra.mxu0 %v2987
    %3019 = vmatprep.subr.mxu0 0.0
    %3020 = vmatpush1.msra.mxu0 %v2988
    %3021 = vmatprep.subr.mxu0 0.0
    %3022 = vmatpush1.msra.mxu0 %v2989
    %3023 = vmatprep.subr.mxu0 0.0
    %3024 = vmatpush1.msra.mxu0 %v2990
    %3025 = vmatprep.subr.mxu0 0.0
    %3026 = vmatpush1.msra.mxu0 %v2991
    %3027 = vmatprep.subr.mxu0 0.0
    %3028 = vmatpush1.msra.mxu0 %v2992
    %3029 = vmatprep.subr.mxu0 0.0
    %3030 = vmatpush1.msra.mxu0 %v2993
    %3031 = vmatprep.subr.mxu0 0.0
    %3032 = vmatpush1.msra.mxu0 %v2994
    %3033 = vmatprep.subr.mxu0 0.0
    %3034 = vmatpush1.msra.mxu0 %v2995
    %3035 = vmatprep.subr.mxu0 0.0
    %3036 = vmatpush1.msra.mxu0 0.0
    %3037 = vmatprep.subr.mxu0 0.0
    %3038 = vmatpush1.msra.mxu0 0.0
    %3039 = vmatprep.subr.mxu0 0.0
    %3040 = vmatpush1.msra.mxu0 0.0
    %3041 = vmatprep.subr.mxu0 0.0
    %3042 = vmatpush1.msra.mxu0 0.0
    %3043 = vmatprep.subr.mxu0 0.0
    %3044 = vmatpush1.msra.mxu0 0.0
    %3045 = vmatprep.subr.mxu0 0.0
    %3046 = vmatpush1.msra.mxu0 0.0
    %3047 = vmatprep.subr.mxu0 0.0
    %3048 = vmatpush1.msra.mxu0 0.0
    %3049 = vmatprep.subr.mxu0 0.0
    %3050 = vmatpush1.msra.mxu0 0.0
    %3051 = vmatprep.subr.mxu0 0.0
    %3052 = vmatpush1.msra.mxu0 0.0
    %3053 = vmatprep.subr.mxu0 0.0
    %3054 = vmatpush1.msra.mxu0 0.0
    %3055 = vmatprep.subr.mxu0 0.0
    %3056 = vmatpush1.msra.mxu0 0.0
    %3057 = vmatprep.subr.mxu0 0.0
    %3058 = vmatpush1.msra.mxu0 0.0
    %3059 = vmatprep.subr.mxu0 0.0
    %3060 = vmatpush1.msra.mxu0 0.0
    %3061 = vmatprep.subr.mxu0 0.0
    %3062 = vmatpush1.msra.mxu0 0.0
    %3063 = vmatprep.subr.mxu0 0.0
    %3064 = vmatpush1.msra.mxu0 0.0
    %3065 = vmatprep.subr.mxu0 0.0
    %3066 = vmatpush1.msra.mxu0 0.0
    %3067 = vmatprep.mubr.f32.mxu0 0.0
    %3068 = vmatmul.mubr.f32.gmra.mrb[0].mxu0 %v2979
    %v3069 = vpop.f32.mrb[0].mxu0
    %v3070 = vadd.f32 %v3001, %v3069
    %v3071 = vpop.f32.mrb[0].mxu0
    %3072 = vdwg.mxu0
    %3073 = vst [vmem:[#allocation10] sm:$0xff] %v3070
    // Predicated region
    $region46: #{tpu_custom_call.1} parent=1 // pred_check
      _
    $region47: #{tpu_custom_call.1} parent=1 // pred_check_branch
      %3075 = sbr.rel (0) target = $region49
    $region48: #{tpu_custom_call.1} parent=1 // pred_region
      %s3077 = ssub.s32 128, 128
      %3078 = vsyncadd [#allocation4], %s3077
      %s3080 = sshll.u32 [#allocation10], 4
      %s3081 = int_to_ptr.vmem [resolvable:$true] %s3080
      %3083 = dma.vmem_to_hbm [thread:$0]  %s3081, 128, %s7, [#allocation4]
    $region49: #{tpu_custom_call.1} parent=1 // pred_fallthru
      _
    // Predicated region
    $region50: #{tpu_custom_call.1} parent=1 // pred_check
      _
    $region51: #{tpu_custom_call.1} parent=1 // pred_check_branch
      %3085 = sbr.rel (0) target = $region53
    $region52: #{tpu_custom_call.1} parent=1 // pred_region
      %3086 = dma.done [#allocation4], 128
    $region53: #{tpu_custom_call.1} parent=1 // pred_fallthru
      _
    %3087 = vsyncpa [#allocation3], 1
    %3088 = vsyncpa [#allocation6], 1
    %3089 = vsyncpa [#allocation9], 1
    %3090 = vsyncpa [#allocation4], 1

</llo_original>
